<compile_context>
chip_gen: v7x
topology: tpu7x:2x2x1
jax: 0.10.0
libtpu: 0.0.40
codegen_flags: <defaults>
</compile_context>

<pallas_src>
import math

import numpy as np
import jax
import jax.numpy as jnp
from jax.experimental import pallas as pl

OUT_W = 128  # lane-dense packed output width per player


# ----------------------------- the fused kernel -----------------------------

def _fused_a3c_kernel(x_ref, s1_ref, s2_ref,
                      w1_ref, b1_ref, w2_ref, b2_ref,
                      wih_ref, whh_ref, bg_ref,
                      wa_ref, ba_ref, wc_ref, bc_ref,
                      hx_ref, cx_ref,
                      out_ref):
    """Both players, fully fused: conv1+conv2+LSTMCell+critic+actor+softmax."""
    num_players = x_ref.shape[0]
    p1 = s1_ref.shape[1] // 9            # conv1 output positions (OH1*OW1)
    p2 = s2_ref.shape[1] // 9            # conv2 output positions (OH2*OW2)
    c2 = w2_ref.shape[1]                 # conv2 output channels
    r = hx_ref.shape[2]                  # rnn_out
    a = wa_ref.shape[2]                  # num actions
    pad = out_ref.shape[2] - (2 * r + 2 * a + 2)

    # shared (player-independent) 0/1 selection matrices, loaded once (bf16)
    s1 = s1_ref[...]                     # (H*W, 9*p1)
    s2 = s2_ref[...]                     # (p1,  9*p2)

    for p in range(num_players):         # unrolled; players independent -> ILP
        # ---------- conv1 (3x3, stride 2, pad 1) + ReLU, channels in sublanes ----------
        # t1[c, k*p1+j] = input channel c at the pixel feeding output j under tap k.
        t1 = jnp.dot(x_ref[p], s1, preferred_element_type=jnp.float32)      # (Cpad, 9*p1)
        # restack taps along K (sublane concat of aligned 8-row blocks)
        t1s = jnp.concatenate([t1[:, k * p1:(k + 1) * p1] for k in range(9)],
                              axis=0).astype(jnp.bfloat16)                  # (9*Cpad, p1)
        out1 = jnp.maximum(
            jnp.dot(w1_ref[p], t1s, preferred_element_type=jnp.float32)
            + b1_ref[p], 0.0)                                               # (C1, p1)

        # ---------- conv2 (3x3, stride 2, pad 1) + ReLU ----------
        t2 = jnp.dot(out1.astype(jnp.bfloat16), s2,
                     preferred_element_type=jnp.float32)                    # (C1, 9*p2)
        t2s = jnp.concatenate([t2[:, k * p2:(k + 1) * p2] for k in range(9)],
                              axis=0).astype(jnp.bfloat16)                  # (9*C1, p2)
        out2 = jnp.maximum(
            jnp.dot(w2_ref[p], t2s, preferred_element_type=jnp.float32)
            + b2_ref[p], 0.0)                                               # (C2, p2)

        # ---------- NCHW flatten -> lane-dense (1, C2*p2) feature row ----------
        # order c*p2 + j == torch .view(1, -1) of the NCHW conv output, so the
        # LSTM w_ih needs no permutation, only a transpose at pack time.
        feat = jnp.concatenate([out2[c:c + 1, :] for c in range(c2)],
                               axis=1).astype(jnp.bfloat16)                 # (1, C2*p2)

        # ---------- LSTMCell (PyTorch gate order i, f, g, o), ONE ih contraction ----------
        gates = (jnp.dot(feat, wih_ref[p], preferred_element_type=jnp.float32)
                 + jnp.dot(hx_ref[p].astype(jnp.bfloat16), whh_ref[p],
                           preferred_element_type=jnp.float32)
                 + bg_ref[p])                                               # (1, 4R)
        i_g = jax.nn.sigmoid(gates[:, 0:r])
        f_g = jax.nn.sigmoid(gates[:, r:2 * r])
        g_g = jnp.tanh(gates[:, 2 * r:3 * r])
        o_g = jax.nn.sigmoid(gates[:, 3 * r:4 * r])
        c_new = f_g * cx_ref[p] + i_g * g_g
        h_new = o_g * jnp.tanh(c_new)                                       # (1, R)

        # ---------- critic / actor / softmax statistics ----------
        hb = h_new.astype(jnp.bfloat16)
        value = (jnp.dot(hb, wc_ref[p], preferred_element_type=jnp.float32)
                 + bc_ref[p])                                               # (1, 1)
        logits = (jnp.dot(hb, wa_ref[p], preferred_element_type=jnp.float32)
                  + ba_ref[p])                                              # (1, A)
        z = logits - jnp.max(logits, axis=1, keepdims=True)
        e = jnp.exp(z)
        s = jnp.sum(e, axis=1, keepdims=True)
        log_prob = z - jnp.log(s)
        prob = e / s
        entropy = -jnp.sum(log_prob * prob, axis=1, keepdims=True)

        # ---------- single lane-dense packed row, one aligned store per player ----------
        out_ref[p] = jnp.concatenate(
            [h_new, c_new, value, prob, log_prob, entropy,
             jnp.zeros((1, pad), jnp.float32)], axis=1)


# ----------------------------- wrapper (glue) -----------------------------

def a3c_dueling_forward(packed, states, hx, cx, key, test=False, single=False):
    """A3C_Dueling.forward (head_name='cnn_lstm', discrete, tat=False).

    states: (num_players, 1, C, H, W) NCHW; hx, cx: (num_players, R).
    Returns (values, [action0, action1], entropies, log_probs, (hx, cx), 0).
    """
    num_players = states.shape[0]
    c_in, h_img, w_img = states.shape[2], states.shape[3], states.shape[4]
    r = hx.shape[1]
    a_dim = packed['actor_w_t'].shape[2]
    cpad = packed['conv1_w_cat'].shape[2] // 9     # padded input-channel count

    # input is consumed in native NCHW order: (C, H*W) per player (no transpose)
    x = states[:, 0].reshape(num_players, c_in, h_img * w_img)
    if cpad > c_in:
        x = jnp.pad(x, ((0, 0), (0, cpad - c_in), (0, 0)))
    x = x.astype(jnp.bfloat16)
    hx3 = hx.reshape(num_players, 1, r)
    cx3 = cx.reshape(num_players, 1, r)

    slab = pl.pallas_call(
        _fused_a3c_kernel,
        out_shape=jax.ShapeDtypeStruct((num_players, 1, OUT_W), jnp.float32),
    )(x, packed['s1t'], packed['s2t'],
      packed['conv1_w_cat'], packed['conv1_b'],
      packed['conv2_w_cat'], packed['conv2_b'],
      packed['lstm_w_ih_t'], packed['lstm_w_hh_t'], packed['lstm_b'],
      packed['actor_w_t'], packed['actor_b'],
      packed['critic_w_t'], packed['critic_b'],
      hx3, cx3)

    row = slab[:, 0, :]
    h_new = row[:, 0:r]
    c_new = row[:, r:2 * r]
    base = 2 * r
    value = row[:, base:base + 1]
    prob = row[:, base + 1:base + 1 + a_dim]
    log_prob = row[:, base + 1 + a_dim:base + 1 + 2 * a_dim]
    entropy = row[:, base + 1 + 2 * a_dim:base + 2 + 2 * a_dim]

    # categorical sampling (== torch prob.multinomial(1)) / greedy argmax done
    # in the wrapper: pltpu PRNG has no interpret-mode lowering and this is a
    # handful of ops on a (P, A) array.
    if test:
        action = jnp.argmax(prob, axis=1)
        log_probs = log_prob                     # torch keeps full log_softmax in test mode
    else:
        action = jax.random.categorical(key, log_prob, axis=-1)
        log_probs = jnp.take_along_axis(log_prob, action[:, None], axis=1)

    actions = [action[p] for p in range(num_players)]   # np.squeeze(action) per player
    if single or num_players == 1:
        return value[:1], [actions[0]], entropy[:1], log_probs[:1], (h_new[:1], c_new[:1]), 0
    return value, actions, entropy, log_probs, (h_new, c_new), 0


# ----------------------------- parameter init / packing -----------------------------

def _norm_col_init(key, shape, std=0.01):
    w = jax.random.normal(key, shape, dtype=jnp.float32)
    return w * std / jnp.sqrt(jnp.sum(w * w, axis=1, keepdims=True))


def init_player_params(key, in_ch, h_img, w_img, rnn_out, num_actions):
    """Torch-layout parameters for one A3C player (representative CNN_simple)."""
    ks = jax.random.split(key, 6)
    c1, c2 = 8, 16
    conv1_w = jax.random.normal(ks[0], (c1, in_ch, 3, 3), dtype=jnp.float32) * 0.1
    conv1_b = jnp.zeros((c1,), jnp.float32)
    conv2_w = jax.random.normal(ks[1], (c2, c1, 3, 3), dtype=jnp.float32) * 0.1
    conv2_b = jnp.zeros((c2,), jnp.float32)
    feat_dim = c2 * (h_img // 4) * (w_img // 4)
    lstm_w_ih = jax.random.normal(ks[2], (4 * rnn_out, feat_dim), dtype=jnp.float32) \
        * (1.0 / math.sqrt(feat_dim))
    lstm_w_hh = jax.random.normal(ks[3], (4 * rnn_out, rnn_out), dtype=jnp.float32) \
        * (1.0 / math.sqrt(rnn_out))
    lstm_b_ih = jnp.zeros((4 * rnn_out,), jnp.float32)   # module fills biases with 0
    lstm_b_hh = jnp.zeros((4 * rnn_out,), jnp.float32)
    actor_w = _norm_col_init(ks[4], (num_actions, rnn_out), 0.01)
    actor_b = jnp.zeros((num_actions,), jnp.float32)
    critic_w = _norm_col_init(ks[5], (1, rnn_out), 0.01)
    critic_b = jnp.zeros((1,), jnp.float32)
    return dict(conv1_w=conv1_w, conv1_b=conv1_b,
                conv2_w=conv2_w, conv2_b=conv2_b,
                lstm_w_ih=lstm_w_ih, lstm_w_hh=lstm_w_hh,
                lstm_b_ih=lstm_b_ih, lstm_b_hh=lstm_b_hh,
                actor_w=actor_w, actor_b=actor_b,
                critic_w=critic_w, critic_b=critic_b)


def _conv_selection_T(h, w, kh, kw, stride, pad):
    """0/1 matrix S^T (H*W, kh*kw*OH*OW) for the transposed (lane-dense) dataflow:
    (x^T(C,HW) @ S^T)[c, k*OH*OW + j] = padded input pixel of channel c feeding
    output position j under kernel tap k (zero columns for padding).  bf16."""
    oh = (h + 2 * pad - kh) // stride + 1
    ow = (w + 2 * pad - kw) // stride + 1
    sel = np.zeros((h * w, kh * kw * oh * ow), np.float32)
    for dh in range(kh):
        for dw in range(kw):
            k = dh * kw + dw
            for r_ in range(oh):
                for c_ in range(ow):
                    j = r_ * ow + c_
                    ih = r_ * stride + dh - pad
                    iw = c_ * stride + dw - pad
                    if 0 <= ih < h and 0 <= iw < w:
                        sel[ih * w + iw, k * oh * ow + j] = 1.0
    return jnp.asarray(sel, dtype=jnp.bfloat16), oh, ow


def pack_dueling_params(player_params, h_img, w_img):
    """One-time repack of torch-layout params into the fused-kernel layout:
    bf16 weights, tap-concatenated conv weights (K-stacked), transposed LSTM /
    actor / critic weights, fused gate bias."""
    s1t, oh1, ow1 = _conv_selection_T(h_img, w_img, 3, 3, 2, 1)
    s2t, _, _ = _conv_selection_T(oh1, ow1, 3, 3, 2, 1)

    cin = player_params[0]['conv1_w'].shape[1]
    cpad = -(-cin // 8) * 8                      # pad input channels to sublane multiple
    c1 = player_params[0]['conv2_w'].shape[1]    # conv2 input channels (already 8-aligned)

    def stack(fn, dtype):
        return jnp.stack([fn(p) for p in player_params], axis=0).astype(dtype)

    def conv_cat(w, cin_pad):   # (Cout, Cin, 3, 3) -> (Cout, 9*Cin_pad), tap-major columns
        cout, ci, kh, kw = w.shape
        if cin_pad > ci:
            w = jnp.pad(w, ((0, 0), (0, cin_pad - ci), (0, 0), (0, 0)))
        return w.transpose(0, 2, 3, 1).reshape(cout, kh * kw * cin_pad)

    return {
        's1t': s1t,                                                    # (H*W, 9*p1) bf16
        's2t': s2t,                                                    # (p1,  9*p2) bf16
        'conv1_w_cat': stack(lambda p: conv_cat(p['conv1_w'], cpad), jnp.bfloat16),
        'conv1_b': stack(lambda p: p['conv1_b'].reshape(-1, 1), jnp.float32),
        'conv2_w_cat': stack(lambda p: conv_cat(p['conv2_w'], c1), jnp.bfloat16),
        'conv2_b': stack(lambda p: p['conv2_b'].reshape(-1, 1), jnp.float32),
        'lstm_w_ih_t': stack(lambda p: p['lstm_w_ih'].T, jnp.bfloat16),   # (feat, 4R)
        'lstm_w_hh_t': stack(lambda p: p['lstm_w_hh'].T, jnp.bfloat16),   # (R, 4R)
        'lstm_b': stack(lambda p: (p['lstm_b_ih'] + p['lstm_b_hh']).reshape(1, -1),
                        jnp.float32),
        'actor_w_t': stack(lambda p: p['actor_w'].T, jnp.bfloat16),       # (R, A)
        'actor_b': stack(lambda p: p['actor_b'].reshape(1, -1), jnp.float32),
        'critic_w_t': stack(lambda p: p['critic_w'].T, jnp.bfloat16),     # (R, 1)
        'critic_b': stack(lambda p: p['critic_b'].reshape(1, -1), jnp.float32),
    }


# ----------------------------------- main -----------------------------------

if __name__ == "__main__":
    key = jax.random.PRNGKey(0)
    kp0, kp1, kx, ksamp = jax.random.split(key, 4)

    # 2 agents, each state (1, C=4, 16, 16); rnn_out=32, 4 discrete actions
    n, c, h, w = 1, 4, 16, 16
    rnn_out = 32
    num_actions = 4

    players = [init_player_params(kp0, c, h, w, rnn_out, num_actions),
               init_player_params(kp1, c, h, w, rnn_out, num_actions)]
    packed = pack_dueling_params(players, h, w)

    states = jax.random.normal(kx, (2, n, c, h, w), dtype=jnp.float32)
    hx = jnp.zeros((2, rnn_out), jnp.float32)
    cx = jnp.zeros((2, rnn_out), jnp.float32)

    forward = jax.jit(a3c_dueling_forward, static_argnames=("test", "single"))
    values, actions, entropies, log_probs, (hx_out, cx_out), r_pred = forward(
        packed, states, hx, cx, ksamp, test=False)

    jax.block_until_ready((values, entropies, log_probs, hx_out, cx_out,
                           actions[0], actions[1]))

    assert values.shape == (2, 1)
    assert entropies.shape == (2, 1)
    assert log_probs.shape == (2, 1)
    assert hx_out.shape == (2, rnn_out) and cx_out.shape == (2, rnn_out)
    assert 0 <= int(actions[0]) < num_actions
    assert 0 <= int(actions[1]) < num_actions
    assert bool(jnp.all(jnp.isfinite(values)))
    assert bool(jnp.all(jnp.isfinite(hx_out))) and bool(jnp.all(jnp.isfinite(cx_out)))
    print("KERNEL_OK")
</pallas_src>

<mosaic_0001>
module attributes {stable_mosaic.version = 11 : i64} {
  func.func @_fused_a3c_kernel(%arg0: memref<2x8x256xbf16, #tpu.memory_space<vmem>>, %arg1: memref<256x576xbf16, #tpu.memory_space<vmem>>, %arg2: memref<64x144xbf16, #tpu.memory_space<vmem>>, %arg3: memref<2x8x72xbf16, #tpu.memory_space<vmem>>, %arg4: memref<2x8x1xf32, #tpu.memory_space<vmem>>, %arg5: memref<2x16x72xbf16, #tpu.memory_space<vmem>>, %arg6: memref<2x16x1xf32, #tpu.memory_space<vmem>>, %arg7: memref<2x256x128xbf16, #tpu.memory_space<vmem>>, %arg8: memref<2x32x128xbf16, #tpu.memory_space<vmem>>, %arg9: memref<2x1x128xf32, #tpu.memory_space<vmem>>, %arg10: memref<2x32x4xbf16, #tpu.memory_space<vmem>>, %arg11: memref<2x1x4xf32, #tpu.memory_space<vmem>>, %arg12: memref<2x32x1xbf16, #tpu.memory_space<vmem>>, %arg13: memref<2x1x1xf32, #tpu.memory_space<vmem>>, %arg14: memref<2x1x32xf32, #tpu.memory_space<vmem>>, %arg15: memref<2x1x32xf32, #tpu.memory_space<vmem>>, %arg16: memref<2x1x128xf32, #tpu.memory_space<vmem>>) attributes {dimension_semantics = [], scalar_prefetch = 0 : i64, scratch_operands = 0 : i64, tpu.core_type = #tpu.core_type<tc>} {
    %c0 = arith.constant 0 : index
    %c0_0 = arith.constant 0 : index
    %0 = vector.load %arg1[%c0, %c0_0] : memref<256x576xbf16, #tpu.memory_space<vmem>>, vector<256x576xbf16>
    %c0_1 = arith.constant 0 : index
    %c0_2 = arith.constant 0 : index
    %1 = vector.load %arg2[%c0_1, %c0_2] : memref<64x144xbf16, #tpu.memory_space<vmem>>, vector<64x144xbf16>
    %c0_3 = arith.constant 0 : index
    %c0_4 = arith.constant 0 : index
    %c0_5 = arith.constant 0 : index
    %2 = vector.load %arg0[%c0_3, %c0_4, %c0_5] : memref<2x8x256xbf16, #tpu.memory_space<vmem>>, vector<1x8x256xbf16>
    %3 = vector.shape_cast %2 : vector<1x8x256xbf16> to vector<8x256xbf16>
    %cst = arith.constant dense<0.000000e+00> : vector<8x576xf32>
    %4 = tpu.matmul %3, %0, %cst {dimension_numbers = #tpu.dot_dimension_numbers<[1], [0], [0], [1], [0, 0, 1, 1], [], []>} : vector<8x256xbf16>, vector<256x576xbf16>, vector<8x576xf32> -> vector<8x576xf32>
    %5 = vector.extract_strided_slice %4 {offsets = [0, 0], sizes = [8, 64], strides = [1, 1]} : vector<8x576xf32> to vector<8x64xf32>
    %6 = vector.extract_strided_slice %4 {offsets = [0, 64], sizes = [8, 64], strides = [1, 1]} : vector<8x576xf32> to vector<8x64xf32>
    %7 = vector.extract_strided_slice %4 {offsets = [0, 128], sizes = [8, 64], strides = [1, 1]} : vector<8x576xf32> to vector<8x64xf32>
    %8 = vector.extract_strided_slice %4 {offsets = [0, 192], sizes = [8, 64], strides = [1, 1]} : vector<8x576xf32> to vector<8x64xf32>
    %9 = vector.extract_strided_slice %4 {offsets = [0, 256], sizes = [8, 64], strides = [1, 1]} : vector<8x576xf32> to vector<8x64xf32>
    %10 = vector.extract_strided_slice %4 {offsets = [0, 320], sizes = [8, 64], strides = [1, 1]} : vector<8x576xf32> to vector<8x64xf32>
    %11 = vector.extract_strided_slice %4 {offsets = [0, 384], sizes = [8, 64], strides = [1, 1]} : vector<8x576xf32> to vector<8x64xf32>
    %12 = vector.extract_strided_slice %4 {offsets = [0, 448], sizes = [8, 64], strides = [1, 1]} : vector<8x576xf32> to vector<8x64xf32>
    %13 = vector.extract_strided_slice %4 {offsets = [0, 512], sizes = [8, 64], strides = [1, 1]} : vector<8x576xf32> to vector<8x64xf32>
    %14 = tpu.concatenate %5, %6, %7, %8, %9, %10, %11, %12, %13 in 0 : vector<8x64xf32>, vector<8x64xf32>, vector<8x64xf32>, vector<8x64xf32>, vector<8x64xf32>, vector<8x64xf32>, vector<8x64xf32>, vector<8x64xf32>, vector<8x64xf32> -> vector<72x64xf32>
    %15 = arith.truncf %14 : vector<72x64xf32> to vector<72x64xbf16>
    %c0_6 = arith.constant 0 : index
    %c0_7 = arith.constant 0 : index
    %c0_8 = arith.constant 0 : index
    %16 = vector.load %arg3[%c0_6, %c0_7, %c0_8] : memref<2x8x72xbf16, #tpu.memory_space<vmem>>, vector<1x8x72xbf16>
    %17 = vector.shape_cast %16 : vector<1x8x72xbf16> to vector<8x72xbf16>
    %cst_9 = arith.constant dense<0.000000e+00> : vector<8x64xf32>
    %18 = tpu.matmul %17, %15, %cst_9 {dimension_numbers = #tpu.dot_dimension_numbers<[1], [0], [0], [1], [0, 0, 1, 1], [], []>} : vector<8x72xbf16>, vector<72x64xbf16>, vector<8x64xf32> -> vector<8x64xf32>
    %c0_10 = arith.constant 0 : index
    %c0_11 = arith.constant 0 : index
    %c0_12 = arith.constant 0 : index
    %19 = vector.load %arg4[%c0_10, %c0_11, %c0_12] : memref<2x8x1xf32, #tpu.memory_space<vmem>>, vector<1x8x1xf32>
    %20 = vector.shape_cast %19 : vector<1x8x1xf32> to vector<8x1xf32>
    %21 = vector.broadcast %20 : vector<8x1xf32> to vector<8x64xf32>
    %22 = arith.addf %18, %21 : vector<8x64xf32>
    %cst_13 = arith.constant 0.000000e+00 : f32
    %23 = vector.broadcast %cst_13 : f32 to vector<8x64xf32>
    %24 = arith.maximumf %22, %23 : vector<8x64xf32>
    %25 = arith.truncf %24 : vector<8x64xf32> to vector<8x64xbf16>
    %cst_14 = arith.constant dense<0.000000e+00> : vector<8x144xf32>
    %26 = tpu.matmul %25, %1, %cst_14 {dimension_numbers = #tpu.dot_dimension_numbers<[1], [0], [0], [1], [0, 0, 1, 1], [], []>} : vector<8x64xbf16>, vector<64x144xbf16>, vector<8x144xf32> -> vector<8x144xf32>
    %27 = vector.extract_strided_slice %26 {offsets = [0, 0], sizes = [8, 16], strides = [1, 1]} : vector<8x144xf32> to vector<8x16xf32>
    %28 = vector.extract_strided_slice %26 {offsets = [0, 16], sizes = [8, 16], strides = [1, 1]} : vector<8x144xf32> to vector<8x16xf32>
    %29 = vector.extract_strided_slice %26 {offsets = [0, 32], sizes = [8, 16], strides = [1, 1]} : vector<8x144xf32> to vector<8x16xf32>
    %30 = vector.extract_strided_slice %26 {offsets = [0, 48], sizes = [8, 16], strides = [1, 1]} : vector<8x144xf32> to vector<8x16xf32>
    %31 = vector.extract_strided_slice %26 {offsets = [0, 64], sizes = [8, 16], strides = [1, 1]} : vector<8x144xf32> to vector<8x16xf32>
    %32 = vector.extract_strided_slice %26 {offsets = [0, 80], sizes = [8, 16], strides = [1, 1]} : vector<8x144xf32> to vector<8x16xf32>
    %33 = vector.extract_strided_slice %26 {offsets = [0, 96], sizes = [8, 16], strides = [1, 1]} : vector<8x144xf32> to vector<8x16xf32>
    %34 = vector.extract_strided_slice %26 {offsets = [0, 112], sizes = [8, 16], strides = [1, 1]} : vector<8x144xf32> to vector<8x16xf32>
    %35 = vector.extract_strided_slice %26 {offsets = [0, 128], sizes = [8, 16], strides = [1, 1]} : vector<8x144xf32> to vector<8x16xf32>
    %36 = tpu.concatenate %27, %28, %29, %30, %31, %32, %33, %34, %35 in 0 : vector<8x16xf32>, vector<8x16xf32>, vector<8x16xf32>, vector<8x16xf32>, vector<8x16xf32>, vector<8x16xf32>, vector<8x16xf32>, vector<8x16xf32>, vector<8x16xf32> -> vector<72x16xf32>
    %37 = arith.truncf %36 : vector<72x16xf32> to vector<72x16xbf16>
    %c0_15 = arith.constant 0 : index
    %c0_16 = arith.constant 0 : index
    %c0_17 = arith.constant 0 : index
    %38 = vector.load %arg5[%c0_15, %c0_16, %c0_17] : memref<2x16x72xbf16, #tpu.memory_space<vmem>>, vector<1x16x72xbf16>
    %39 = vector.shape_cast %38 : vector<1x16x72xbf16> to vector<16x72xbf16>
    %cst_18 = arith.constant dense<0.000000e+00> : vector<16x16xf32>
    %40 = tpu.matmul %39, %37, %cst_18 {dimension_numbers = #tpu.dot_dimension_numbers<[1], [0], [0], [1], [0, 0, 1, 1], [], []>} : vector<16x72xbf16>, vector<72x16xbf16>, vector<16x16xf32> -> vector<16x16xf32>
    %c0_19 = arith.constant 0 : index
    %c0_20 = arith.constant 0 : index
    %c0_21 = arith.constant 0 : index
    %41 = vector.load %arg6[%c0_19, %c0_20, %c0_21] : memref<2x16x1xf32, #tpu.memory_space<vmem>>, vector<1x16x1xf32>
    %42 = vector.shape_cast %41 : vector<1x16x1xf32> to vector<16x1xf32>
    %43 = vector.broadcast %42 : vector<16x1xf32> to vector<16x16xf32>
    %44 = arith.addf %40, %43 : vector<16x16xf32>
    %cst_22 = arith.constant 0.000000e+00 : f32
    %45 = vector.broadcast %cst_22 : f32 to vector<16x16xf32>
    %46 = arith.maximumf %44, %45 : vector<16x16xf32>
    %47 = vector.extract_strided_slice %46 {offsets = [0, 0], sizes = [1, 16], strides = [1, 1]} : vector<16x16xf32> to vector<1x16xf32>
    %48 = vector.extract_strided_slice %46 {offsets = [1, 0], sizes = [1, 16], strides = [1, 1]} : vector<16x16xf32> to vector<1x16xf32>
    %49 = vector.extract_strided_slice %46 {offsets = [2, 0], sizes = [1, 16], strides = [1, 1]} : vector<16x16xf32> to vector<1x16xf32>
    %50 = vector.extract_strided_slice %46 {offsets = [3, 0], sizes = [1, 16], strides = [1, 1]} : vector<16x16xf32> to vector<1x16xf32>
    %51 = vector.extract_strided_slice %46 {offsets = [4, 0], sizes = [1, 16], strides = [1, 1]} : vector<16x16xf32> to vector<1x16xf32>
    %52 = vector.extract_strided_slice %46 {offsets = [5, 0], sizes = [1, 16], strides = [1, 1]} : vector<16x16xf32> to vector<1x16xf32>
    %53 = vector.extract_strided_slice %46 {offsets = [6, 0], sizes = [1, 16], strides = [1, 1]} : vector<16x16xf32> to vector<1x16xf32>
    %54 = vector.extract_strided_slice %46 {offsets = [7, 0], sizes = [1, 16], strides = [1, 1]} : vector<16x16xf32> to vector<1x16xf32>
    %55 = vector.extract_strided_slice %46 {offsets = [8, 0], sizes = [1, 16], strides = [1, 1]} : vector<16x16xf32> to vector<1x16xf32>
    %56 = vector.extract_strided_slice %46 {offsets = [9, 0], sizes = [1, 16], strides = [1, 1]} : vector<16x16xf32> to vector<1x16xf32>
    %57 = vector.extract_strided_slice %46 {offsets = [10, 0], sizes = [1, 16], strides = [1, 1]} : vector<16x16xf32> to vector<1x16xf32>
    %58 = vector.extract_strided_slice %46 {offsets = [11, 0], sizes = [1, 16], strides = [1, 1]} : vector<16x16xf32> to vector<1x16xf32>
    %59 = vector.extract_strided_slice %46 {offsets = [12, 0], sizes = [1, 16], strides = [1, 1]} : vector<16x16xf32> to vector<1x16xf32>
    %60 = vector.extract_strided_slice %46 {offsets = [13, 0], sizes = [1, 16], strides = [1, 1]} : vector<16x16xf32> to vector<1x16xf32>
    %61 = vector.extract_strided_slice %46 {offsets = [14, 0], sizes = [1, 16], strides = [1, 1]} : vector<16x16xf32> to vector<1x16xf32>
    %62 = vector.extract_strided_slice %46 {offsets = [15, 0], sizes = [1, 16], strides = [1, 1]} : vector<16x16xf32> to vector<1x16xf32>
    %63 = tpu.concatenate %47, %48, %49, %50, %51, %52, %53, %54, %55, %56, %57, %58, %59, %60, %61, %62 in 1 : vector<1x16xf32>, vector<1x16xf32>, vector<1x16xf32>, vector<1x16xf32>, vector<1x16xf32>, vector<1x16xf32>, vector<1x16xf32>, vector<1x16xf32>, vector<1x16xf32>, vector<1x16xf32>, vector<1x16xf32>, vector<1x16xf32>, vector<1x16xf32>, vector<1x16xf32>, vector<1x16xf32>, vector<1x16xf32> -> vector<1x256xf32>
    %64 = arith.truncf %63 : vector<1x256xf32> to vector<1x256xbf16>
    %c0_23 = arith.constant 0 : index
    %c0_24 = arith.constant 0 : index
    %c0_25 = arith.constant 0 : index
    %65 = vector.load %arg7[%c0_23, %c0_24, %c0_25] : memref<2x256x128xbf16, #tpu.memory_space<vmem>>, vector<1x256x128xbf16>
    %66 = vector.shape_cast %65 : vector<1x256x128xbf16> to vector<256x128xbf16>
    %cst_26 = arith.constant dense<0.000000e+00> : vector<1x128xf32>
    %67 = tpu.matmul %64, %66, %cst_26 {dimension_numbers = #tpu.dot_dimension_numbers<[1], [0], [0], [1], [0, 0, 1, 1], [], []>} : vector<1x256xbf16>, vector<256x128xbf16>, vector<1x128xf32> -> vector<1x128xf32>
    %c0_27 = arith.constant 0 : index
    %c0_28 = arith.constant 0 : index
    %c0_29 = arith.constant 0 : index
    %68 = vector.load %arg14[%c0_27, %c0_28, %c0_29] : memref<2x1x32xf32, #tpu.memory_space<vmem>>, vector<1x1x32xf32>
    %69 = vector.shape_cast %68 : vector<1x1x32xf32> to vector<1x32xf32>
    %70 = arith.truncf %69 : vector<1x32xf32> to vector<1x32xbf16>
    %c0_30 = arith.constant 0 : index
    %c0_31 = arith.constant 0 : index
    %c0_32 = arith.constant 0 : index
    %71 = vector.load %arg8[%c0_30, %c0_31, %c0_32] : memref<2x32x128xbf16, #tpu.memory_space<vmem>>, vector<1x32x128xbf16>
    %72 = vector.shape_cast %71 : vector<1x32x128xbf16> to vector<32x128xbf16>
    %cst_33 = arith.constant dense<0.000000e+00> : vector<1x128xf32>
    %73 = tpu.matmul %70, %72, %cst_33 {dimension_numbers = #tpu.dot_dimension_numbers<[1], [0], [0], [1], [0, 0, 1, 1], [], []>} : vector<1x32xbf16>, vector<32x128xbf16>, vector<1x128xf32> -> vector<1x128xf32>
    %74 = arith.addf %67, %73 : vector<1x128xf32>
    %c0_34 = arith.constant 0 : index
    %c0_35 = arith.constant 0 : index
    %c0_36 = arith.constant 0 : index
    %75 = vector.load %arg9[%c0_34, %c0_35, %c0_36] : memref<2x1x128xf32, #tpu.memory_space<vmem>>, vector<1x1x128xf32>
    %76 = vector.shape_cast %75 : vector<1x1x128xf32> to vector<1x128xf32>
    %77 = arith.addf %74, %76 : vector<1x128xf32>
    %78 = vector.extract_strided_slice %77 {offsets = [0, 0], sizes = [1, 32], strides = [1, 1]} : vector<1x128xf32> to vector<1x32xf32>
    %79 = arith.negf %78 : vector<1x32xf32>
    %80 = math.exp %79 : vector<1x32xf32>
    %cst_37 = arith.constant 1.000000e+00 : f32
    %81 = vector.broadcast %cst_37 : f32 to vector<1x32xf32>
    %82 = arith.addf %81, %80 : vector<1x32xf32>
    %83 = arith.divf %81, %82 : vector<1x32xf32>
    %84 = vector.extract_strided_slice %77 {offsets = [0, 32], sizes = [1, 32], strides = [1, 1]} : vector<1x128xf32> to vector<1x32xf32>
    %85 = arith.negf %84 : vector<1x32xf32>
    %86 = math.exp %85 : vector<1x32xf32>
    %cst_38 = arith.constant 1.000000e+00 : f32
    %87 = vector.broadcast %cst_38 : f32 to vector<1x32xf32>
    %88 = arith.addf %87, %86 : vector<1x32xf32>
    %89 = arith.divf %87, %88 : vector<1x32xf32>
    %90 = vector.extract_strided_slice %77 {offsets = [0, 64], sizes = [1, 32], strides = [1, 1]} : vector<1x128xf32> to vector<1x32xf32>
    %91 = math.tanh %90 : vector<1x32xf32>
    %92 = vector.extract_strided_slice %77 {offsets = [0, 96], sizes = [1, 32], strides = [1, 1]} : vector<1x128xf32> to vector<1x32xf32>
    %93 = arith.negf %92 : vector<1x32xf32>
    %94 = math.exp %93 : vector<1x32xf32>
    %cst_39 = arith.constant 1.000000e+00 : f32
    %95 = vector.broadcast %cst_39 : f32 to vector<1x32xf32>
    %96 = arith.addf %95, %94 : vector<1x32xf32>
    %97 = arith.divf %95, %96 : vector<1x32xf32>
    %c0_40 = arith.constant 0 : index
    %c0_41 = arith.constant 0 : index
    %c0_42 = arith.constant 0 : index
    %98 = vector.load %arg15[%c0_40, %c0_41, %c0_42] : memref<2x1x32xf32, #tpu.memory_space<vmem>>, vector<1x1x32xf32>
    %99 = vector.shape_cast %98 : vector<1x1x32xf32> to vector<1x32xf32>
    %100 = arith.mulf %89, %99 : vector<1x32xf32>
    %101 = arith.mulf %83, %91 : vector<1x32xf32>
    %102 = arith.addf %100, %101 : vector<1x32xf32>
    %103 = math.tanh %102 : vector<1x32xf32>
    %104 = arith.mulf %97, %103 : vector<1x32xf32>
    %105 = arith.truncf %104 : vector<1x32xf32> to vector<1x32xbf16>
    %c0_43 = arith.constant 0 : index
    %c0_44 = arith.constant 0 : index
    %c0_45 = arith.constant 0 : index
    %106 = vector.load %arg12[%c0_43, %c0_44, %c0_45] : memref<2x32x1xbf16, #tpu.memory_space<vmem>>, vector<1x32x1xbf16>
    %107 = vector.shape_cast %106 : vector<1x32x1xbf16> to vector<32x1xbf16>
    %cst_46 = arith.constant dense<0.000000e+00> : vector<1x1xf32>
    %108 = tpu.matmul %105, %107, %cst_46 {dimension_numbers = #tpu.dot_dimension_numbers<[1], [0], [0], [1], [0, 0, 1, 1], [], []>} : vector<1x32xbf16>, vector<32x1xbf16>, vector<1x1xf32> -> vector<1x1xf32>
    %c0_47 = arith.constant 0 : index
    %c0_48 = arith.constant 0 : index
    %c0_49 = arith.constant 0 : index
    %109 = vector.load %arg13[%c0_47, %c0_48, %c0_49] : memref<2x1x1xf32, #tpu.memory_space<vmem>>, vector<1x1x1xf32>
    %110 = vector.shape_cast %109 : vector<1x1x1xf32> to vector<1x1xf32>
    %111 = arith.addf %108, %110 : vector<1x1xf32>
    %c0_50 = arith.constant 0 : index
    %c0_51 = arith.constant 0 : index
    %c0_52 = arith.constant 0 : index
    %112 = vector.load %arg10[%c0_50, %c0_51, %c0_52] : memref<2x32x4xbf16, #tpu.memory_space<vmem>>, vector<1x32x4xbf16>
    %113 = vector.shape_cast %112 : vector<1x32x4xbf16> to vector<32x4xbf16>
    %cst_53 = arith.constant dense<0.000000e+00> : vector<1x4xf32>
    %114 = tpu.matmul %105, %113, %cst_53 {dimension_numbers = #tpu.dot_dimension_numbers<[1], [0], [0], [1], [0, 0, 1, 1], [], []>} : vector<1x32xbf16>, vector<32x4xbf16>, vector<1x4xf32> -> vector<1x4xf32>
    %c0_54 = arith.constant 0 : index
    %c0_55 = arith.constant 0 : index
    %c0_56 = arith.constant 0 : index
    %115 = vector.load %arg11[%c0_54, %c0_55, %c0_56] : memref<2x1x4xf32, #tpu.memory_space<vmem>>, vector<1x1x4xf32>
    %116 = vector.shape_cast %115 : vector<1x1x4xf32> to vector<1x4xf32>
    %117 = arith.addf %114, %116 : vector<1x4xf32>
    %cst_57 = arith.constant dense<0xFF800000> : vector<1xf32>
    %118 = vector.multi_reduction <maximumf>, %117, %cst_57 [1] : vector<1x4xf32> to vector<1xf32>
    %119 = vector.shape_cast %118 : vector<1xf32> to vector<1x1xf32>
    %120 = vector.broadcast %119 : vector<1x1xf32> to vector<1x4xf32>
    %121 = arith.subf %117, %120 : vector<1x4xf32>
    %122 = math.exp %121 : vector<1x4xf32>
    %cst_58 = arith.constant dense<0.000000e+00> : vector<1xf32>
    %123 = vector.multi_reduction <add>, %122, %cst_58 [1] : vector<1x4xf32> to vector<1xf32>
    %124 = vector.shape_cast %123 : vector<1xf32> to vector<1x1xf32>
    %125 = math.log %124 : vector<1x1xf32>
    %126 = vector.broadcast %125 : vector<1x1xf32> to vector<1x4xf32>
    %127 = arith.subf %121, %126 : vector<1x4xf32>
    %128 = vector.broadcast %124 : vector<1x1xf32> to vector<1x4xf32>
    %129 = arith.divf %122, %128 : vector<1x4xf32>
    %130 = arith.mulf %127, %129 : vector<1x4xf32>
    %cst_59 = arith.constant dense<0.000000e+00> : vector<1xf32>
    %131 = vector.multi_reduction <add>, %130, %cst_59 [1] : vector<1x4xf32> to vector<1xf32>
    %132 = vector.shape_cast %131 : vector<1xf32> to vector<1x1xf32>
    %cst_60 = arith.constant 0.000000e+00 : f32
    %133 = vector.broadcast %cst_60 : f32 to vector<1x1xf32>
    %134 = arith.subf %133, %132 : vector<1x1xf32>
    %cst_61 = arith.constant 0.000000e+00 : f32
    %135 = vector.broadcast %cst_61 : f32 to vector<1x54xf32>
    %136 = tpu.concatenate %104, %102, %111, %129, %127, %134, %135 in 1 : vector<1x32xf32>, vector<1x32xf32>, vector<1x1xf32>, vector<1x4xf32>, vector<1x4xf32>, vector<1x1xf32>, vector<1x54xf32> -> vector<1x128xf32>
    %c0_62 = arith.constant 0 : index
    %c0_63 = arith.constant 0 : index
    %c0_64 = arith.constant 0 : index
    %137 = vector.load %arg16[%c0_62, %c0_63, %c0_64] : memref<2x1x128xf32, #tpu.memory_space<vmem>>, vector<1x1x128xf32>
    %138 = vector.shape_cast %137 : vector<1x1x128xf32> to vector<1x128xf32>
    %139 = vector.shape_cast %136 : vector<1x128xf32> to vector<1x1x128xf32>
    tpu.vector_store %arg16[%c0_62, %c0_63, %c0_64], %139 {strides = array<i32>} : memref<2x1x128xf32, #tpu.memory_space<vmem>>, vector<1x1x128xf32>,
    %c1 = arith.constant 1 : index
    %c0_65 = arith.constant 0 : index
    %c0_66 = arith.constant 0 : index
    %140 = vector.load %arg0[%c1, %c0_65, %c0_66] : memref<2x8x256xbf16, #tpu.memory_space<vmem>>, vector<1x8x256xbf16>
    %141 = vector.shape_cast %140 : vector<1x8x256xbf16> to vector<8x256xbf16>
    %cst_67 = arith.constant dense<0.000000e+00> : vector<8x576xf32>
    %142 = tpu.matmul %141, %0, %cst_67 {dimension_numbers = #tpu.dot_dimension_numbers<[1], [0], [0], [1], [0, 0, 1, 1], [], []>} : vector<8x256xbf16>, vector<256x576xbf16>, vector<8x576xf32> -> vector<8x576xf32>
    %143 = vector.extract_strided_slice %142 {offsets = [0, 0], sizes = [8, 64], strides = [1, 1]} : vector<8x576xf32> to vector<8x64xf32>
    %144 = vector.extract_strided_slice %142 {offsets = [0, 64], sizes = [8, 64], strides = [1, 1]} : vector<8x576xf32> to vector<8x64xf32>
    %145 = vector.extract_strided_slice %142 {offsets = [0, 128], sizes = [8, 64], strides = [1, 1]} : vector<8x576xf32> to vector<8x64xf32>
    %146 = vector.extract_strided_slice %142 {offsets = [0, 192], sizes = [8, 64], strides = [1, 1]} : vector<8x576xf32> to vector<8x64xf32>
    %147 = vector.extract_strided_slice %142 {offsets = [0, 256], sizes = [8, 64], strides = [1, 1]} : vector<8x576xf32> to vector<8x64xf32>
    %148 = vector.extract_strided_slice %142 {offsets = [0, 320], sizes = [8, 64], strides = [1, 1]} : vector<8x576xf32> to vector<8x64xf32>
    %149 = vector.extract_strided_slice %142 {offsets = [0, 384], sizes = [8, 64], strides = [1, 1]} : vector<8x576xf32> to vector<8x64xf32>
    %150 = vector.extract_strided_slice %142 {offsets = [0, 448], sizes = [8, 64], strides = [1, 1]} : vector<8x576xf32> to vector<8x64xf32>
    %151 = vector.extract_strided_slice %142 {offsets = [0, 512], sizes = [8, 64], strides = [1, 1]} : vector<8x576xf32> to vector<8x64xf32>
    %152 = tpu.concatenate %143, %144, %145, %146, %147, %148, %149, %150, %151 in 0 : vector<8x64xf32>, vector<8x64xf32>, vector<8x64xf32>, vector<8x64xf32>, vector<8x64xf32>, vector<8x64xf32>, vector<8x64xf32>, vector<8x64xf32>, vector<8x64xf32> -> vector<72x64xf32>
    %153 = arith.truncf %152 : vector<72x64xf32> to vector<72x64xbf16>
    %c1_68 = arith.constant 1 : index
    %c0_69 = arith.constant 0 : index
    %c0_70 = arith.constant 0 : index
    %154 = vector.load %arg3[%c1_68, %c0_69, %c0_70] : memref<2x8x72xbf16, #tpu.memory_space<vmem>>, vector<1x8x72xbf16>
    %155 = vector.shape_cast %154 : vector<1x8x72xbf16> to vector<8x72xbf16>
    %cst_71 = arith.constant dense<0.000000e+00> : vector<8x64xf32>
    %156 = tpu.matmul %155, %153, %cst_71 {dimension_numbers = #tpu.dot_dimension_numbers<[1], [0], [0], [1], [0, 0, 1, 1], [], []>} : vector<8x72xbf16>, vector<72x64xbf16>, vector<8x64xf32> -> vector<8x64xf32>
    %c1_72 = arith.constant 1 : index
    %c0_73 = arith.constant 0 : index
    %c0_74 = arith.constant 0 : index
    %157 = vector.load %arg4[%c1_72, %c0_73, %c0_74] : memref<2x8x1xf32, #tpu.memory_space<vmem>>, vector<1x8x1xf32>
    %158 = vector.shape_cast %157 : vector<1x8x1xf32> to vector<8x1xf32>
    %159 = vector.broadcast %158 : vector<8x1xf32> to vector<8x64xf32>
    %160 = arith.addf %156, %159 : vector<8x64xf32>
    %cst_75 = arith.constant 0.000000e+00 : f32
    %161 = vector.broadcast %cst_75 : f32 to vector<8x64xf32>
    %162 = arith.maximumf %160, %161 : vector<8x64xf32>
    %163 = arith.truncf %162 : vector<8x64xf32> to vector<8x64xbf16>
    %cst_76 = arith.constant dense<0.000000e+00> : vector<8x144xf32>
    %164 = tpu.matmul %163, %1, %cst_76 {dimension_numbers = #tpu.dot_dimension_numbers<[1], [0], [0], [1], [0, 0, 1, 1], [], []>} : vector<8x64xbf16>, vector<64x144xbf16>, vector<8x144xf32> -> vector<8x144xf32>
    %165 = vector.extract_strided_slice %164 {offsets = [0, 0], sizes = [8, 16], strides = [1, 1]} : vector<8x144xf32> to vector<8x16xf32>
    %166 = vector.extract_strided_slice %164 {offsets = [0, 16], sizes = [8, 16], strides = [1, 1]} : vector<8x144xf32> to vector<8x16xf32>
    %167 = vector.extract_strided_slice %164 {offsets = [0, 32], sizes = [8, 16], strides = [1, 1]} : vector<8x144xf32> to vector<8x16xf32>
    %168 = vector.extract_strided_slice %164 {offsets = [0, 48], sizes = [8, 16], strides = [1, 1]} : vector<8x144xf32> to vector<8x16xf32>
    %169 = vector.extract_strided_slice %164 {offsets = [0, 64], sizes = [8, 16], strides = [1, 1]} : vector<8x144xf32> to vector<8x16xf32>
    %170 = vector.extract_strided_slice %164 {offsets = [0, 80], sizes = [8, 16], strides = [1, 1]} : vector<8x144xf32> to vector<8x16xf32>
    %171 = vector.extract_strided_slice %164 {offsets = [0, 96], sizes = [8, 16], strides = [1, 1]} : vector<8x144xf32> to vector<8x16xf32>
    %172 = vector.extract_strided_slice %164 {offsets = [0, 112], sizes = [8, 16], strides = [1, 1]} : vector<8x144xf32> to vector<8x16xf32>
    %173 = vector.extract_strided_slice %164 {offsets = [0, 128], sizes = [8, 16], strides = [1, 1]} : vector<8x144xf32> to vector<8x16xf32>
    %174 = tpu.concatenate %165, %166, %167, %168, %169, %170, %171, %172, %173 in 0 : vector<8x16xf32>, vector<8x16xf32>, vector<8x16xf32>, vector<8x16xf32>, vector<8x16xf32>, vector<8x16xf32>, vector<8x16xf32>, vector<8x16xf32>, vector<8x16xf32> -> vector<72x16xf32>
    %175 = arith.truncf %174 : vector<72x16xf32> to vector<72x16xbf16>
    %c1_77 = arith.constant 1 : index
    %c0_78 = arith.constant 0 : index
    %c0_79 = arith.constant 0 : index
    %176 = vector.load %arg5[%c1_77, %c0_78, %c0_79] : memref<2x16x72xbf16, #tpu.memory_space<vmem>>, vector<1x16x72xbf16>
    %177 = vector.shape_cast %176 : vector<1x16x72xbf16> to vector<16x72xbf16>
    %cst_80 = arith.constant dense<0.000000e+00> : vector<16x16xf32>
    %178 = tpu.matmul %177, %175, %cst_80 {dimension_numbers = #tpu.dot_dimension_numbers<[1], [0], [0], [1], [0, 0, 1, 1], [], []>} : vector<16x72xbf16>, vector<72x16xbf16>, vector<16x16xf32> -> vector<16x16xf32>
    %c1_81 = arith.constant 1 : index
    %c0_82 = arith.constant 0 : index
    %c0_83 = arith.constant 0 : index
    %179 = vector.load %arg6[%c1_81, %c0_82, %c0_83] : memref<2x16x1xf32, #tpu.memory_space<vmem>>, vector<1x16x1xf32>
    %180 = vector.shape_cast %179 : vector<1x16x1xf32> to vector<16x1xf32>
    %181 = vector.broadcast %180 : vector<16x1xf32> to vector<16x16xf32>
    %182 = arith.addf %178, %181 : vector<16x16xf32>
    %cst_84 = arith.constant 0.000000e+00 : f32
    %183 = vector.broadcast %cst_84 : f32 to vector<16x16xf32>
    %184 = arith.maximumf %182, %183 : vector<16x16xf32>
    %185 = vector.extract_strided_slice %184 {offsets = [0, 0], sizes = [1, 16], strides = [1, 1]} : vector<16x16xf32> to vector<1x16xf32>
    %186 = vector.extract_strided_slice %184 {offsets = [1, 0], sizes = [1, 16], strides = [1, 1]} : vector<16x16xf32> to vector<1x16xf32>
    %187 = vector.extract_strided_slice %184 {offsets = [2, 0], sizes = [1, 16], strides = [1, 1]} : vector<16x16xf32> to vector<1x16xf32>
    %188 = vector.extract_strided_slice %184 {offsets = [3, 0], sizes = [1, 16], strides = [1, 1]} : vector<16x16xf32> to vector<1x16xf32>
    %189 = vector.extract_strided_slice %184 {offsets = [4, 0], sizes = [1, 16], strides = [1, 1]} : vector<16x16xf32> to vector<1x16xf32>
    %190 = vector.extract_strided_slice %184 {offsets = [5, 0], sizes = [1, 16], strides = [1, 1]} : vector<16x16xf32> to vector<1x16xf32>
    %191 = vector.extract_strided_slice %184 {offsets = [6, 0], sizes = [1, 16], strides = [1, 1]} : vector<16x16xf32> to vector<1x16xf32>
    %192 = vector.extract_strided_slice %184 {offsets = [7, 0], sizes = [1, 16], strides = [1, 1]} : vector<16x16xf32> to vector<1x16xf32>
    %193 = vector.extract_strided_slice %184 {offsets = [8, 0], sizes = [1, 16], strides = [1, 1]} : vector<16x16xf32> to vector<1x16xf32>
    %194 = vector.extract_strided_slice %184 {offsets = [9, 0], sizes = [1, 16], strides = [1, 1]} : vector<16x16xf32> to vector<1x16xf32>
    %195 = vector.extract_strided_slice %184 {offsets = [10, 0], sizes = [1, 16], strides = [1, 1]} : vector<16x16xf32> to vector<1x16xf32>
    %196 = vector.extract_strided_slice %184 {offsets = [11, 0], sizes = [1, 16], strides = [1, 1]} : vector<16x16xf32> to vector<1x16xf32>
    %197 = vector.extract_strided_slice %184 {offsets = [12, 0], sizes = [1, 16], strides = [1, 1]} : vector<16x16xf32> to vector<1x16xf32>
    %198 = vector.extract_strided_slice %184 {offsets = [13, 0], sizes = [1, 16], strides = [1, 1]} : vector<16x16xf32> to vector<1x16xf32>
    %199 = vector.extract_strided_slice %184 {offsets = [14, 0], sizes = [1, 16], strides = [1, 1]} : vector<16x16xf32> to vector<1x16xf32>
    %200 = vector.extract_strided_slice %184 {offsets = [15, 0], sizes = [1, 16], strides = [1, 1]} : vector<16x16xf32> to vector<1x16xf32>
    %201 = tpu.concatenate %185, %186, %187, %188, %189, %190, %191, %192, %193, %194, %195, %196, %197, %198, %199, %200 in 1 : vector<1x16xf32>, vector<1x16xf32>, vector<1x16xf32>, vector<1x16xf32>, vector<1x16xf32>, vector<1x16xf32>, vector<1x16xf32>, vector<1x16xf32>, vector<1x16xf32>, vector<1x16xf32>, vector<1x16xf32>, vector<1x16xf32>, vector<1x16xf32>, vector<1x16xf32>, vector<1x16xf32>, vector<1x16xf32> -> vector<1x256xf32>
    %202 = arith.truncf %201 : vector<1x256xf32> to vector<1x256xbf16>
    %c1_85 = arith.constant 1 : index
    %c0_86 = arith.constant 0 : index
    %c0_87 = arith.constant 0 : index
    %203 = vector.load %arg7[%c1_85, %c0_86, %c0_87] : memref<2x256x128xbf16, #tpu.memory_space<vmem>>, vector<1x256x128xbf16>
    %204 = vector.shape_cast %203 : vector<1x256x128xbf16> to vector<256x128xbf16>
    %cst_88 = arith.constant dense<0.000000e+00> : vector<1x128xf32>
    %205 = tpu.matmul %202, %204, %cst_88 {dimension_numbers = #tpu.dot_dimension_numbers<[1], [0], [0], [1], [0, 0, 1, 1], [], []>} : vector<1x256xbf16>, vector<256x128xbf16>, vector<1x128xf32> -> vector<1x128xf32>
    %c1_89 = arith.constant 1 : index
    %c0_90 = arith.constant 0 : index
    %c0_91 = arith.constant 0 : index
    %206 = vector.load %arg14[%c1_89, %c0_90, %c0_91] : memref<2x1x32xf32, #tpu.memory_space<vmem>>, vector<1x1x32xf32>
    %207 = vector.shape_cast %206 : vector<1x1x32xf32> to vector<1x32xf32>
    %208 = arith.truncf %207 : vector<1x32xf32> to vector<1x32xbf16>
    %c1_92 = arith.constant 1 : index
    %c0_93 = arith.constant 0 : index
    %c0_94 = arith.constant 0 : index
    %209 = vector.load %arg8[%c1_92, %c0_93, %c0_94] : memref<2x32x128xbf16, #tpu.memory_space<vmem>>, vector<1x32x128xbf16>
    %210 = vector.shape_cast %209 : vector<1x32x128xbf16> to vector<32x128xbf16>
    %cst_95 = arith.constant dense<0.000000e+00> : vector<1x128xf32>
    %211 = tpu.matmul %208, %210, %cst_95 {dimension_numbers = #tpu.dot_dimension_numbers<[1], [0], [0], [1], [0, 0, 1, 1], [], []>} : vector<1x32xbf16>, vector<32x128xbf16>, vector<1x128xf32> -> vector<1x128xf32>
    %212 = arith.addf %205, %211 : vector<1x128xf32>
    %c1_96 = arith.constant 1 : index
    %c0_97 = arith.constant 0 : index
    %c0_98 = arith.constant 0 : index
    %213 = vector.load %arg9[%c1_96, %c0_97, %c0_98] : memref<2x1x128xf32, #tpu.memory_space<vmem>>, vector<1x1x128xf32>
    %214 = vector.shape_cast %213 : vector<1x1x128xf32> to vector<1x128xf32>
    %215 = arith.addf %212, %214 : vector<1x128xf32>
    %216 = vector.extract_strided_slice %215 {offsets = [0, 0], sizes = [1, 32], strides = [1, 1]} : vector<1x128xf32> to vector<1x32xf32>
    %217 = arith.negf %216 : vector<1x32xf32>
    %218 = math.exp %217 : vector<1x32xf32>
    %cst_99 = arith.constant 1.000000e+00 : f32
    %219 = vector.broadcast %cst_99 : f32 to vector<1x32xf32>
    %220 = arith.addf %219, %218 : vector<1x32xf32>
    %221 = arith.divf %219, %220 : vector<1x32xf32>
    %222 = vector.extract_strided_slice %215 {offsets = [0, 32], sizes = [1, 32], strides = [1, 1]} : vector<1x128xf32> to vector<1x32xf32>
    %223 = arith.negf %222 : vector<1x32xf32>
    %224 = math.exp %223 : vector<1x32xf32>
    %cst_100 = arith.constant 1.000000e+00 : f32
    %225 = vector.broadcast %cst_100 : f32 to vector<1x32xf32>
    %226 = arith.addf %225, %224 : vector<1x32xf32>
    %227 = arith.divf %225, %226 : vector<1x32xf32>
    %228 = vector.extract_strided_slice %215 {offsets = [0, 64], sizes = [1, 32], strides = [1, 1]} : vector<1x128xf32> to vector<1x32xf32>
    %229 = math.tanh %228 : vector<1x32xf32>
    %230 = vector.extract_strided_slice %215 {offsets = [0, 96], sizes = [1, 32], strides = [1, 1]} : vector<1x128xf32> to vector<1x32xf32>
    %231 = arith.negf %230 : vector<1x32xf32>
    %232 = math.exp %231 : vector<1x32xf32>
    %cst_101 = arith.constant 1.000000e+00 : f32
    %233 = vector.broadcast %cst_101 : f32 to vector<1x32xf32>
    %234 = arith.addf %233, %232 : vector<1x32xf32>
    %235 = arith.divf %233, %234 : vector<1x32xf32>
    %c1_102 = arith.constant 1 : index
    %c0_103 = arith.constant 0 : index
    %c0_104 = arith.constant 0 : index
    %236 = vector.load %arg15[%c1_102, %c0_103, %c0_104] : memref<2x1x32xf32, #tpu.memory_space<vmem>>, vector<1x1x32xf32>
    %237 = vector.shape_cast %236 : vector<1x1x32xf32> to vector<1x32xf32>
    %238 = arith.mulf %227, %237 : vector<1x32xf32>
    %239 = arith.mulf %221, %229 : vector<1x32xf32>
    %240 = arith.addf %238, %239 : vector<1x32xf32>
    %241 = math.tanh %240 : vector<1x32xf32>
    %242 = arith.mulf %235, %241 : vector<1x32xf32>
    %243 = arith.truncf %242 : vector<1x32xf32> to vector<1x32xbf16>
    %c1_105 = arith.constant 1 : index
    %c0_106 = arith.constant 0 : index
    %c0_107 = arith.constant 0 : index
    %244 = vector.load %arg12[%c1_105, %c0_106, %c0_107] : memref<2x32x1xbf16, #tpu.memory_space<vmem>>, vector<1x32x1xbf16>
    %245 = vector.shape_cast %244 : vector<1x32x1xbf16> to vector<32x1xbf16>
    %cst_108 = arith.constant dense<0.000000e+00> : vector<1x1xf32>
    %246 = tpu.matmul %243, %245, %cst_108 {dimension_numbers = #tpu.dot_dimension_numbers<[1], [0], [0], [1], [0, 0, 1, 1], [], []>} : vector<1x32xbf16>, vector<32x1xbf16>, vector<1x1xf32> -> vector<1x1xf32>
    %c1_109 = arith.constant 1 : index
    %c0_110 = arith.constant 0 : index
    %c0_111 = arith.constant 0 : index
    %247 = vector.load %arg13[%c1_109, %c0_110, %c0_111] : memref<2x1x1xf32, #tpu.memory_space<vmem>>, vector<1x1x1xf32>
    %248 = vector.shape_cast %247 : vector<1x1x1xf32> to vector<1x1xf32>
    %249 = arith.addf %246, %248 : vector<1x1xf32>
    %c1_112 = arith.constant 1 : index
    %c0_113 = arith.constant 0 : index
    %c0_114 = arith.constant 0 : index
    %250 = vector.load %arg10[%c1_112, %c0_113, %c0_114] : memref<2x32x4xbf16, #tpu.memory_space<vmem>>, vector<1x32x4xbf16>
    %251 = vector.shape_cast %250 : vector<1x32x4xbf16> to vector<32x4xbf16>
    %cst_115 = arith.constant dense<0.000000e+00> : vector<1x4xf32>
    %252 = tpu.matmul %243, %251, %cst_115 {dimension_numbers = #tpu.dot_dimension_numbers<[1], [0], [0], [1], [0, 0, 1, 1], [], []>} : vector<1x32xbf16>, vector<32x4xbf16>, vector<1x4xf32> -> vector<1x4xf32>
    %c1_116 = arith.constant 1 : index
    %c0_117 = arith.constant 0 : index
    %c0_118 = arith.constant 0 : index
    %253 = vector.load %arg11[%c1_116, %c0_117, %c0_118] : memref<2x1x4xf32, #tpu.memory_space<vmem>>, vector<1x1x4xf32>
    %254 = vector.shape_cast %253 : vector<1x1x4xf32> to vector<1x4xf32>
    %255 = arith.addf %252, %254 : vector<1x4xf32>
    %cst_119 = arith.constant dense<0xFF800000> : vector<1xf32>
    %256 = vector.multi_reduction <maximumf>, %255, %cst_119 [1] : vector<1x4xf32> to vector<1xf32>
    %257 = vector.shape_cast %256 : vector<1xf32> to vector<1x1xf32>
    %258 = vector.broadcast %257 : vector<1x1xf32> to vector<1x4xf32>
    %259 = arith.subf %255, %258 : vector<1x4xf32>
    %260 = math.exp %259 : vector<1x4xf32>
    %cst_120 = arith.constant dense<0.000000e+00> : vector<1xf32>
    %261 = vector.multi_reduction <add>, %260, %cst_120 [1] : vector<1x4xf32> to vector<1xf32>
    %262 = vector.shape_cast %261 : vector<1xf32> to vector<1x1xf32>
    %263 = math.log %262 : vector<1x1xf32>
    %264 = vector.broadcast %263 : vector<1x1xf32> to vector<1x4xf32>
    %265 = arith.subf %259, %264 : vector<1x4xf32>
    %266 = vector.broadcast %262 : vector<1x1xf32> to vector<1x4xf32>
    %267 = arith.divf %260, %266 : vector<1x4xf32>
    %268 = arith.mulf %265, %267 : vector<1x4xf32>
    %cst_121 = arith.constant dense<0.000000e+00> : vector<1xf32>
    %269 = vector.multi_reduction <add>, %268, %cst_121 [1] : vector<1x4xf32> to vector<1xf32>
    %270 = vector.shape_cast %269 : vector<1xf32> to vector<1x1xf32>
    %cst_122 = arith.constant 0.000000e+00 : f32
    %271 = vector.broadcast %cst_122 : f32 to vector<1x1xf32>
    %272 = arith.subf %271, %270 : vector<1x1xf32>
    %cst_123 = arith.constant 0.000000e+00 : f32
    %273 = vector.broadcast %cst_123 : f32 to vector<1x54xf32>
    %274 = tpu.concatenate %242, %240, %249, %267, %265, %272, %273 in 1 : vector<1x32xf32>, vector<1x32xf32>, vector<1x1xf32>, vector<1x4xf32>, vector<1x4xf32>, vector<1x1xf32>, vector<1x54xf32> -> vector<1x128xf32>
    %c1_124 = arith.constant 1 : index
    %c0_125 = arith.constant 0 : index
    %c0_126 = arith.constant 0 : index
    %275 = vector.load %arg16[%c1_124, %c0_125, %c0_126] : memref<2x1x128xf32, #tpu.memory_space<vmem>>, vector<1x1x128xf32>
    %276 = vector.shape_cast %275 : vector<1x1x128xf32> to vector<1x128xf32>
    %277 = vector.shape_cast %274 : vector<1x128xf32> to vector<1x1x128xf32>
    tpu.vector_store %arg16[%c1_124, %c0_125, %c0_126], %277 {strides = array<i32>} : memref<2x1x128xf32, #tpu.memory_space<vmem>>, vector<1x1x128xf32>,
    return
  }
}

</mosaic_0001>

<llo_original>
// kernel: squeeze.0
$region0: #{squeeze.0}
  %s0 = inlined_call_operand.vmem [shape: bf16[2,1,4,16,16], index: 0, kind: input, shape index: {}]
  %s1 = inlined_call_operand.vmem [shape: bf16[2,4,256], index: 1, kind: output, shape index: {}]
  $region1: #{squeeze.0} parent=0
    #allocation0 [shape = 'u8[16384]{0}', space=vmem, size = 0x4000, scoped, tag = 'scoped mem for output reshape']
    #allocation1 [shape = 'u8[65536]{0}', space=vmem, size = 0x10000, scoped, tag = 'scoped mem for input reshape']
    %s3 = smul.u32 4, 2
    %s4 = sshllo.u32 0, %s3
    %s5 = smul.addr 4, 15
    %s6 = scalar_lea.vmem %s0, %s5
    %s7 = sshrl.u32 %s4, 1
    %s8 = sor.u32 %s4, %s7
    %s9 = sand.u32 %s8, 85
    %s10 = sshrl.u32 %s9, 1
    %s11 = sor.u32 %s9, %s10
    %s12 = sand.u32 51, %s11
    %s13 = sshrl.u32 %s12, 2
    %s14 = sor.u32 %s12, %s13
    %s15 = sand.u32 15, %s14
    %v16 = vld [vmem:[%s6] sm:%s15]
    %v17 = vunpack.c.l.bf16 %v16
    %v18 = vunpack.c.h.bf16 %v16
    %s19 = scalar_lea.vmem [#allocation1], 120
    %20 = vst [vmem:[%s19] sm:%s4] %v17
    %s21 = smul.addr 4, 14
    %s22 = scalar_lea.vmem %s0, %s21
    %s23 = sshrl.u32 %s4, 1
    %s24 = sor.u32 %s4, %s23
    %s25 = sand.u32 %s24, 85
    %s26 = sshrl.u32 %s25, 1
    %s27 = sor.u32 %s25, %s26
    %s28 = sand.u32 51, %s27
    %s29 = sshrl.u32 %s28, 2
    %s30 = sor.u32 %s28, %s29
    %s31 = sand.u32 15, %s30
    %v32 = vld [vmem:[%s22] sm:%s31]
    %v33 = vunpack.c.l.bf16 %v32
    %v34 = vunpack.c.h.bf16 %v32
    %s35 = scalar_lea.vmem [#allocation1], 112
    %36 = vst [vmem:[%s35] sm:%s4] %v33
    %s37 = smul.addr 4, 13
    %s38 = scalar_lea.vmem %s0, %s37
    %s39 = sshrl.u32 %s4, 1
    %s40 = sor.u32 %s4, %s39
    %s41 = sand.u32 %s40, 85
    %s42 = sshrl.u32 %s41, 1
    %s43 = sor.u32 %s41, %s42
    %s44 = sand.u32 51, %s43
    %s45 = sshrl.u32 %s44, 2
    %s46 = sor.u32 %s44, %s45
    %s47 = sand.u32 15, %s46
    %v48 = vld [vmem:[%s38] sm:%s47]
    %v49 = vunpack.c.l.bf16 %v48
    %v50 = vunpack.c.h.bf16 %v48
    %s51 = scalar_lea.vmem [#allocation1], 104
    %52 = vst [vmem:[%s51] sm:%s4] %v49
    %s53 = smul.addr 4, 12
    %s54 = scalar_lea.vmem %s0, %s53
    %s55 = sshrl.u32 %s4, 1
    %s56 = sor.u32 %s4, %s55
    %s57 = sand.u32 %s56, 85
    %s58 = sshrl.u32 %s57, 1
    %s59 = sor.u32 %s57, %s58
    %s60 = sand.u32 51, %s59
    %s61 = sshrl.u32 %s60, 2
    %s62 = sor.u32 %s60, %s61
    %s63 = sand.u32 15, %s62
    %v64 = vld [vmem:[%s54] sm:%s63]
    %v65 = vunpack.c.l.bf16 %v64
    %v66 = vunpack.c.h.bf16 %v64
    %s67 = scalar_lea.vmem [#allocation1], 96
    %68 = vst [vmem:[%s67] sm:%s4] %v65
    %s69 = smul.addr 4, 11
    %s70 = scalar_lea.vmem %s0, %s69
    %s71 = sshrl.u32 %s4, 1
    %s72 = sor.u32 %s4, %s71
    %s73 = sand.u32 %s72, 85
    %s74 = sshrl.u32 %s73, 1
    %s75 = sor.u32 %s73, %s74
    %s76 = sand.u32 51, %s75
    %s77 = sshrl.u32 %s76, 2
    %s78 = sor.u32 %s76, %s77
    %s79 = sand.u32 15, %s78
    %v80 = vld [vmem:[%s70] sm:%s79]
    %v81 = vunpack.c.l.bf16 %v80
    %v82 = vunpack.c.h.bf16 %v80
    %s83 = scalar_lea.vmem [#allocation1], 88
    %84 = vst [vmem:[%s83] sm:%s4] %v81
    %s85 = smul.addr 4, 10
    %s86 = scalar_lea.vmem %s0, %s85
    %s87 = sshrl.u32 %s4, 1
    %s88 = sor.u32 %s4, %s87
    %s89 = sand.u32 %s88, 85
    %s90 = sshrl.u32 %s89, 1
    %s91 = sor.u32 %s89, %s90
    %s92 = sand.u32 51, %s91
    %s93 = sshrl.u32 %s92, 2
    %s94 = sor.u32 %s92, %s93
    %s95 = sand.u32 15, %s94
    %v96 = vld [vmem:[%s86] sm:%s95]
    %v97 = vunpack.c.l.bf16 %v96
    %v98 = vunpack.c.h.bf16 %v96
    %s99 = scalar_lea.vmem [#allocation1], 80
    %100 = vst [vmem:[%s99] sm:%s4] %v97
    %s101 = smul.addr 4, 9
    %s102 = scalar_lea.vmem %s0, %s101
    %s103 = sshrl.u32 %s4, 1
    %s104 = sor.u32 %s4, %s103
    %s105 = sand.u32 %s104, 85
    %s106 = sshrl.u32 %s105, 1
    %s107 = sor.u32 %s105, %s106
    %s108 = sand.u32 51, %s107
    %s109 = sshrl.u32 %s108, 2
    %s110 = sor.u32 %s108, %s109
    %s111 = sand.u32 15, %s110
    %v112 = vld [vmem:[%s102] sm:%s111]
    %v113 = vunpack.c.l.bf16 %v112
    %v114 = vunpack.c.h.bf16 %v112
    %s115 = scalar_lea.vmem [#allocation1], 72
    %116 = vst [vmem:[%s115] sm:%s4] %v113
    %s117 = smul.addr 4, 8
    %s118 = scalar_lea.vmem %s0, %s117
    %s119 = sshrl.u32 %s4, 1
    %s120 = sor.u32 %s4, %s119
    %s121 = sand.u32 %s120, 85
    %s122 = sshrl.u32 %s121, 1
    %s123 = sor.u32 %s121, %s122
    %s124 = sand.u32 51, %s123
    %s125 = sshrl.u32 %s124, 2
    %s126 = sor.u32 %s124, %s125
    %s127 = sand.u32 15, %s126
    %v128 = vld [vmem:[%s118] sm:%s127]
    %v129 = vunpack.c.l.bf16 %v128
    %v130 = vunpack.c.h.bf16 %v128
    %s131 = scalar_lea.vmem [#allocation1], 64
    %132 = vst [vmem:[%s131] sm:%s4] %v129
    %s133 = smul.addr 4, 7
    %s134 = scalar_lea.vmem %s0, %s133
    %s135 = sshrl.u32 %s4, 1
    %s136 = sor.u32 %s4, %s135
    %s137 = sand.u32 %s136, 85
    %s138 = sshrl.u32 %s137, 1
    %s139 = sor.u32 %s137, %s138
    %s140 = sand.u32 51, %s139
    %s141 = sshrl.u32 %s140, 2
    %s142 = sor.u32 %s140, %s141
    %s143 = sand.u32 15, %s142
    %v144 = vld [vmem:[%s134] sm:%s143]
    %v145 = vunpack.c.l.bf16 %v144
    %v146 = vunpack.c.h.bf16 %v144
    %s147 = scalar_lea.vmem [#allocation1], 56
    %148 = vst [vmem:[%s147] sm:%s4] %v145
    %s149 = smul.addr 4, 6
    %s150 = scalar_lea.vmem %s0, %s149
    %s151 = sshrl.u32 %s4, 1
    %s152 = sor.u32 %s4, %s151
    %s153 = sand.u32 %s152, 85
    %s154 = sshrl.u32 %s153, 1
    %s155 = sor.u32 %s153, %s154
    %s156 = sand.u32 51, %s155
    %s157 = sshrl.u32 %s156, 2
    %s158 = sor.u32 %s156, %s157
    %s159 = sand.u32 15, %s158
    %v160 = vld [vmem:[%s150] sm:%s159]
    %v161 = vunpack.c.l.bf16 %v160
    %v162 = vunpack.c.h.bf16 %v160
    %s163 = scalar_lea.vmem [#allocation1], 48
    %164 = vst [vmem:[%s163] sm:%s4] %v161
    %s165 = smul.addr 4, 5
    %s166 = scalar_lea.vmem %s0, %s165
    %s167 = sshrl.u32 %s4, 1
    %s168 = sor.u32 %s4, %s167
    %s169 = sand.u32 %s168, 85
    %s170 = sshrl.u32 %s169, 1
    %s171 = sor.u32 %s169, %s170
    %s172 = sand.u32 51, %s171
    %s173 = sshrl.u32 %s172, 2
    %s174 = sor.u32 %s172, %s173
    %s175 = sand.u32 15, %s174
    %v176 = vld [vmem:[%s166] sm:%s175]
    %v177 = vunpack.c.l.bf16 %v176
    %v178 = vunpack.c.h.bf16 %v176
    %s179 = scalar_lea.vmem [#allocation1], 40
    %180 = vst [vmem:[%s179] sm:%s4] %v177
    %s181 = smul.addr 4, 4
    %s182 = scalar_lea.vmem %s0, %s181
    %s183 = sshrl.u32 %s4, 1
    %s184 = sor.u32 %s4, %s183
    %s185 = sand.u32 %s184, 85
    %s186 = sshrl.u32 %s185, 1
    %s187 = sor.u32 %s185, %s186
    %s188 = sand.u32 51, %s187
    %s189 = sshrl.u32 %s188, 2
    %s190 = sor.u32 %s188, %s189
    %s191 = sand.u32 15, %s190
    %v192 = vld [vmem:[%s182] sm:%s191]
    %v193 = vunpack.c.l.bf16 %v192
    %v194 = vunpack.c.h.bf16 %v192
    %s195 = scalar_lea.vmem [#allocation1], 32
    %196 = vst [vmem:[%s195] sm:%s4] %v193
    %s197 = smul.addr 4, 3
    %s198 = scalar_lea.vmem %s0, %s197
    %s199 = sshrl.u32 %s4, 1
    %s200 = sor.u32 %s4, %s199
    %s201 = sand.u32 %s200, 85
    %s202 = sshrl.u32 %s201, 1
    %s203 = sor.u32 %s201, %s202
    %s204 = sand.u32 51, %s203
    %s205 = sshrl.u32 %s204, 2
    %s206 = sor.u32 %s204, %s205
    %s207 = sand.u32 15, %s206
    %v208 = vld [vmem:[%s198] sm:%s207]
    %v209 = vunpack.c.l.bf16 %v208
    %v210 = vunpack.c.h.bf16 %v208
    %s211 = scalar_lea.vmem [#allocation1], 24
    %212 = vst [vmem:[%s211] sm:%s4] %v209
    %s213 = smul.addr 4, 2
    %s214 = scalar_lea.vmem %s0, %s213
    %s215 = sshrl.u32 %s4, 1
    %s216 = sor.u32 %s4, %s215
    %s217 = sand.u32 %s216, 85
    %s218 = sshrl.u32 %s217, 1
    %s219 = sor.u32 %s217, %s218
    %s220 = sand.u32 51, %s219
    %s221 = sshrl.u32 %s220, 2
    %s222 = sor.u32 %s220, %s221
    %s223 = sand.u32 15, %s222
    %v224 = vld [vmem:[%s214] sm:%s223]
    %v225 = vunpack.c.l.bf16 %v224
    %v226 = vunpack.c.h.bf16 %v224
    %s227 = scalar_lea.vmem [#allocation1], 16
    %228 = vst [vmem:[%s227] sm:%s4] %v225
    %s229 = scalar_lea.vmem %s0, 4
    %s230 = sshrl.u32 %s4, 1
    %s231 = sor.u32 %s4, %s230
    %s232 = sand.u32 %s231, 85
    %s233 = sshrl.u32 %s232, 1
    %s234 = sor.u32 %s232, %s233
    %s235 = sand.u32 51, %s234
    %s236 = sshrl.u32 %s235, 2
    %s237 = sor.u32 %s235, %s236
    %s238 = sand.u32 15, %s237
    %v239 = vld [vmem:[%s229] sm:%s238]
    %v240 = vunpack.c.l.bf16 %v239
    %v241 = vunpack.c.h.bf16 %v239
    %s242 = scalar_lea.vmem [#allocation1], 8
    %243 = vst [vmem:[%s242] sm:%s4] %v240
    %s244 = sshrl.u32 %s4, 1
    %s245 = sor.u32 %s4, %s244
    %s246 = sand.u32 %s245, 85
    %s247 = sshrl.u32 %s246, 1
    %s248 = sor.u32 %s246, %s247
    %s249 = sand.u32 51, %s248
    %s250 = sshrl.u32 %s249, 2
    %s251 = sor.u32 %s249, %s250
    %s252 = sand.u32 15, %s251
    %v253 = vld [vmem:[%s0] sm:%s252]
    %v254 = vunpack.c.l.bf16 %v253
    %v255 = vunpack.c.h.bf16 %v253
    %256 = vst [vmem:[#allocation1] sm:%s4] %v254
    %v257 = vld [vmem:[#allocation1] ss:$8 sm:$0xf]
    %v258 = vld [vmem:[#allocation1] ss:$8 sm:$0xf0]
    %vm259 = vcmask 1047556
    %v260 = vsel %vm259, %v258, %v257
    %vm261 = vcmask 130048
    %262 = vst.msk [vmem:[#allocation0] ss:$8 sm:$0x3] %vm261, %v260
    %s263 = scalar_lea.vmem [#allocation0], 4294967281
    %264 = vst.msk [vmem:[%s263] ss:$8 sm:$0xc] %vm261, %v260
    %s265 = scalar_lea.vmem [#allocation0], 4294967266
    %266 = vst.msk [vmem:[%s265] ss:$8 sm:$0x30] %vm261, %v260
    %s267 = scalar_lea.vmem [#allocation0], 4294967251
    %268 = vst.msk [vmem:[%s267] ss:$8 sm:$0xc0] %vm261, %v260
    %s269 = scalar_lea.vmem [#allocation1], 64
    %v270 = vld [vmem:[%s269] ss:$8 sm:$0xf]
    %s271 = scalar_lea.vmem [#allocation1], 64
    %v272 = vld [vmem:[%s271] ss:$8 sm:$0xf0]
    %vm273 = vcmask 1047556
    %v274 = vsel %vm273, %v272, %v270
    %vm275 = vcmask 130048
    %s276 = scalar_lea.vmem [#allocation0], 16
    %277 = vst.msk [vmem:[%s276] ss:$8 sm:$0x3] %vm275, %v274
    %s278 = scalar_lea.vmem [#allocation0], 1
    %279 = vst.msk [vmem:[%s278] ss:$8 sm:$0xc] %vm275, %v274
    %s280 = scalar_lea.vmem [#allocation0], 4294967282
    %281 = vst.msk [vmem:[%s280] ss:$8 sm:$0x30] %vm275, %v274
    %s282 = scalar_lea.vmem [#allocation0], 4294967267
    %283 = vst.msk [vmem:[%s282] ss:$8 sm:$0xc0] %vm275, %v274
    %s284 = scalar_lea.vmem [#allocation1], 7
    %s285 = smov 3
    %v286 = vld [vmem:[%s284] ss:$16 sm:%s285]
    %s287 = scalar_lea.vmem [#allocation1], 7
    %s288 = smov 12
    %v289 = vld [vmem:[%s287] ss:$16 sm:%s288]
    %vm290 = vcmask 1043458
    %v291 = vsel %vm290, %v289, %v286
    %s292 = scalar_lea.vmem [#allocation1], 4294967247
    %s293 = smov 48
    %v294 = vld [vmem:[%s292] ss:$16 sm:%s293]
    %vm295 = vcmask 1045508
    %v296 = vsel %vm295, %v294, %v291
    %s297 = scalar_lea.vmem [#allocation1], 4294967247
    %s298 = smov 192
    %v299 = vld [vmem:[%s297] ss:$16 sm:%s298]
    %vm300 = vcmask 1047558
    %v301 = vsel %vm300, %v299, %v296
    %302 = vrot.lane.b32.xlu0 %v301, 112
    %v303 = vpop.permute.xlu0 %302
    %vm304 = vcmask 1048448
    %305 = vst.msk [vmem:[#allocation0] sm:$0xf] %vm304, %v303
    %s306 = scalar_lea.vmem [#allocation0], 4
    %307 = vst.msk [vmem:[%s306] sm:$0xf0] %vm304, %v303
    %s308 = scalar_lea.vmem [#allocation1], 71
    %s309 = smov 3
    %v310 = vld [vmem:[%s308] ss:$16 sm:%s309]
    %s311 = scalar_lea.vmem [#allocation1], 71
    %s312 = smov 12
    %v313 = vld [vmem:[%s311] ss:$16 sm:%s312]
    %vm314 = vcmask 1043458
    %v315 = vsel %vm314, %v313, %v310
    %s316 = scalar_lea.vmem [#allocation1], 15
    %s317 = smov 48
    %v318 = vld [vmem:[%s316] ss:$16 sm:%s317]
    %vm319 = vcmask 1045508
    %v320 = vsel %vm319, %v318, %v315
    %s321 = scalar_lea.vmem [#allocation1], 15
    %s322 = smov 192
    %v323 = vld [vmem:[%s321] ss:$16 sm:%s322]
    %vm324 = vcmask 1047558
    %v325 = vsel %vm324, %v323, %v320
    %326 = vrot.lane.b32.xlu0 %v325, 112
    %v327 = vpop.permute.xlu0 %326
    %vm328 = vcmask 1048448
    %s329 = scalar_lea.vmem [#allocation0], 16
    %330 = vst.msk [vmem:[%s329] sm:$0xf] %vm328, %v327
    %s331 = scalar_lea.vmem [#allocation0], 20
    %332 = vst.msk [vmem:[%s331] sm:$0xf0] %vm328, %v327
    %s333 = scalar_lea.vmem [#allocation1], 6
    %s334 = smov 3
    %v335 = vld [vmem:[%s333] ss:$16 sm:%s334]
    %s336 = scalar_lea.vmem [#allocation1], 6
    %s337 = smov 12
    %v338 = vld [vmem:[%s336] ss:$16 sm:%s337]
    %vm339 = vcmask 1043458
    %v340 = vsel %vm339, %v338, %v335
    %s341 = scalar_lea.vmem [#allocation1], 4294967246
    %s342 = smov 48
    %v343 = vld [vmem:[%s341] ss:$16 sm:%s342]
    %vm344 = vcmask 1045508
    %v345 = vsel %vm344, %v343, %v340
    %s346 = scalar_lea.vmem [#allocation1], 4294967246
    %s347 = smov 192
    %v348 = vld [vmem:[%s346] ss:$16 sm:%s347]
    %vm349 = vcmask 1047558
    %v350 = vsel %vm349, %v348, %v345
    %351 = vrot.lane.b32.xlu0 %v350, 96
    %v352 = vpop.permute.xlu0 %351
    %vm353 = vcmask 917248
    %354 = vst.msk [vmem:[#allocation0] sm:$0xf] %vm353, %v352
    %s355 = scalar_lea.vmem [#allocation0], 4
    %356 = vst.msk [vmem:[%s355] sm:$0xf0] %vm353, %v352
    %s357 = scalar_lea.vmem [#allocation1], 70
    %s358 = smov 3
    %v359 = vld [vmem:[%s357] ss:$16 sm:%s358]
    %s360 = scalar_lea.vmem [#allocation1], 70
    %s361 = smov 12
    %v362 = vld [vmem:[%s360] ss:$16 sm:%s361]
    %vm363 = vcmask 1043458
    %v364 = vsel %vm363, %v362, %v359
    %s365 = scalar_lea.vmem [#allocation1], 14
    %s366 = smov 48
    %v367 = vld [vmem:[%s365] ss:$16 sm:%s366]
    %vm368 = vcmask 1045508
    %v369 = vsel %vm368, %v367, %v364
    %s370 = scalar_lea.vmem [#allocation1], 14
    %s371 = smov 192
    %v372 = vld [vmem:[%s370] ss:$16 sm:%s371]
    %vm373 = vcmask 1047558
    %v374 = vsel %vm373, %v372, %v369
    %375 = vrot.lane.b32.xlu0 %v374, 96
    %v376 = vpop.permute.xlu0 %375
    %vm377 = vcmask 917248
    %s378 = scalar_lea.vmem [#allocation0], 16
    %379 = vst.msk [vmem:[%s378] sm:$0xf] %vm377, %v376
    %s380 = scalar_lea.vmem [#allocation0], 20
    %381 = vst.msk [vmem:[%s380] sm:$0xf0] %vm377, %v376
    %s382 = scalar_lea.vmem [#allocation1], 5
    %s383 = smov 3
    %v384 = vld [vmem:[%s382] ss:$16 sm:%s383]
    %s385 = scalar_lea.vmem [#allocation1], 5
    %s386 = smov 12
    %v387 = vld [vmem:[%s385] ss:$16 sm:%s386]
    %vm388 = vcmask 1043458
    %v389 = vsel %vm388, %v387, %v384
    %s390 = scalar_lea.vmem [#allocation1], 4294967245
    %s391 = smov 48
    %v392 = vld [vmem:[%s390] ss:$16 sm:%s391]
    %vm393 = vcmask 1045508
    %v394 = vsel %vm393, %v392, %v389
    %s395 = scalar_lea.vmem [#allocation1], 4294967245
    %s396 = smov 192
    %v397 = vld [vmem:[%s395] ss:$16 sm:%s396]
    %vm398 = vcmask 1047558
    %v399 = vsel %vm398, %v397, %v394
    %400 = vrot.lane.b32.xlu0 %v399, 80
    %v401 = vpop.permute.xlu0 %400
    %vm402 = vcmask 786048
    %403 = vst.msk [vmem:[#allocation0] sm:$0xf] %vm402, %v401
    %s404 = scalar_lea.vmem [#allocation0], 4
    %405 = vst.msk [vmem:[%s404] sm:$0xf0] %vm402, %v401
    %s406 = scalar_lea.vmem [#allocation1], 69
    %s407 = smov 3
    %v408 = vld [vmem:[%s406] ss:$16 sm:%s407]
    %s409 = scalar_lea.vmem [#allocation1], 69
    %s410 = smov 12
    %v411 = vld [vmem:[%s409] ss:$16 sm:%s410]
    %vm412 = vcmask 1043458
    %v413 = vsel %vm412, %v411, %v408
    %s414 = scalar_lea.vmem [#allocation1], 13
    %s415 = smov 48
    %v416 = vld [vmem:[%s414] ss:$16 sm:%s415]
    %vm417 = vcmask 1045508
    %v418 = vsel %vm417, %v416, %v413
    %s419 = scalar_lea.vmem [#allocation1], 13
    %s420 = smov 192
    %v421 = vld [vmem:[%s419] ss:$16 sm:%s420]
    %vm422 = vcmask 1047558
    %v423 = vsel %vm422, %v421, %v418
    %424 = vrot.lane.b32.xlu0 %v423, 80
    %v425 = vpop.permute.xlu0 %424
    %vm426 = vcmask 786048
    %s427 = scalar_lea.vmem [#allocation0], 16
    %428 = vst.msk [vmem:[%s427] sm:$0xf] %vm426, %v425
    %s429 = scalar_lea.vmem [#allocation0], 20
    %430 = vst.msk [vmem:[%s429] sm:$0xf0] %vm426, %v425
    %s431 = scalar_lea.vmem [#allocation1], 4
    %s432 = smov 3
    %v433 = vld [vmem:[%s431] ss:$16 sm:%s432]
    %s434 = scalar_lea.vmem [#allocation1], 4
    %s435 = smov 12
    %v436 = vld [vmem:[%s434] ss:$16 sm:%s435]
    %vm437 = vcmask 1043458
    %v438 = vsel %vm437, %v436, %v433
    %s439 = scalar_lea.vmem [#allocation1], 4294967244
    %s440 = smov 48
    %v441 = vld [vmem:[%s439] ss:$16 sm:%s440]
    %vm442 = vcmask 1045508
    %v443 = vsel %vm442, %v441, %v438
    %s444 = scalar_lea.vmem [#allocation1], 4294967244
    %s445 = smov 192
    %v446 = vld [vmem:[%s444] ss:$16 sm:%s445]
    %vm447 = vcmask 1047558
    %v448 = vsel %vm447, %v446, %v443
    %449 = vrot.lane.b32.xlu0 %v448, 64
    %v450 = vpop.permute.xlu0 %449
    %vm451 = vcmask 654848
    %452 = vst.msk [vmem:[#allocation0] sm:$0xf] %vm451, %v450
    %s453 = scalar_lea.vmem [#allocation0], 4
    %454 = vst.msk [vmem:[%s453] sm:$0xf0] %vm451, %v450
    %s455 = scalar_lea.vmem [#allocation1], 68
    %s456 = smov 3
    %v457 = vld [vmem:[%s455] ss:$16 sm:%s456]
    %s458 = scalar_lea.vmem [#allocation1], 68
    %s459 = smov 12
    %v460 = vld [vmem:[%s458] ss:$16 sm:%s459]
    %vm461 = vcmask 1043458
    %v462 = vsel %vm461, %v460, %v457
    %s463 = scalar_lea.vmem [#allocation1], 12
    %s464 = smov 48
    %v465 = vld [vmem:[%s463] ss:$16 sm:%s464]
    %vm466 = vcmask 1045508
    %v467 = vsel %vm466, %v465, %v462
    %s468 = scalar_lea.vmem [#allocation1], 12
    %s469 = smov 192
    %v470 = vld [vmem:[%s468] ss:$16 sm:%s469]
    %vm471 = vcmask 1047558
    %v472 = vsel %vm471, %v470, %v467
    %473 = vrot.lane.b32.xlu0 %v472, 64
    %v474 = vpop.permute.xlu0 %473
    %vm475 = vcmask 654848
    %s476 = scalar_lea.vmem [#allocation0], 16
    %477 = vst.msk [vmem:[%s476] sm:$0xf] %vm475, %v474
    %s478 = scalar_lea.vmem [#allocation0], 20
    %479 = vst.msk [vmem:[%s478] sm:$0xf0] %vm475, %v474
    %s480 = scalar_lea.vmem [#allocation1], 3
    %s481 = smov 3
    %v482 = vld [vmem:[%s480] ss:$16 sm:%s481]
    %s483 = scalar_lea.vmem [#allocation1], 3
    %s484 = smov 12
    %v485 = vld [vmem:[%s483] ss:$16 sm:%s484]
    %vm486 = vcmask 1043458
    %v487 = vsel %vm486, %v485, %v482
    %s488 = scalar_lea.vmem [#allocation1], 4294967243
    %s489 = smov 48
    %v490 = vld [vmem:[%s488] ss:$16 sm:%s489]
    %vm491 = vcmask 1045508
    %v492 = vsel %vm491, %v490, %v487
    %s493 = scalar_lea.vmem [#allocation1], 4294967243
    %s494 = smov 192
    %v495 = vld [vmem:[%s493] ss:$16 sm:%s494]
    %vm496 = vcmask 1047558
    %v497 = vsel %vm496, %v495, %v492
    %498 = vrot.lane.b32.xlu0 %v497, 48
    %v499 = vpop.permute.xlu0 %498
    %vm500 = vcmask 523648
    %501 = vst.msk [vmem:[#allocation0] sm:$0xf] %vm500, %v499
    %s502 = scalar_lea.vmem [#allocation0], 4
    %503 = vst.msk [vmem:[%s502] sm:$0xf0] %vm500, %v499
    %s504 = scalar_lea.vmem [#allocation1], 67
    %s505 = smov 3
    %v506 = vld [vmem:[%s504] ss:$16 sm:%s505]
    %s507 = scalar_lea.vmem [#allocation1], 67
    %s508 = smov 12
    %v509 = vld [vmem:[%s507] ss:$16 sm:%s508]
    %vm510 = vcmask 1043458
    %v511 = vsel %vm510, %v509, %v506
    %s512 = scalar_lea.vmem [#allocation1], 11
    %s513 = smov 48
    %v514 = vld [vmem:[%s512] ss:$16 sm:%s513]
    %vm515 = vcmask 1045508
    %v516 = vsel %vm515, %v514, %v511
    %s517 = scalar_lea.vmem [#allocation1], 11
    %s518 = smov 192
    %v519 = vld [vmem:[%s517] ss:$16 sm:%s518]
    %vm520 = vcmask 1047558
    %v521 = vsel %vm520, %v519, %v516
    %522 = vrot.lane.b32.xlu0 %v521, 48
    %v523 = vpop.permute.xlu0 %522
    %vm524 = vcmask 523648
    %s525 = scalar_lea.vmem [#allocation0], 16
    %526 = vst.msk [vmem:[%s525] sm:$0xf] %vm524, %v523
    %s527 = scalar_lea.vmem [#allocation0], 20
    %528 = vst.msk [vmem:[%s527] sm:$0xf0] %vm524, %v523
    %s529 = scalar_lea.vmem [#allocation1], 2
    %s530 = smov 3
    %v531 = vld [vmem:[%s529] ss:$16 sm:%s530]
    %s532 = scalar_lea.vmem [#allocation1], 2
    %s533 = smov 12
    %v534 = vld [vmem:[%s532] ss:$16 sm:%s533]
    %vm535 = vcmask 1043458
    %v536 = vsel %vm535, %v534, %v531
    %s537 = scalar_lea.vmem [#allocation1], 4294967242
    %s538 = smov 48
    %v539 = vld [vmem:[%s537] ss:$16 sm:%s538]
    %vm540 = vcmask 1045508
    %v541 = vsel %vm540, %v539, %v536
    %s542 = scalar_lea.vmem [#allocation1], 4294967242
    %s543 = smov 192
    %v544 = vld [vmem:[%s542] ss:$16 sm:%s543]
    %vm545 = vcmask 1047558
    %v546 = vsel %vm545, %v544, %v541
    %547 = vrot.lane.b32.xlu0 %v546, 32
    %v548 = vpop.permute.xlu0 %547
    %vm549 = vcmask 392448
    %550 = vst.msk [vmem:[#allocation0] sm:$0xf] %vm549, %v548
    %s551 = scalar_lea.vmem [#allocation0], 4
    %552 = vst.msk [vmem:[%s551] sm:$0xf0] %vm549, %v548
    %s553 = scalar_lea.vmem [#allocation1], 66
    %s554 = smov 3
    %v555 = vld [vmem:[%s553] ss:$16 sm:%s554]
    %s556 = scalar_lea.vmem [#allocation1], 66
    %s557 = smov 12
    %v558 = vld [vmem:[%s556] ss:$16 sm:%s557]
    %vm559 = vcmask 1043458
    %v560 = vsel %vm559, %v558, %v555
    %s561 = scalar_lea.vmem [#allocation1], 10
    %s562 = smov 48
    %v563 = vld [vmem:[%s561] ss:$16 sm:%s562]
    %vm564 = vcmask 1045508
    %v565 = vsel %vm564, %v563, %v560
    %s566 = scalar_lea.vmem [#allocation1], 10
    %s567 = smov 192
    %v568 = vld [vmem:[%s566] ss:$16 sm:%s567]
    %vm569 = vcmask 1047558
    %v570 = vsel %vm569, %v568, %v565
    %571 = vrot.lane.b32.xlu0 %v570, 32
    %v572 = vpop.permute.xlu0 %571
    %vm573 = vcmask 392448
    %s574 = scalar_lea.vmem [#allocation0], 16
    %575 = vst.msk [vmem:[%s574] sm:$0xf] %vm573, %v572
    %s576 = scalar_lea.vmem [#allocation0], 20
    %577 = vst.msk [vmem:[%s576] sm:$0xf0] %vm573, %v572
    %s578 = scalar_lea.vmem [#allocation1], 1
    %s579 = smov 3
    %v580 = vld [vmem:[%s578] ss:$16 sm:%s579]
    %s581 = scalar_lea.vmem [#allocation1], 1
    %s582 = smov 12
    %v583 = vld [vmem:[%s581] ss:$16 sm:%s582]
    %vm584 = vcmask 1043458
    %v585 = vsel %vm584, %v583, %v580
    %s586 = scalar_lea.vmem [#allocation1], 4294967241
    %s587 = smov 48
    %v588 = vld [vmem:[%s586] ss:$16 sm:%s587]
    %vm589 = vcmask 1045508
    %v590 = vsel %vm589, %v588, %v585
    %s591 = scalar_lea.vmem [#allocation1], 4294967241
    %s592 = smov 192
    %v593 = vld [vmem:[%s591] ss:$16 sm:%s592]
    %vm594 = vcmask 1047558
    %v595 = vsel %vm594, %v593, %v590
    %596 = vrot.lane.b32.xlu0 %v595, 16
    %v597 = vpop.permute.xlu0 %596
    %vm598 = vcmask 261248
    %599 = vst.msk [vmem:[#allocation0] sm:$0xf] %vm598, %v597
    %s600 = scalar_lea.vmem [#allocation0], 4
    %601 = vst.msk [vmem:[%s600] sm:$0xf0] %vm598, %v597
    %s602 = scalar_lea.vmem [#allocation1], 65
    %s603 = smov 3
    %v604 = vld [vmem:[%s602] ss:$16 sm:%s603]
    %s605 = scalar_lea.vmem [#allocation1], 65
    %s606 = smov 12
    %v607 = vld [vmem:[%s605] ss:$16 sm:%s606]
    %vm608 = vcmask 1043458
    %v609 = vsel %vm608, %v607, %v604
    %s610 = scalar_lea.vmem [#allocation1], 9
    %s611 = smov 48
    %v612 = vld [vmem:[%s610] ss:$16 sm:%s611]
    %vm613 = vcmask 1045508
    %v614 = vsel %vm613, %v612, %v609
    %s615 = scalar_lea.vmem [#allocation1], 9
    %s616 = smov 192
    %v617 = vld [vmem:[%s615] ss:$16 sm:%s616]
    %vm618 = vcmask 1047558
    %v619 = vsel %vm618, %v617, %v614
    %620 = vrot.lane.b32.xlu0 %v619, 16
    %v621 = vpop.permute.xlu0 %620
    %vm622 = vcmask 261248
    %s623 = scalar_lea.vmem [#allocation0], 16
    %624 = vst.msk [vmem:[%s623] sm:$0xf] %vm622, %v621
    %s625 = scalar_lea.vmem [#allocation0], 20
    %626 = vst.msk [vmem:[%s625] sm:$0xf0] %vm622, %v621
    %s628 = smul.u32 2, 2
    %s629 = sshllo.u32 0, %s628
    %s630 = sshrl.u32 %s628, 1
    %v631 = vld [vmem:[#allocation0] sm:%s629]
    %v632 = vpack.c.bf16 0.0, %v631
    %s633 = sshllo.u32 0, %s630
    %634 = vst [vmem:[%s1] sm:%s633] %v632
    %s635 = scalar_lea.vmem [#allocation0], 8
    %v636 = vld [vmem:[%s635] sm:%s629]
    %v637 = vpack.c.bf16 0.0, %v636
    %s638 = sshllo.u32 0, %s630
    %s639 = scalar_lea.vmem %s1, 2
    %640 = vst [vmem:[%s639] sm:%s638] %v637
    %s641 = scalar_lea.vmem [#allocation0], 16
    %v642 = vld [vmem:[%s641] sm:%s629]
    %v643 = vpack.c.bf16 0.0, %v642
    %s644 = sshllo.u32 0, %s630
    %s645 = smul.addr 2, 2
    %s646 = scalar_lea.vmem %s1, %s645
    %647 = vst [vmem:[%s646] sm:%s644] %v643
    %s648 = scalar_lea.vmem [#allocation0], 24
    %v649 = vld [vmem:[%s648] sm:%s629]
    %v650 = vpack.c.bf16 0.0, %v649
    %s651 = sshllo.u32 0, %s630
    %s652 = smul.addr 2, 3
    %s653 = scalar_lea.vmem %s1, %s652
    %654 = vst [vmem:[%s653] sm:%s651] %v650

// kernel: a3c_dueling_forward.1
$region0: #{a3c_dueling_forward.1}
  #allocation0 [shape = 'u32[]', space=smem, size = 0x4, offset = 0x4, fixed_abs, tag = 'smem constant byte address 0x4 - core index']
  #allocation1 [shape = 'u32[144,128]{1,0:T(1,128)}', space=vmem, size = 0x12000, scoped, tag = 'internal scratch']
  %s0 = inlined_call_operand.vmem [shape: bf16[2,8,256], index: 0, kind: input, shape index: {}]
  %s1 = inlined_call_operand.vmem [shape: bf16[256,576], index: 1, kind: input, shape index: {}]
  %s2 = inlined_call_operand.vmem [shape: bf16[64,144], index: 2, kind: input, shape index: {}]
  %s3 = inlined_call_operand.vmem [shape: bf16[2,8,72], index: 3, kind: input, shape index: {}]
  %s4 = inlined_call_operand.vmem [shape: f32[2,8,1], index: 4, kind: input, shape index: {}]
  %s5 = inlined_call_operand.vmem [shape: bf16[2,16,72], index: 5, kind: input, shape index: {}]
  %s6 = inlined_call_operand.vmem [shape: f32[2,16,1], index: 6, kind: input, shape index: {}]
  %s7 = inlined_call_operand.vmem [shape: bf16[2,256,128], index: 7, kind: input, shape index: {}]
  %s8 = inlined_call_operand.vmem [shape: bf16[2,32,128], index: 8, kind: input, shape index: {}]
  %s9 = inlined_call_operand.vmem [shape: f32[2,1,128], index: 9, kind: input, shape index: {}]
  %s10 = inlined_call_operand.vmem [shape: bf16[2,32,4], index: 10, kind: input, shape index: {}]
  %s11 = inlined_call_operand.vmem [shape: f32[2,1,4], index: 11, kind: input, shape index: {}]
  %s12 = inlined_call_operand.vmem [shape: bf16[2,32,1], index: 12, kind: input, shape index: {}]
  %s13 = inlined_call_operand.vmem [shape: f32[2,1,1], index: 13, kind: input, shape index: {}]
  %s14 = inlined_call_operand.vmem [shape: f32[2,1,32], index: 14, kind: input, shape index: {}]
  %s15 = inlined_call_operand.vmem [shape: f32[2,1,32], index: 15, kind: input, shape index: {}]
  %s16 = inlined_call_operand.vmem [shape: f32[2,1,128], index: 16, kind: output, shape index: {}]
  %s17 = sld [smem:[#allocation0]]
  $region74: #{a3c_dueling_forward.1} parent=0
    _
  %s19 = ssub.s32 1, %s17
  %s20 = scalar_select 0, %s19, %s17
  // Predicated region
  $region2: #{a3c_dueling_forward.1} parent=0 // pred_check
    _
  $region3: #{a3c_dueling_forward.1} parent=0 // pred_check_branch
    %22 = sbr.rel (0) target = $region5
  $region4: #{a3c_dueling_forward.1} parent=0 // pred_region
    _
  $region5: #{a3c_dueling_forward.1} parent=0 // pred_fallthru
    _
  // Predicated region
  $region6: #{a3c_dueling_forward.1} parent=0 // pred_check
    _
  $region7: #{a3c_dueling_forward.1} parent=0 // pred_check_branch
    %24 = sbr.rel (0) target = $region9
  $region8: #{a3c_dueling_forward.1} parent=0 // pred_region
    _
  $region9: #{a3c_dueling_forward.1} parent=0 // pred_fallthru
    _
  // Predicated region
  $region10: #{a3c_dueling_forward.1} parent=0 // pred_check
    _
  $region11: #{a3c_dueling_forward.1} parent=0 // pred_check_branch
    %26 = sbr.rel (0) target = $region13
  $region12: #{a3c_dueling_forward.1} parent=0 // pred_region
    _
  $region13: #{a3c_dueling_forward.1} parent=0 // pred_fallthru
    _
  // Predicated region
  $region14: #{a3c_dueling_forward.1} parent=0 // pred_check
    _
  $region15: #{a3c_dueling_forward.1} parent=0 // pred_check_branch
    %28 = sbr.rel (0) target = $region17
  $region16: #{a3c_dueling_forward.1} parent=0 // pred_region
    _
  $region17: #{a3c_dueling_forward.1} parent=0 // pred_fallthru
    _
  // Predicated region
  $region18: #{a3c_dueling_forward.1} parent=0 // pred_check
    _
  $region19: #{a3c_dueling_forward.1} parent=0 // pred_check_branch
    %30 = sbr.rel (0) target = $region21
  $region20: #{a3c_dueling_forward.1} parent=0 // pred_region
    _
  $region21: #{a3c_dueling_forward.1} parent=0 // pred_fallthru
    _
  // Predicated region
  $region22: #{a3c_dueling_forward.1} parent=0 // pred_check
    _
  $region23: #{a3c_dueling_forward.1} parent=0 // pred_check_branch
    %32 = sbr.rel (0) target = $region25
  $region24: #{a3c_dueling_forward.1} parent=0 // pred_region
    _
  $region25: #{a3c_dueling_forward.1} parent=0 // pred_fallthru
    _
  // Predicated region
  $region26: #{a3c_dueling_forward.1} parent=0 // pred_check
    _
  $region27: #{a3c_dueling_forward.1} parent=0 // pred_check_branch
    %34 = sbr.rel (0) target = $region29
  $region28: #{a3c_dueling_forward.1} parent=0 // pred_region
    _
  $region29: #{a3c_dueling_forward.1} parent=0 // pred_fallthru
    _
  // Predicated region
  $region30: #{a3c_dueling_forward.1} parent=0 // pred_check
    _
  $region31: #{a3c_dueling_forward.1} parent=0 // pred_check_branch
    %36 = sbr.rel (0) target = $region33
  $region32: #{a3c_dueling_forward.1} parent=0 // pred_region
    _
  $region33: #{a3c_dueling_forward.1} parent=0 // pred_fallthru
    _
  // Predicated region
  $region34: #{a3c_dueling_forward.1} parent=0 // pred_check
    _
  $region35: #{a3c_dueling_forward.1} parent=0 // pred_check_branch
    %38 = sbr.rel (0) target = $region37
  $region36: #{a3c_dueling_forward.1} parent=0 // pred_region
    _
  $region37: #{a3c_dueling_forward.1} parent=0 // pred_fallthru
    _
  // Predicated region
  $region38: #{a3c_dueling_forward.1} parent=0 // pred_check
    _
  $region39: #{a3c_dueling_forward.1} parent=0 // pred_check_branch
    %40 = sbr.rel (0) target = $region41
  $region40: #{a3c_dueling_forward.1} parent=0 // pred_region
    _
  $region41: #{a3c_dueling_forward.1} parent=0 // pred_fallthru
    _
  // Predicated region
  $region42: #{a3c_dueling_forward.1} parent=0 // pred_check
    _
  $region43: #{a3c_dueling_forward.1} parent=0 // pred_check_branch
    %42 = sbr.rel (0) target = $region45
  $region44: #{a3c_dueling_forward.1} parent=0 // pred_region
    _
  $region45: #{a3c_dueling_forward.1} parent=0 // pred_fallthru
    _
  // Predicated region
  $region46: #{a3c_dueling_forward.1} parent=0 // pred_check
    _
  $region47: #{a3c_dueling_forward.1} parent=0 // pred_check_branch
    %44 = sbr.rel (0) target = $region49
  $region48: #{a3c_dueling_forward.1} parent=0 // pred_region
    _
  $region49: #{a3c_dueling_forward.1} parent=0 // pred_fallthru
    _
  // Predicated region
  $region50: #{a3c_dueling_forward.1} parent=0 // pred_check
    _
  $region51: #{a3c_dueling_forward.1} parent=0 // pred_check_branch
    %46 = sbr.rel (0) target = $region53
  $region52: #{a3c_dueling_forward.1} parent=0 // pred_region
    _
  $region53: #{a3c_dueling_forward.1} parent=0 // pred_fallthru
    _
  // Predicated region
  $region54: #{a3c_dueling_forward.1} parent=0 // pred_check
    _
  $region55: #{a3c_dueling_forward.1} parent=0 // pred_check_branch
    %48 = sbr.rel (0) target = $region57
  $region56: #{a3c_dueling_forward.1} parent=0 // pred_region
    _
  $region57: #{a3c_dueling_forward.1} parent=0 // pred_fallthru
    _
  // Predicated region
  $region58: #{a3c_dueling_forward.1} parent=0 // pred_check
    _
  $region59: #{a3c_dueling_forward.1} parent=0 // pred_check_branch
    %50 = sbr.rel (0) target = $region61
  $region60: #{a3c_dueling_forward.1} parent=0 // pred_region
    _
  $region61: #{a3c_dueling_forward.1} parent=0 // pred_fallthru
    _
  // Predicated region
  $region62: #{a3c_dueling_forward.1} parent=0 // pred_check
    _
  $region63: #{a3c_dueling_forward.1} parent=0 // pred_check_branch
    %52 = sbr.rel (0) target = $region65
  $region64: #{a3c_dueling_forward.1} parent=0 // pred_region
    _
  $region65: #{a3c_dueling_forward.1} parent=0 // pred_fallthru
    _
  %v54 = vld [vmem:[%s1] sm:$0xff]
  %v55 = vld [vmem:[%s1 + $0x8] sm:$0xff]
  %v56 = vld [vmem:[%s1 + $0x10] sm:$0xf]
  %v57 = vld [vmem:[%s1 + $0x14] sm:$0xff]
  %v58 = vld [vmem:[%s1 + $0x1c] sm:$0xff]
  %v59 = vld [vmem:[%s1 + $0x24] sm:$0xf]
  %v60 = vld [vmem:[%s1 + $0x28] sm:$0xff]
  %v61 = vld [vmem:[%s1 + $0x30] sm:$0xff]
  %v62 = vld [vmem:[%s1 + $0x38] sm:$0xf]
  %v63 = vld [vmem:[%s1 + $0x3c] sm:$0xff]
  %v64 = vld [vmem:[%s1 + $0x44] sm:$0xff]
  %v65 = vld [vmem:[%s1 + $0x4c] sm:$0xf]
  %v66 = vld [vmem:[%s1 + $0x50] sm:$0xff]
  %v67 = vld [vmem:[%s1 + $0x58] sm:$0xff]
  %v68 = vld [vmem:[%s1 + $0x60] sm:$0xf]
  %v69 = vld [vmem:[%s1 + $0x64] sm:$0xff]
  %v70 = vld [vmem:[%s1 + $0x6c] sm:$0xff]
  %v71 = vld [vmem:[%s1 + $0x74] sm:$0xf]
  %v72 = vld [vmem:[%s1 + $0x78] sm:$0xff]
  %v73 = vld [vmem:[%s1 + $0x80] sm:$0xff]
  %v74 = vld [vmem:[%s1 + $0x88] sm:$0xf]
  %v75 = vld [vmem:[%s1 + $0x8c] sm:$0xff]
  %v76 = vld [vmem:[%s1 + $0x94] sm:$0xff]
  %v77 = vld [vmem:[%s1 + $0x9c] sm:$0xf]
  %v78 = vld [vmem:[%s1 + $0xa0] sm:$0xff]
  %v79 = vld [vmem:[%s1 + $0xa8] sm:$0xff]
  %v80 = vld [vmem:[%s1 + $0xb0] sm:$0xf]
  %v81 = vld [vmem:[%s1 + $0xb4] sm:$0xff]
  %v82 = vld [vmem:[%s1 + $0xbc] sm:$0xff]
  %v83 = vld [vmem:[%s1 + $0xc4] sm:$0xf]
  %v84 = vld [vmem:[%s1 + $0xc8] sm:$0xff]
  %v85 = vld [vmem:[%s1 + $0xd0] sm:$0xff]
  %v86 = vld [vmem:[%s1 + $0xd8] sm:$0xf]
  %v87 = vld [vmem:[%s1 + $0xdc] sm:$0xff]
  %v88 = vld [vmem:[%s1 + $0xe4] sm:$0xff]
  %v89 = vld [vmem:[%s1 + $0xec] sm:$0xf]
  %v90 = vld [vmem:[%s1 + $0xf0] sm:$0xff]
  %v91 = vld [vmem:[%s1 + $0xf8] sm:$0xff]
  %v92 = vld [vmem:[%s1 + $0x100] sm:$0xf]
  %v93 = vld [vmem:[%s1 + $0x104] sm:$0xff]
  %v94 = vld [vmem:[%s1 + $0x10c] sm:$0xff]
  %v95 = vld [vmem:[%s1 + $0x114] sm:$0xf]
  %v96 = vld [vmem:[%s1 + $0x118] sm:$0xff]
  %v97 = vld [vmem:[%s1 + $0x120] sm:$0xff]
  %v98 = vld [vmem:[%s1 + $0x128] sm:$0xf]
  %v99 = vld [vmem:[%s1 + $0x12c] sm:$0xff]
  %v100 = vld [vmem:[%s1 + $0x134] sm:$0xff]
  %v101 = vld [vmem:[%s1 + $0x13c] sm:$0xf]
  %v102 = vld [vmem:[%s1 + $0x140] sm:$0xff]
  %v103 = vld [vmem:[%s1 + $0x148] sm:$0xff]
  %v104 = vld [vmem:[%s1 + $0x150] sm:$0xf]
  %v105 = vld [vmem:[%s1 + $0x154] sm:$0xff]
  %v106 = vld [vmem:[%s1 + $0x15c] sm:$0xff]
  %v107 = vld [vmem:[%s1 + $0x164] sm:$0xf]
  %v108 = vld [vmem:[%s1 + $0x168] sm:$0xff]
  %v109 = vld [vmem:[%s1 + $0x170] sm:$0xff]
  %v110 = vld [vmem:[%s1 + $0x178] sm:$0xf]
  %v111 = vld [vmem:[%s1 + $0x17c] sm:$0xff]
  %v112 = vld [vmem:[%s1 + $0x184] sm:$0xff]
  %v113 = vld [vmem:[%s1 + $0x18c] sm:$0xf]
  %v114 = vld [vmem:[%s1 + $0x190] sm:$0xff]
  %v115 = vld [vmem:[%s1 + $0x198] sm:$0xff]
  %v116 = vld [vmem:[%s1 + $0x1a0] sm:$0xf]
  %v117 = vld [vmem:[%s1 + $0x1a4] sm:$0xff]
  %v118 = vld [vmem:[%s1 + $0x1ac] sm:$0xff]
  %v119 = vld [vmem:[%s1 + $0x1b4] sm:$0xf]
  %v120 = vld [vmem:[%s1 + $0x1b8] sm:$0xff]
  %v121 = vld [vmem:[%s1 + $0x1c0] sm:$0xff]
  %v122 = vld [vmem:[%s1 + $0x1c8] sm:$0xf]
  %v123 = vld [vmem:[%s1 + $0x1cc] sm:$0xff]
  %v124 = vld [vmem:[%s1 + $0x1d4] sm:$0xff]
  %v125 = vld [vmem:[%s1 + $0x1dc] sm:$0xf]
  %v126 = vld [vmem:[%s1 + $0x1e0] sm:$0xff]
  %v127 = vld [vmem:[%s1 + $0x1e8] sm:$0xff]
  %v128 = vld [vmem:[%s1 + $0x1f0] sm:$0xf]
  %v129 = vld [vmem:[%s1 + $0x1f4] sm:$0xff]
  %v130 = vld [vmem:[%s1 + $0x1fc] sm:$0xff]
  %v131 = vld [vmem:[%s1 + $0x204] sm:$0xf]
  %v132 = vld [vmem:[%s1 + $0x208] sm:$0xff]
  %v133 = vld [vmem:[%s1 + $0x210] sm:$0xff]
  %v134 = vld [vmem:[%s1 + $0x218] sm:$0xf]
  %v135 = vld [vmem:[%s1 + $0x21c] sm:$0xff]
  %v136 = vld [vmem:[%s1 + $0x224] sm:$0xff]
  %v137 = vld [vmem:[%s1 + $0x22c] sm:$0xf]
  %v138 = vld [vmem:[%s1 + $0x230] sm:$0xff]
  %v139 = vld [vmem:[%s1 + $0x238] sm:$0xff]
  %v140 = vld [vmem:[%s1 + $0x240] sm:$0xf]
  %v141 = vld [vmem:[%s1 + $0x244] sm:$0xff]
  %v142 = vld [vmem:[%s1 + $0x24c] sm:$0xff]
  %v143 = vld [vmem:[%s1 + $0x254] sm:$0xf]
  %v144 = vld [vmem:[%s1 + $0x258] sm:$0xff]
  %v145 = vld [vmem:[%s1 + $0x260] sm:$0xff]
  %v146 = vld [vmem:[%s1 + $0x268] sm:$0xf]
  %v147 = vld [vmem:[%s1 + $0x26c] sm:$0xff]
  %v148 = vld [vmem:[%s1 + $0x274] sm:$0xff]
  %v149 = vld [vmem:[%s1 + $0x27c] sm:$0xf]
  %v150 = vld [vmem:[%s2] sm:$0xff]
  %v151 = vld [vmem:[%s2 + $0x8] sm:$0xff]
  %v152 = vld [vmem:[%s2 + $0x10] sm:$0xff]
  %v153 = vld [vmem:[%s2 + $0x18] sm:$0xff]
  %v154 = vld [vmem:[%s2 + $0x20] sm:$0xff]
  %v155 = vld [vmem:[%s2 + $0x28] sm:$0xff]
  %v156 = vld [vmem:[%s2 + $0x30] sm:$0xff]
  %v157 = vld [vmem:[%s2 + $0x38] sm:$0xff]
  %v158 = vld [vmem:[%s0] sm:$0xff]
  %v160 = vunpack.c.l.b16 %v158
  %v161 = vunpack.c.h.b16 %v158
  %v162 = vpack.c.b16 %v160, %v160
  %v163 = vpack.c.b16 %v161, %v161
  %v262 = vunpack.c.l.b16 %v54
  %v263 = vunpack.c.h.b16 %v54
  %v264 = vunpack.c.l.b16 %v55
  %v265 = vunpack.c.h.b16 %v55
  %v266 = vunpack.c.l.b16 %v56
  %v267 = vunpack.c.l.b16 %v57
  %v268 = vunpack.c.h.b16 %v57
  %v269 = vunpack.c.l.b16 %v58
  %v270 = vunpack.c.h.b16 %v58
  %v271 = vunpack.c.l.b16 %v59
  %v272 = vunpack.c.l.b16 %v60
  %v273 = vunpack.c.h.b16 %v60
  %v274 = vunpack.c.l.b16 %v61
  %v275 = vunpack.c.h.b16 %v61
  %v276 = vunpack.c.l.b16 %v62
  %v277 = vunpack.c.l.b16 %v63
  %v278 = vunpack.c.h.b16 %v63
  %v279 = vunpack.c.l.b16 %v64
  %v280 = vunpack.c.h.b16 %v64
  %v281 = vunpack.c.l.b16 %v65
  %v282 = vunpack.c.l.b16 %v66
  %v283 = vunpack.c.h.b16 %v66
  %v284 = vunpack.c.l.b16 %v67
  %v285 = vunpack.c.h.b16 %v67
  %v286 = vunpack.c.l.b16 %v68
  %v287 = vunpack.c.l.b16 %v69
  %v288 = vunpack.c.h.b16 %v69
  %v289 = vunpack.c.l.b16 %v70
  %v290 = vunpack.c.h.b16 %v70
  %v291 = vunpack.c.l.b16 %v71
  %v292 = vunpack.c.l.b16 %v72
  %v293 = vunpack.c.h.b16 %v72
  %v294 = vunpack.c.l.b16 %v73
  %v295 = vunpack.c.h.b16 %v73
  %v296 = vunpack.c.l.b16 %v74
  %v297 = vunpack.c.l.b16 %v75
  %v298 = vunpack.c.h.b16 %v75
  %v299 = vunpack.c.l.b16 %v76
  %v300 = vunpack.c.h.b16 %v76
  %v301 = vunpack.c.l.b16 %v77
  %v302 = vunpack.c.l.b16 %v78
  %v303 = vunpack.c.h.b16 %v78
  %v304 = vunpack.c.l.b16 %v79
  %v305 = vunpack.c.h.b16 %v79
  %v306 = vunpack.c.l.b16 %v80
  %v307 = vunpack.c.l.b16 %v81
  %v308 = vunpack.c.h.b16 %v81
  %v309 = vunpack.c.l.b16 %v82
  %v310 = vunpack.c.h.b16 %v82
  %v311 = vunpack.c.l.b16 %v83
  %v312 = vunpack.c.l.b16 %v84
  %v313 = vunpack.c.h.b16 %v84
  %v314 = vunpack.c.l.b16 %v85
  %v315 = vunpack.c.h.b16 %v85
  %v316 = vunpack.c.l.b16 %v86
  %v317 = vunpack.c.l.b16 %v87
  %v318 = vunpack.c.h.b16 %v87
  %v319 = vunpack.c.l.b16 %v88
  %v320 = vunpack.c.h.b16 %v88
  %v321 = vunpack.c.l.b16 %v89
  %v322 = vunpack.c.l.b16 %v90
  %v323 = vunpack.c.h.b16 %v90
  %v324 = vunpack.c.l.b16 %v91
  %v325 = vunpack.c.h.b16 %v91
  %v326 = vunpack.c.l.b16 %v92
  %v327 = vunpack.c.l.b16 %v93
  %v328 = vunpack.c.h.b16 %v93
  %v329 = vunpack.c.l.b16 %v94
  %v330 = vunpack.c.h.b16 %v94
  %v331 = vunpack.c.l.b16 %v95
  %v332 = vunpack.c.l.b16 %v96
  %v333 = vunpack.c.h.b16 %v96
  %v334 = vunpack.c.l.b16 %v97
  %v335 = vunpack.c.h.b16 %v97
  %v336 = vunpack.c.l.b16 %v98
  %v337 = vunpack.c.l.b16 %v99
  %v338 = vunpack.c.h.b16 %v99
  %v339 = vunpack.c.l.b16 %v100
  %v340 = vunpack.c.h.b16 %v100
  %v341 = vunpack.c.l.b16 %v101
  %v342 = vunpack.c.l.b16 %v102
  %v343 = vunpack.c.h.b16 %v102
  %v344 = vunpack.c.l.b16 %v103
  %v345 = vunpack.c.h.b16 %v103
  %v346 = vunpack.c.l.b16 %v104
  %v347 = vunpack.c.l.b16 %v105
  %v348 = vunpack.c.h.b16 %v105
  %v349 = vunpack.c.l.b16 %v106
  %v350 = vunpack.c.h.b16 %v106
  %v351 = vunpack.c.l.b16 %v107
  %v352 = vunpack.c.l.b16 %v108
  %v353 = vunpack.c.h.b16 %v108
  %v354 = vunpack.c.l.b16 %v109
  %v355 = vunpack.c.h.b16 %v109
  %v356 = vunpack.c.l.b16 %v110
  %v357 = vunpack.c.l.b16 %v111
  %v358 = vunpack.c.h.b16 %v111
  %v359 = vunpack.c.l.b16 %v112
  %v360 = vunpack.c.h.b16 %v112
  %v361 = vunpack.c.l.b16 %v113
  %v362 = vunpack.c.l.b16 %v114
  %v363 = vunpack.c.h.b16 %v114
  %v364 = vunpack.c.l.b16 %v115
  %v365 = vunpack.c.h.b16 %v115
  %v366 = vunpack.c.l.b16 %v116
  %v367 = vunpack.c.l.b16 %v117
  %v368 = vunpack.c.h.b16 %v117
  %v369 = vunpack.c.l.b16 %v118
  %v370 = vunpack.c.h.b16 %v118
  %v371 = vunpack.c.l.b16 %v119
  %v372 = vunpack.c.l.b16 %v120
  %v373 = vunpack.c.h.b16 %v120
  %v374 = vunpack.c.l.b16 %v121
  %v375 = vunpack.c.h.b16 %v121
  %v376 = vunpack.c.l.b16 %v122
  %v377 = vunpack.c.l.b16 %v123
  %v378 = vunpack.c.h.b16 %v123
  %v379 = vunpack.c.l.b16 %v124
  %v380 = vunpack.c.h.b16 %v124
  %v381 = vunpack.c.l.b16 %v125
  %v382 = vunpack.c.l.b16 %v126
  %v383 = vunpack.c.h.b16 %v126
  %v384 = vunpack.c.l.b16 %v127
  %v385 = vunpack.c.h.b16 %v127
  %v386 = vunpack.c.l.b16 %v128
  %v387 = vunpack.c.l.b16 %v129
  %v388 = vunpack.c.h.b16 %v129
  %v389 = vunpack.c.l.b16 %v130
  %v390 = vunpack.c.h.b16 %v130
  %v391 = vunpack.c.l.b16 %v131
  %v392 = vunpack.c.l.b16 %v132
  %v393 = vunpack.c.h.b16 %v132
  %v394 = vunpack.c.l.b16 %v133
  %v395 = vunpack.c.h.b16 %v133
  %v396 = vunpack.c.l.b16 %v134
  %v397 = vunpack.c.l.b16 %v135
  %v398 = vunpack.c.h.b16 %v135
  %v399 = vunpack.c.l.b16 %v136
  %v400 = vunpack.c.h.b16 %v136
  %v401 = vunpack.c.l.b16 %v137
  %v402 = vunpack.c.l.b16 %v138
  %v403 = vunpack.c.h.b16 %v138
  %v404 = vunpack.c.l.b16 %v139
  %v405 = vunpack.c.h.b16 %v139
  %v406 = vunpack.c.l.b16 %v140
  %v407 = vunpack.c.l.b16 %v141
  %v408 = vunpack.c.h.b16 %v141
  %v409 = vunpack.c.l.b16 %v142
  %v410 = vunpack.c.h.b16 %v142
  %v411 = vunpack.c.l.b16 %v143
  %v412 = vunpack.c.l.b16 %v144
  %v413 = vunpack.c.h.b16 %v144
  %v414 = vunpack.c.l.b16 %v145
  %v415 = vunpack.c.h.b16 %v145
  %v416 = vunpack.c.l.b16 %v146
  %v417 = vunpack.c.l.b16 %v147
  %v418 = vunpack.c.h.b16 %v147
  %v419 = vunpack.c.l.b16 %v148
  %v420 = vunpack.c.h.b16 %v148
  %v421 = vunpack.c.l.b16 %v149
  %v422 = vpack.c.b16 %v267, %v262
  %v423 = vpack.c.b16 %v268, %v263
  %v424 = vpack.c.b16 %v269, %v264
  %v425 = vpack.c.b16 %v270, %v265
  %v426 = vpack.c.b16 %v271, %v266
  %v427 = vpack.c.b16 %v277, %v272
  %v428 = vpack.c.b16 %v278, %v273
  %v429 = vpack.c.b16 %v279, %v274
  %v430 = vpack.c.b16 %v280, %v275
  %v431 = vpack.c.b16 %v281, %v276
  %v432 = vpack.c.b16 %v287, %v282
  %v433 = vpack.c.b16 %v288, %v283
  %v434 = vpack.c.b16 %v289, %v284
  %v435 = vpack.c.b16 %v290, %v285
  %v436 = vpack.c.b16 %v291, %v286
  %v437 = vpack.c.b16 %v297, %v292
  %v438 = vpack.c.b16 %v298, %v293
  %v439 = vpack.c.b16 %v299, %v294
  %v440 = vpack.c.b16 %v300, %v295
  %v441 = vpack.c.b16 %v301, %v296
  %v442 = vpack.c.b16 %v307, %v302
  %v443 = vpack.c.b16 %v308, %v303
  %v444 = vpack.c.b16 %v309, %v304
  %v445 = vpack.c.b16 %v310, %v305
  %v446 = vpack.c.b16 %v311, %v306
  %v447 = vpack.c.b16 %v317, %v312
  %v448 = vpack.c.b16 %v318, %v313
  %v449 = vpack.c.b16 %v319, %v314
  %v450 = vpack.c.b16 %v320, %v315
  %v451 = vpack.c.b16 %v321, %v316
  %v452 = vpack.c.b16 %v327, %v322
  %v453 = vpack.c.b16 %v328, %v323
  %v454 = vpack.c.b16 %v329, %v324
  %v455 = vpack.c.b16 %v330, %v325
  %v456 = vpack.c.b16 %v331, %v326
  %v457 = vpack.c.b16 %v337, %v332
  %v458 = vpack.c.b16 %v338, %v333
  %v459 = vpack.c.b16 %v339, %v334
  %v460 = vpack.c.b16 %v340, %v335
  %v461 = vpack.c.b16 %v341, %v336
  %v462 = vpack.c.b16 %v347, %v342
  %v463 = vpack.c.b16 %v348, %v343
  %v464 = vpack.c.b16 %v349, %v344
  %v465 = vpack.c.b16 %v350, %v345
  %v466 = vpack.c.b16 %v351, %v346
  %v467 = vpack.c.b16 %v357, %v352
  %v468 = vpack.c.b16 %v358, %v353
  %v469 = vpack.c.b16 %v359, %v354
  %v470 = vpack.c.b16 %v360, %v355
  %v471 = vpack.c.b16 %v361, %v356
  %v472 = vpack.c.b16 %v367, %v362
  %v473 = vpack.c.b16 %v368, %v363
  %v474 = vpack.c.b16 %v369, %v364
  %v475 = vpack.c.b16 %v370, %v365
  %v476 = vpack.c.b16 %v371, %v366
  %v477 = vpack.c.b16 %v377, %v372
  %v478 = vpack.c.b16 %v378, %v373
  %v479 = vpack.c.b16 %v379, %v374
  %v480 = vpack.c.b16 %v380, %v375
  %v481 = vpack.c.b16 %v381, %v376
  %v482 = vpack.c.b16 %v387, %v382
  %v483 = vpack.c.b16 %v388, %v383
  %v484 = vpack.c.b16 %v389, %v384
  %v485 = vpack.c.b16 %v390, %v385
  %v486 = vpack.c.b16 %v391, %v386
  %v487 = vpack.c.b16 %v397, %v392
  %v488 = vpack.c.b16 %v398, %v393
  %v489 = vpack.c.b16 %v399, %v394
  %v490 = vpack.c.b16 %v400, %v395
  %v491 = vpack.c.b16 %v401, %v396
  %v492 = vpack.c.b16 %v407, %v402
  %v493 = vpack.c.b16 %v408, %v403
  %v494 = vpack.c.b16 %v409, %v404
  %v495 = vpack.c.b16 %v410, %v405
  %v496 = vpack.c.b16 %v411, %v406
  %v497 = vpack.c.b16 %v417, %v412
  %v498 = vpack.c.b16 %v418, %v413
  %v499 = vpack.c.b16 %v419, %v414
  %v500 = vpack.c.b16 %v420, %v415
  %v501 = vpack.c.b16 %v421, %v416
  %582 = vmatprep.subr.bf16.mxu0 %v423
  %583 = vmatpush1.bf16.msra.mxu0 %v422
  %584 = vmatprep.subr.bf16.mxu0 %v428
  %585 = vmatpush1.bf16.msra.mxu0 %v427
  %586 = vmatprep.subr.bf16.mxu0 %v433
  %587 = vmatpush1.bf16.msra.mxu0 %v432
  %588 = vmatprep.subr.bf16.mxu0 %v438
  %589 = vmatpush1.bf16.msra.mxu0 %v437
  %590 = vmatprep.subr.bf16.mxu0 %v443
  %591 = vmatpush1.bf16.msra.mxu0 %v442
  %592 = vmatprep.subr.bf16.mxu0 %v448
  %593 = vmatpush1.bf16.msra.mxu0 %v447
  %594 = vmatprep.subr.bf16.mxu0 %v453
  %595 = vmatpush1.bf16.msra.mxu0 %v452
  %596 = vmatprep.subr.bf16.mxu0 %v458
  %597 = vmatpush1.bf16.msra.mxu0 %v457
  %598 = vmatprep.subr.bf16.mxu0 %v463
  %599 = vmatpush1.bf16.msra.mxu0 %v462
  %600 = vmatprep.subr.bf16.mxu0 %v468
  %601 = vmatpush1.bf16.msra.mxu0 %v467
  %602 = vmatprep.subr.bf16.mxu0 %v473
  %603 = vmatpush1.bf16.msra.mxu0 %v472
  %604 = vmatprep.subr.bf16.mxu0 %v478
  %605 = vmatpush1.bf16.msra.mxu0 %v477
  %606 = vmatprep.subr.bf16.mxu0 %v483
  %607 = vmatpush1.bf16.msra.mxu0 %v482
  %608 = vmatprep.subr.bf16.mxu0 %v488
  %609 = vmatpush1.bf16.msra.mxu0 %v487
  %610 = vmatprep.subr.bf16.mxu0 %v493
  %611 = vmatpush1.bf16.msra.mxu0 %v492
  %612 = vmatprep.subr.bf16.mxu0 %v498
  %613 = vmatpush1.bf16.msra.mxu0 %v497
  %614 = vmatprep.mubr.bf16.mxu0 %v163
  %615 = vmatmul.mubr.bf16.gmra.mrb[0].mxu0 %v162
  %v616 = vpop.f32.mrb[0].mxu0
  %v617 = vadd.f32 0.0, %v616
  %v618 = vpop.f32.mrb[0].mxu0
  %v619 = vadd.f32 0.0, %v618
  %v620 = vpop.f32.mrb[0].mxu0
  %v621 = vpop.f32.mrb[0].mxu0
  %622 = vdwg.mxu0
  %623 = vmatprep.subr.bf16.mxu0 %v425
  %624 = vmatpush1.bf16.msra.mxu0 %v424
  %625 = vmatprep.subr.bf16.mxu0 %v430
  %626 = vmatpush1.bf16.msra.mxu0 %v429
  %627 = vmatprep.subr.bf16.mxu0 %v435
  %628 = vmatpush1.bf16.msra.mxu0 %v434
  %629 = vmatprep.subr.bf16.mxu0 %v440
  %630 = vmatpush1.bf16.msra.mxu0 %v439
  %631 = vmatprep.subr.bf16.mxu0 %v445
  %632 = vmatpush1.bf16.msra.mxu0 %v444
  %633 = vmatprep.subr.bf16.mxu0 %v450
  %634 = vmatpush1.bf16.msra.mxu0 %v449
  %635 = vmatprep.subr.bf16.mxu0 %v455
  %636 = vmatpush1.bf16.msra.mxu0 %v454
  %637 = vmatprep.subr.bf16.mxu0 %v460
  %638 = vmatpush1.bf16.msra.mxu0 %v459
  %639 = vmatprep.subr.bf16.mxu0 %v465
  %640 = vmatpush1.bf16.msra.mxu0 %v464
  %641 = vmatprep.subr.bf16.mxu0 %v470
  %642 = vmatpush1.bf16.msra.mxu0 %v469
  %643 = vmatprep.subr.bf16.mxu0 %v475
  %644 = vmatpush1.bf16.msra.mxu0 %v474
  %645 = vmatprep.subr.bf16.mxu0 %v480
  %646 = vmatpush1.bf16.msra.mxu0 %v479
  %647 = vmatprep.subr.bf16.mxu0 %v485
  %648 = vmatpush1.bf16.msra.mxu0 %v484
  %649 = vmatprep.subr.bf16.mxu0 %v490
  %650 = vmatpush1.bf16.msra.mxu0 %v489
  %651 = vmatprep.subr.bf16.mxu0 %v495
  %652 = vmatpush1.bf16.msra.mxu0 %v494
  %653 = vmatprep.subr.bf16.mxu0 %v500
  %654 = vmatpush1.bf16.msra.mxu0 %v499
  %655 = vmatprep.mubr.bf16.mxu0 %v163
  %656 = vmatmul.mubr.bf16.gmra.mrb[0].mxu0 %v162
  %v657 = vpop.f32.mrb[0].mxu0
  %v658 = vadd.f32 0.0, %v657
  %v659 = vpop.f32.mrb[0].mxu0
  %v660 = vadd.f32 0.0, %v659
  %v661 = vpop.f32.mrb[0].mxu0
  %v662 = vpop.f32.mrb[0].mxu0
  %663 = vdwg.mxu0
  %664 = vmatprep.subr.bf16.mxu0 0
  %665 = vmatpush1.bf16.msra.mxu0 %v426
  %666 = vmatprep.subr.bf16.mxu0 0
  %667 = vmatpush1.bf16.msra.mxu0 %v431
  %668 = vmatprep.subr.bf16.mxu0 0
  %669 = vmatpush1.bf16.msra.mxu0 %v436
  %670 = vmatprep.subr.bf16.mxu0 0
  %671 = vmatpush1.bf16.msra.mxu0 %v441
  %672 = vmatprep.subr.bf16.mxu0 0
  %673 = vmatpush1.bf16.msra.mxu0 %v446
  %674 = vmatprep.subr.bf16.mxu0 0
  %675 = vmatpush1.bf16.msra.mxu0 %v451
  %676 = vmatprep.subr.bf16.mxu0 0
  %677 = vmatpush1.bf16.msra.mxu0 %v456
  %678 = vmatprep.subr.bf16.mxu0 0
  %679 = vmatpush1.bf16.msra.mxu0 %v461
  %680 = vmatprep.subr.bf16.mxu0 0
  %681 = vmatpush1.bf16.msra.mxu0 %v466
  %682 = vmatprep.subr.bf16.mxu0 0
  %683 = vmatpush1.bf16.msra.mxu0 %v471
  %684 = vmatprep.subr.bf16.mxu0 0
  %685 = vmatpush1.bf16.msra.mxu0 %v476
  %686 = vmatprep.subr.bf16.mxu0 0
  %687 = vmatpush1.bf16.msra.mxu0 %v481
  %688 = vmatprep.subr.bf16.mxu0 0
  %689 = vmatpush1.bf16.msra.mxu0 %v486
  %690 = vmatprep.subr.bf16.mxu0 0
  %691 = vmatpush1.bf16.msra.mxu0 %v491
  %692 = vmatprep.subr.bf16.mxu0 0
  %693 = vmatpush1.bf16.msra.mxu0 %v496
  %694 = vmatprep.subr.bf16.mxu0 0
  %695 = vmatpush1.bf16.msra.mxu0 %v501
  %696 = vmatprep.mubr.bf16.mxu0 %v163
  %697 = vmatmul.mubr.bf16.gmra.mrb[0].mxu0 %v162
  %v698 = vpop.f32.mrb[0].mxu0
  %v699 = vadd.f32 0.0, %v698
  %v700 = vpop.f32.mrb[0].mxu0
  %v701 = vpop.f32.mrb[0].mxu0
  %v702 = vpop.f32.mrb[0].mxu0
  %703 = vdwg.mxu0
  %705 = vrot.lane.b32.xlu0 %v617, 64
  %v706 = vpop.permute.xlu0 %705
  %709 = vrot.lane.b32.xlu0 %v619, 64
  %v710 = vpop.permute.xlu0 %709
  %713 = vrot.lane.b32.xlu0 %v658, 64
  %v714 = vpop.permute.xlu0 %713
  %717 = vrot.lane.b32.xlu0 %v660, 64
  %v718 = vpop.permute.xlu0 %717
  %v720 = vpack.c.bf16 %v706, %v617
  %v721 = vpack.c.bf16 %v710, %v619
  %v722 = vpack.c.bf16 %v714, %v658
  %v723 = vpack.c.bf16 %v718, %v660
  %v724 = vpack.c.bf16 %v699, %v699
  %v725 = vld [vmem:[%s3] sm:$0xf]
  %v726 = vld [vmem:[%s4] sm:$0xff]
  %728 = vset.pattern.permute.xlu0 0
  %729 = vperm.xlu0 %728, %v726
  %v730 = vpop.permute.xlu0 %729
  %vm732 = vcmask 588800
  %v734 = vsel %vm732, %v725, 0
  %vm736 = vcmask 1043456
  %v738 = vsel %vm736, %v724, 0
  %740 = vmatprep.subr.bf16.mxu0 0
  %741 = vmatpush1.bf16.msra.mxu0 %v720
  %742 = vmatprep.subr.bf16.mxu0 0
  %743 = vmatpush1.bf16.msra.mxu0 %v721
  %744 = vmatprep.subr.bf16.mxu0 0
  %745 = vmatpush1.bf16.msra.mxu0 %v722
  %746 = vmatprep.subr.bf16.mxu0 0
  %747 = vmatpush1.bf16.msra.mxu0 %v723
  %748 = vmatprep.subr.bf16.mxu0 0
  %749 = vmatpush1.bf16.msra.mxu0 %v738
  %750 = vmatprep.subr.bf16.mxu0 0
  %751 = vmatpush1.bf16.msra.mxu0 0
  %752 = vmatprep.subr.bf16.mxu0 0
  %753 = vmatpush1.bf16.msra.mxu0 0
  %754 = vmatprep.subr.bf16.mxu0 0
  %755 = vmatpush1.bf16.msra.mxu0 0
  %756 = vmatprep.subr.bf16.mxu0 0
  %757 = vmatpush1.bf16.msra.mxu0 0
  %758 = vmatprep.subr.bf16.mxu0 0
  %759 = vmatpush1.bf16.msra.mxu0 0
  %760 = vmatprep.subr.bf16.mxu0 0
  %761 = vmatpush1.bf16.msra.mxu0 0
  %762 = vmatprep.subr.bf16.mxu0 0
  %763 = vmatpush1.bf16.msra.mxu0 0
  %764 = vmatprep.subr.bf16.mxu0 0
  %765 = vmatpush1.bf16.msra.mxu0 0
  %766 = vmatprep.subr.bf16.mxu0 0
  %767 = vmatpush1.bf16.msra.mxu0 0
  %768 = vmatprep.subr.bf16.mxu0 0
  %769 = vmatpush1.bf16.msra.mxu0 0
  %770 = vmatprep.subr.bf16.mxu0 0
  %771 = vmatpush1.bf16.msra.mxu0 0
  %772 = vmatprep.mubr.bf16.mxu0 0
  %773 = vmatmul.mubr.bf16.gmra.mrb[0].mxu0 %v734
  %v774 = vpop.f32.mrb[0].mxu0
  %v775 = vadd.f32 %v730, %v774
  %v776 = vpop.f32.mrb[0].mxu0
  %v777 = vpop.f32.mrb[0].mxu0
  %v778 = vpop.f32.mrb[0].mxu0
  %779 = vdwg.mxu0
  %v780 = vmax.f32 %v775, 0.0
  %v781 = vpack.c.bf16 %v780, %v780
  %v790 = vunpack.c.l.b16 %v150
  %v791 = vunpack.c.h.b16 %v150
  %v792 = vunpack.c.l.b16 %v151
  %v793 = vunpack.c.h.b16 %v151
  %v794 = vunpack.c.l.b16 %v152
  %v795 = vunpack.c.h.b16 %v152
  %v796 = vunpack.c.l.b16 %v153
  %v797 = vunpack.c.h.b16 %v153
  %v798 = vunpack.c.l.b16 %v154
  %v799 = vunpack.c.h.b16 %v154
  %v800 = vunpack.c.l.b16 %v155
  %v801 = vunpack.c.h.b16 %v155
  %v802 = vunpack.c.l.b16 %v156
  %v803 = vunpack.c.h.b16 %v156
  %v804 = vunpack.c.l.b16 %v157
  %v805 = vunpack.c.h.b16 %v157
  %v806 = vpack.c.b16 %v792, %v790
  %v807 = vpack.c.b16 %v793, %v791
  %v808 = vpack.c.b16 %v796, %v794
  %v809 = vpack.c.b16 %v797, %v795
  %v810 = vpack.c.b16 %v800, %v798
  %v811 = vpack.c.b16 %v801, %v799
  %v812 = vpack.c.b16 %v804, %v802
  %v813 = vpack.c.b16 %v805, %v803
  %vm822 = vcmask 523264
  %v824 = vsel %vm822, %v781, 0
  %826 = vmatprep.subr.bf16.mxu0 %v807
  %827 = vmatpush1.bf16.msra.mxu0 %v806
  %828 = vmatprep.subr.bf16.mxu0 %v809
  %829 = vmatpush1.bf16.msra.mxu0 %v808
  %830 = vmatprep.subr.bf16.mxu0 %v811
  %831 = vmatpush1.bf16.msra.mxu0 %v810
  %832 = vmatprep.subr.bf16.mxu0 %v813
  %833 = vmatpush1.bf16.msra.mxu0 %v812
  %834 = vmatprep.subr.bf16.mxu0 0
  %835 = vmatpush1.bf16.msra.mxu0 0
  %836 = vmatprep.subr.bf16.mxu0 0
  %837 = vmatpush1.bf16.msra.mxu0 0
  %838 = vmatprep.subr.bf16.mxu0 0
  %839 = vmatpush1.bf16.msra.mxu0 0
  %840 = vmatprep.subr.bf16.mxu0 0
  %841 = vmatpush1.bf16.msra.mxu0 0
  %842 = vmatprep.subr.bf16.mxu0 0
  %843 = vmatpush1.bf16.msra.mxu0 0
  %844 = vmatprep.subr.bf16.mxu0 0
  %845 = vmatpush1.bf16.msra.mxu0 0
  %846 = vmatprep.subr.bf16.mxu0 0
  %847 = vmatpush1.bf16.msra.mxu0 0
  %848 = vmatprep.subr.bf16.mxu0 0
  %849 = vmatpush1.bf16.msra.mxu0 0
  %850 = vmatprep.subr.bf16.mxu0 0
  %851 = vmatpush1.bf16.msra.mxu0 0
  %852 = vmatprep.subr.bf16.mxu0 0
  %853 = vmatpush1.bf16.msra.mxu0 0
  %854 = vmatprep.subr.bf16.mxu0 0
  %855 = vmatpush1.bf16.msra.mxu0 0
  %856 = vmatprep.subr.bf16.mxu0 0
  %857 = vmatpush1.bf16.msra.mxu0 0
  %858 = vmatprep.mubr.bf16.mxu0 0
  %859 = vmatmul.mubr.bf16.gmra.mrb[0].mxu0 %v824
  %v860 = vpop.f32.mrb[0].mxu0
  %v861 = vadd.f32 0.0, %v860
  %v862 = vpop.f32.mrb[0].mxu0
  %v863 = vadd.f32 0.0, %v862
  %v864 = vpop.f32.mrb[0].mxu0
  %v865 = vpop.f32.mrb[0].mxu0
  %866 = vdwg.mxu0
  %868 = vrot.lane.b32.xlu0 %v861, 112
  %v869 = vpop.permute.xlu0 %868
  %871 = vrot.lane.b32.xlu0 %v861, 96
  %v872 = vpop.permute.xlu0 %871
  %874 = vrot.lane.b32.xlu0 %v861, 80
  %v875 = vpop.permute.xlu0 %874
  %877 = vrot.lane.b32.xlu0 %v861, 64
  %v878 = vpop.permute.xlu0 %877
  %880 = vrot.lane.b32.xlu0 %v861, 48
  %v881 = vpop.permute.xlu0 %880
  %883 = vrot.lane.b32.xlu0 %v861, 32
  %v884 = vpop.permute.xlu0 %883
  %886 = vrot.lane.b32.xlu0 %v861, 16
  %v887 = vpop.permute.xlu0 %886
  %v889 = vpack.c.bf16 %v869, %v861
  %v890 = vpack.c.bf16 %v875, %v872
  %v891 = vpack.c.bf16 %v881, %v878
  %v892 = vpack.c.bf16 %v887, %v884
  %v893 = vpack.c.bf16 %v863, %v863
  %v894 = vld [vmem:[%s5] sm:$0xf]
  %v895 = vld [vmem:[%s5 + $0x4] sm:$0xf]
  %v896 = vld [vmem:[%s6] sm:$0xff]
  %v897 = vld [vmem:[%s6 + $0x8] sm:$0xff]
  %899 = vset.pattern.permute.xlu0 0
  %900 = vperm.xlu0 %899, %v896
  %v901 = vpop.permute.xlu0 %900
  %904 = vset.pattern.permute.xlu0 0
  %905 = vperm.xlu0 %904, %v897
  %v906 = vpop.permute.xlu0 %905
  %v910 = vunpack.c.l.b16 %v894
  %v911 = vunpack.c.l.b16 %v895
  %v912 = vpack.c.b16 %v911, %v910
  %v914 = vsel %vm732, %v912, 0
  %v917 = vsel %vm736, %v893, 0
  %919 = vmatprep.subr.bf16.mxu0 0
  %920 = vmatpush1.bf16.msra.mxu0 %v889
  %921 = vmatprep.subr.bf16.mxu0 0
  %922 = vmatpush1.bf16.msra.mxu0 %v890
  %923 = vmatprep.subr.bf16.mxu0 0
  %924 = vmatpush1.bf16.msra.mxu0 %v891
  %925 = vmatprep.subr.bf16.mxu0 0
  %926 = vmatpush1.bf16.msra.mxu0 %v892
  %927 = vmatprep.subr.bf16.mxu0 0
  %928 = vmatpush1.bf16.msra.mxu0 %v917
  %929 = vmatprep.subr.bf16.mxu0 0
  %930 = vmatpush1.bf16.msra.mxu0 0
  %931 = vmatprep.subr.bf16.mxu0 0
  %932 = vmatpush1.bf16.msra.mxu0 0
  %933 = vmatprep.subr.bf16.mxu0 0
  %934 = vmatpush1.bf16.msra.mxu0 0
  %935 = vmatprep.subr.bf16.mxu0 0
  %936 = vmatpush1.bf16.msra.mxu0 0
  %937 = vmatprep.subr.bf16.mxu0 0
  %938 = vmatpush1.bf16.msra.mxu0 0
  %939 = vmatprep.subr.bf16.mxu0 0
  %940 = vmatpush1.bf16.msra.mxu0 0
  %941 = vmatprep.subr.bf16.mxu0 0
  %942 = vmatpush1.bf16.msra.mxu0 0
  %943 = vmatprep.subr.bf16.mxu0 0
  %944 = vmatpush1.bf16.msra.mxu0 0
  %945 = vmatprep.subr.bf16.mxu0 0
  %946 = vmatpush1.bf16.msra.mxu0 0
  %947 = vmatprep.subr.bf16.mxu0 0
  %948 = vmatpush1.bf16.msra.mxu0 0
  %949 = vmatprep.subr.bf16.mxu0 0
  %950 = vmatpush1.bf16.msra.mxu0 0
  %951 = vmatprep.mubr.bf16.mxu0 0
  %952 = vmatmul.mubr.bf16.gmra.mrb[0].mxu0 %v914
  %v953 = vpop.f32.mrb[0].mxu0
  %v954 = vadd.f32 %v901, %v953
  %v955 = vpop.f32.mrb[0].mxu0
  %v956 = vpop.f32.mrb[0].mxu0
  %v957 = vadd.f32 %v906, %v956
  %v958 = vpop.f32.mrb[0].mxu0
  %959 = vdwg.mxu0
  %v960 = vmax.f32 %v954, 0.0
  %v961 = vmax.f32 %v957, 0.0
  %v963 = vrot.slane %v960, 1
  %964 = vrot.lane.b32.xlu0 %v963, 16
  %v965 = vpop.permute.xlu0 %964
  %v967 = vrot.slane %v960, 2
  %968 = vrot.lane.b32.xlu0 %v967, 32
  %v969 = vpop.permute.xlu0 %968
  %v971 = vrot.slane %v960, 3
  %972 = vrot.lane.b32.xlu0 %v971, 48
  %v973 = vpop.permute.xlu0 %972
  %v975 = vrot.slane %v960, 4
  %976 = vrot.lane.b32.xlu0 %v975, 64
  %v977 = vpop.permute.xlu0 %976
  %v979 = vrot.slane %v960, 5
  %980 = vrot.lane.b32.xlu0 %v979, 80
  %v981 = vpop.permute.xlu0 %980
  %v983 = vrot.slane %v960, 6
  %984 = vrot.lane.b32.xlu0 %v983, 96
  %v985 = vpop.permute.xlu0 %984
  %v987 = vrot.slane %v960, 7
  %988 = vrot.lane.b32.xlu0 %v987, 112
  %v989 = vpop.permute.xlu0 %988
  %v992 = vrot.slane %v961, 1
  %993 = vrot.lane.b32.xlu0 %v992, 16
  %v994 = vpop.permute.xlu0 %993
  %v996 = vrot.slane %v961, 2
  %997 = vrot.lane.b32.xlu0 %v996, 32
  %v998 = vpop.permute.xlu0 %997
  %v1000 = vrot.slane %v961, 3
  %1001 = vrot.lane.b32.xlu0 %v1000, 48
  %v1002 = vpop.permute.xlu0 %1001
  %v1004 = vrot.slane %v961, 4
  %1005 = vrot.lane.b32.xlu0 %v1004, 64
  %v1006 = vpop.permute.xlu0 %1005
  %v1008 = vrot.slane %v961, 5
  %1009 = vrot.lane.b32.xlu0 %v1008, 80
  %v1010 = vpop.permute.xlu0 %1009
  %v1012 = vrot.slane %v961, 6
  %1013 = vrot.lane.b32.xlu0 %v1012, 96
  %v1014 = vpop.permute.xlu0 %1013
  %v1016 = vrot.slane %v961, 7
  %1017 = vrot.lane.b32.xlu0 %v1016, 112
  %v1018 = vpop.permute.xlu0 %1017
  %vm1020 = vcmask 130048
  %v1021 = vsel %vm1020, %v960, %v965
  %vm1022 = vcmask 261120
  %v1023 = vsel %vm1022, %v1021, %v969
  %vm1024 = vcmask 392192
  %v1025 = vsel %vm1024, %v1023, %v973
  %v1026 = vsel %vm822, %v1025, %v977
  %vm1027 = vcmask 654336
  %v1028 = vsel %vm1027, %v1026, %v981
  %vm1029 = vcmask 785408
  %v1030 = vsel %vm1029, %v1028, %v985
  %vm1031 = vcmask 916480
  %v1032 = vsel %vm1031, %v1030, %v989
  %v1033 = vsel %vm1020, %v961, %v994
  %v1034 = vsel %vm1022, %v1033, %v998
  %v1035 = vsel %vm1024, %v1034, %v1002
  %v1036 = vsel %vm822, %v1035, %v1006
  %v1037 = vsel %vm1027, %v1036, %v1010
  %v1038 = vsel %vm1029, %v1037, %v1014
  %v1039 = vsel %vm1031, %v1038, %v1018
  %v1040 = vpack.c.bf16 %v1032, %v1032
  %v1041 = vpack.c.bf16 %v1039, %v1039
  %v1042 = vld [vmem:[%s7] sm:$0xf]
  %v1043 = vld [vmem:[%s7 + $0x4] sm:$0xf]
  %v1044 = vld [vmem:[%s7 + $0x8] sm:$0xf]
  %v1045 = vld [vmem:[%s7 + $0xc] sm:$0xf]
  %v1046 = vld [vmem:[%s7 + $0x10] sm:$0xf]
  %v1047 = vld [vmem:[%s7 + $0x14] sm:$0xf]
  %v1048 = vld [vmem:[%s7 + $0x18] sm:$0xf]
  %v1049 = vld [vmem:[%s7 + $0x1c] sm:$0xf]
  %v1050 = vld [vmem:[%s7 + $0x20] sm:$0xf]
  %v1051 = vld [vmem:[%s7 + $0x24] sm:$0xf]
  %v1052 = vld [vmem:[%s7 + $0x28] sm:$0xf]
  %v1053 = vld [vmem:[%s7 + $0x2c] sm:$0xf]
  %v1054 = vld [vmem:[%s7 + $0x30] sm:$0xf]
  %v1055 = vld [vmem:[%s7 + $0x34] sm:$0xf]
  %v1056 = vld [vmem:[%s7 + $0x38] sm:$0xf]
  %v1057 = vld [vmem:[%s7 + $0x3c] sm:$0xf]
  %v1058 = vld [vmem:[%s7 + $0x40] sm:$0xf]
  %v1059 = vld [vmem:[%s7 + $0x44] sm:$0xf]
  %v1060 = vld [vmem:[%s7 + $0x48] sm:$0xf]
  %v1061 = vld [vmem:[%s7 + $0x4c] sm:$0xf]
  %v1062 = vld [vmem:[%s7 + $0x50] sm:$0xf]
  %v1063 = vld [vmem:[%s7 + $0x54] sm:$0xf]
  %v1064 = vld [vmem:[%s7 + $0x58] sm:$0xf]
  %v1065 = vld [vmem:[%s7 + $0x5c] sm:$0xf]
  %v1066 = vld [vmem:[%s7 + $0x60] sm:$0xf]
  %v1067 = vld [vmem:[%s7 + $0x64] sm:$0xf]
  %v1068 = vld [vmem:[%s7 + $0x68] sm:$0xf]
  %v1069 = vld [vmem:[%s7 + $0x6c] sm:$0xf]
  %v1070 = vld [vmem:[%s7 + $0x70] sm:$0xf]
  %v1071 = vld [vmem:[%s7 + $0x74] sm:$0xf]
  %v1072 = vld [vmem:[%s7 + $0x78] sm:$0xf]
  %v1073 = vld [vmem:[%s7 + $0x7c] sm:$0xf]
  %v1074 = vld [vmem:[%s14] sm:$0x1]
  %v1075 = vpack.c.bf16 %v1074, %v1074
  %v1076 = vld [vmem:[%s8] sm:$0xf]
  %v1077 = vld [vmem:[%s8 + $0x4] sm:$0xf]
  %v1078 = vld [vmem:[%s8 + $0x8] sm:$0xf]
  %v1079 = vld [vmem:[%s8 + $0xc] sm:$0xf]
  %v1084 = vunpack.c.l.b16 %v1076
  %v1085 = vunpack.c.l.b16 %v1077
  %v1086 = vunpack.c.l.b16 %v1078
  %v1087 = vunpack.c.l.b16 %v1079
  %v1088 = vpack.c.b16 %v1085, %v1084
  %v1089 = vpack.c.b16 %v1087, %v1086
  %v1093 = vsel %vm1022, %v1075, 0
  %1095 = vmatprep.subr.bf16.mxu0 0
  %1096 = vmatpush1.bf16.msra.mxu0 %v1088
  %1097 = vmatprep.subr.bf16.mxu0 0
  %1098 = vmatpush1.bf16.msra.mxu0 %v1089
  %1099 = vmatprep.subr.bf16.mxu0 0
  %1100 = vmatpush1.bf16.msra.mxu0 0
  %1101 = vmatprep.subr.bf16.mxu0 0
  %1102 = vmatpush1.bf16.msra.mxu0 0
  %1103 = vmatprep.subr.bf16.mxu0 0
  %1104 = vmatpush1.bf16.msra.mxu0 0
  %1105 = vmatprep.subr.bf16.mxu0 0
  %1106 = vmatpush1.bf16.msra.mxu0 0
  %1107 = vmatprep.subr.bf16.mxu0 0
  %1108 = vmatpush1.bf16.msra.mxu0 0
  %1109 = vmatprep.subr.bf16.mxu0 0
  %1110 = vmatpush1.bf16.msra.mxu0 0
  %1111 = vmatprep.subr.bf16.mxu0 0
  %1112 = vmatpush1.bf16.msra.mxu0 0
  %1113 = vmatprep.subr.bf16.mxu0 0
  %1114 = vmatpush1.bf16.msra.mxu0 0
  %1115 = vmatprep.subr.bf16.mxu0 0
  %1116 = vmatpush1.bf16.msra.mxu0 0
  %1117 = vmatprep.subr.bf16.mxu0 0
  %1118 = vmatpush1.bf16.msra.mxu0 0
  %1119 = vmatprep.subr.bf16.mxu0 0
  %1120 = vmatpush1.bf16.msra.mxu0 0
  %1121 = vmatprep.subr.bf16.mxu0 0
  %1122 = vmatpush1.bf16.msra.mxu0 0
  %1123 = vmatprep.subr.bf16.mxu0 0
  %1124 = vmatpush1.bf16.msra.mxu0 0
  %1125 = vmatprep.subr.bf16.mxu0 0
  %1126 = vmatpush1.bf16.msra.mxu0 0
  %1127 = vmatprep.mubr.bf16.mxu0 0
  %1128 = vmatmul.mubr.bf16.gmra.mrb[0].mxu0 %v1093
  %v1129 = vpop.f32.mrb[0].mxu0
  %v1130 = vadd.f32 0.0, %v1129
  %v1131 = vpop.f32.mrb[0].mxu0
  %v1132 = vpop.f32.mrb[0].mxu0
  %v1133 = vpop.f32.mrb[0].mxu0
  %1134 = vdwg.mxu0
  %v1167 = vunpack.c.l.b16 %v1042
  %v1168 = vunpack.c.l.b16 %v1043
  %v1169 = vunpack.c.l.b16 %v1044
  %v1170 = vunpack.c.l.b16 %v1045
  %v1171 = vunpack.c.l.b16 %v1046
  %v1172 = vunpack.c.l.b16 %v1047
  %v1173 = vunpack.c.l.b16 %v1048
  %v1174 = vunpack.c.l.b16 %v1049
  %v1175 = vunpack.c.l.b16 %v1050
  %v1176 = vunpack.c.l.b16 %v1051
  %v1177 = vunpack.c.l.b16 %v1052
  %v1178 = vunpack.c.l.b16 %v1053
  %v1179 = vunpack.c.l.b16 %v1054
  %v1180 = vunpack.c.l.b16 %v1055
  %v1181 = vunpack.c.l.b16 %v1056
  %v1182 = vunpack.c.l.b16 %v1057
  %v1183 = vunpack.c.l.b16 %v1058
  %v1184 = vunpack.c.l.b16 %v1059
  %v1185 = vunpack.c.l.b16 %v1060
  %v1186 = vunpack.c.l.b16 %v1061
  %v1187 = vunpack.c.l.b16 %v1062
  %v1188 = vunpack.c.l.b16 %v1063
  %v1189 = vunpack.c.l.b16 %v1064
  %v1190 = vunpack.c.l.b16 %v1065
  %v1191 = vunpack.c.l.b16 %v1066
  %v1192 = vunpack.c.l.b16 %v1067
  %v1193 = vunpack.c.l.b16 %v1068
  %v1194 = vunpack.c.l.b16 %v1069
  %v1195 = vunpack.c.l.b16 %v1070
  %v1196 = vunpack.c.l.b16 %v1071
  %v1197 = vunpack.c.l.b16 %v1072
  %v1198 = vunpack.c.l.b16 %v1073
  %v1199 = vpack.c.b16 %v1168, %v1167
  %v1200 = vpack.c.b16 %v1170, %v1169
  %v1201 = vpack.c.b16 %v1172, %v1171
  %v1202 = vpack.c.b16 %v1174, %v1173
  %v1203 = vpack.c.b16 %v1176, %v1175
  %v1204 = vpack.c.b16 %v1178, %v1177
  %v1205 = vpack.c.b16 %v1180, %v1179
  %v1206 = vpack.c.b16 %v1182, %v1181
  %v1207 = vpack.c.b16 %v1184, %v1183
  %v1208 = vpack.c.b16 %v1186, %v1185
  %v1209 = vpack.c.b16 %v1188, %v1187
  %v1210 = vpack.c.b16 %v1190, %v1189
  %v1211 = vpack.c.b16 %v1192, %v1191
  %v1212 = vpack.c.b16 %v1194, %v1193
  %v1213 = vpack.c.b16 %v1196, %v1195
  %v1214 = vpack.c.b16 %v1198, %v1197
  %1231 = vmatprep.subr.bf16.mxu0 0
  %1232 = vmatpush1.bf16.msra.mxu0 %v1199
  %1233 = vmatprep.subr.bf16.mxu0 0
  %1234 = vmatpush1.bf16.msra.mxu0 %v1200
  %1235 = vmatprep.subr.bf16.mxu0 0
  %1236 = vmatpush1.bf16.msra.mxu0 %v1201
  %1237 = vmatprep.subr.bf16.mxu0 0
  %1238 = vmatpush1.bf16.msra.mxu0 %v1202
  %1239 = vmatprep.subr.bf16.mxu0 0
  %1240 = vmatpush1.bf16.msra.mxu0 %v1203
  %1241 = vmatprep.subr.bf16.mxu0 0
  %1242 = vmatpush1.bf16.msra.mxu0 %v1204
  %1243 = vmatprep.subr.bf16.mxu0 0
  %1244 = vmatpush1.bf16.msra.mxu0 %v1205
  %1245 = vmatprep.subr.bf16.mxu0 0
  %1246 = vmatpush1.bf16.msra.mxu0 %v1206
  %1247 = vmatprep.subr.bf16.mxu0 0
  %1248 = vmatpush1.bf16.msra.mxu0 %v1207
  %1249 = vmatprep.subr.bf16.mxu0 0
  %1250 = vmatpush1.bf16.msra.mxu0 %v1208
  %1251 = vmatprep.subr.bf16.mxu0 0
  %1252 = vmatpush1.bf16.msra.mxu0 %v1209
  %1253 = vmatprep.subr.bf16.mxu0 0
  %1254 = vmatpush1.bf16.msra.mxu0 %v1210
  %1255 = vmatprep.subr.bf16.mxu0 0
  %1256 = vmatpush1.bf16.msra.mxu0 %v1211
  %1257 = vmatprep.subr.bf16.mxu0 0
  %1258 = vmatpush1.bf16.msra.mxu0 %v1212
  %1259 = vmatprep.subr.bf16.mxu0 0
  %1260 = vmatpush1.bf16.msra.mxu0 %v1213
  %1261 = vmatprep.subr.bf16.mxu0 0
  %1262 = vmatpush1.bf16.msra.mxu0 %v1214
  %1263 = vmatprep.mubr.bf16.mxu0 %v1041
  %1264 = vmatmul.mubr.bf16.gmra.mrb[0].mxu0 %v1040
  %v1265 = vpop.f32.mrb[0].mxu0
  %v1266 = vadd.f32 %v1130, %v1265
  %v1267 = vpop.f32.mrb[0].mxu0
  %v1268 = vpop.f32.mrb[0].mxu0
  %v1269 = vpop.f32.mrb[0].mxu0
  %1270 = vdwg.mxu0
  %v1271 = vld [vmem:[%s9] sm:$0x1]
  %v1272 = vadd.f32 %v1266, %v1271
  %v1273 = vxor.u32 %v1272, 2147483648
  %v1274 = vmul.f32 %v1273, 1.442695
  %v1275 = vpow.pop %v1274
  %v1276 = vadd.f32 %v1275, 1.0
  %v1277 = vrcp.pop %v1276
  %v1278 = vmul.f32 1.0, %v1277
  %v1279 = vtanh.pop %v1272
  %v1280 = vld [vmem:[%s15] sm:$0x1]
  %v1282 = vlaneseq
  %v1283 = vshrl.u32 %v1282, 7
  %v1284 = vsub.s32 0, %v1283
  %v1285 = vrot.slane %v1280, %v1284
  %1286 = vrot.lane.b32.xlu0 %v1285, 32
  %v1287 = vpop.permute.xlu0 %1286
  %v1289 = vmul.f32 %v1278, %v1287
  %1291 = vrot.lane.b32.xlu0 %v1279, 64
  %v1292 = vpop.permute.xlu0 %1291
  %v1294 = vmul.f32 %v1278, %v1292
  %1296 = vrot.lane.b32.xlu0 %v1294, 32
  %v1297 = vpop.permute.xlu0 %1296
  %v1299 = vadd.f32 %v1289, %v1297
  %v1300 = vtanh.pop %v1299
  %1302 = vrot.lane.b32.xlu0 %v1300, 64
  %v1303 = vpop.permute.xlu0 %1302
  %v1305 = vmul.f32 %v1278, %v1303
  %v1306 = vpack.c.bf16 %v1305, %v1305
  %v1307 = vld [vmem:[%s12] sm:$0xf]
  %v1308 = vld [vmem:[%s12 + $0x4] sm:$0xf]
  %v1309 = vld [vmem:[%s12 + $0x8] sm:$0xf]
  %v1310 = vld [vmem:[%s12 + $0xc] sm:$0xf]
  %v1311 = vld [vmem:[%s13] sm:$0x1]
  %1313 = vrot.lane.b32.xlu0 %v1306, 32
  %v1314 = vpop.permute.xlu0 %1313
  %v1319 = vunpack.c.l.b16 %v1307
  %v1320 = vunpack.c.l.b16 %v1308
  %v1321 = vunpack.c.l.b16 %v1309
  %v1322 = vunpack.c.l.b16 %v1310
  %v1323 = vpack.c.b16 %v1320, %v1319
  %v1324 = vpack.c.b16 %v1322, %v1321
  %v1328 = vsel %vm1022, %v1314, 0
  %1330 = vmatprep.subr.bf16.mxu0 0
  %1331 = vmatpush1.bf16.msra.mxu0 %v1323
  %1332 = vmatprep.subr.bf16.mxu0 0
  %1333 = vmatpush1.bf16.msra.mxu0 %v1324
  %1334 = vmatprep.subr.bf16.mxu0 0
  %1335 = vmatpush1.bf16.msra.mxu0 0
  %1336 = vmatprep.subr.bf16.mxu0 0
  %1337 = vmatpush1.bf16.msra.mxu0 0
  %1338 = vmatprep.subr.bf16.mxu0 0
  %1339 = vmatpush1.bf16.msra.mxu0 0
  %1340 = vmatprep.subr.bf16.mxu0 0
  %1341 = vmatpush1.bf16.msra.mxu0 0
  %1342 = vmatprep.subr.bf16.mxu0 0
  %1343 = vmatpush1.bf16.msra.mxu0 0
  %1344 = vmatprep.subr.bf16.mxu0 0
  %1345 = vmatpush1.bf16.msra.mxu0 0
  %1346 = vmatprep.subr.bf16.mxu0 0
  %1347 = vmatpush1.bf16.msra.mxu0 0
  %1348 = vmatprep.subr.bf16.mxu0 0
  %1349 = vmatpush1.bf16.msra.mxu0 0
  %1350 = vmatprep.subr.bf16.mxu0 0
  %1351 = vmatpush1.bf16.msra.mxu0 0
  %1352 = vmatprep.subr.bf16.mxu0 0
  %1353 = vmatpush1.bf16.msra.mxu0 0
  %1354 = vmatprep.subr.bf16.mxu0 0
  %1355 = vmatpush1.bf16.msra.mxu0 0
  %1356 = vmatprep.subr.bf16.mxu0 0
  %1357 = vmatpush1.bf16.msra.mxu0 0
  %1358 = vmatprep.subr.bf16.mxu0 0
  %1359 = vmatpush1.bf16.msra.mxu0 0
  %1360 = vmatprep.subr.bf16.mxu0 0
  %1361 = vmatpush1.bf16.msra.mxu0 0
  %1362 = vmatprep.mubr.bf16.mxu0 0
  %1363 = vmatmul.mubr.bf16.gmra.mrb[0].mxu0 %v1328
  %v1364 = vpop.f32.mrb[0].mxu0
  %v1365 = vadd.f32 %v1311, %v1364
  %v1366 = vpop.f32.mrb[0].mxu0
  %v1367 = vpop.f32.mrb[0].mxu0
  %v1368 = vpop.f32.mrb[0].mxu0
  %1369 = vdwg.mxu0
  %v1370 = vld [vmem:[%s10] sm:$0xf]
  %v1371 = vld [vmem:[%s10 + $0x4] sm:$0xf]
  %v1372 = vld [vmem:[%s10 + $0x8] sm:$0xf]
  %v1373 = vld [vmem:[%s10 + $0xc] sm:$0xf]
  %v1374 = vld [vmem:[%s11] sm:$0x1]
  %v1379 = vunpack.c.l.b16 %v1370
  %v1380 = vunpack.c.l.b16 %v1371
  %v1381 = vunpack.c.l.b16 %v1372
  %v1382 = vunpack.c.l.b16 %v1373
  %v1383 = vpack.c.b16 %v1380, %v1379
  %v1384 = vpack.c.b16 %v1382, %v1381
  %1387 = vmatprep.subr.bf16.mxu0 0
  %1388 = vmatpush1.bf16.msra.mxu0 %v1383
  %1389 = vmatprep.subr.bf16.mxu0 0
  %1390 = vmatpush1.bf16.msra.mxu0 %v1384
  %1391 = vmatprep.subr.bf16.mxu0 0
  %1392 = vmatpush1.bf16.msra.mxu0 0
  %1393 = vmatprep.subr.bf16.mxu0 0
  %1394 = vmatpush1.bf16.msra.mxu0 0
  %1395 = vmatprep.subr.bf16.mxu0 0
  %1396 = vmatpush1.bf16.msra.mxu0 0
  %1397 = vmatprep.subr.bf16.mxu0 0
  %1398 = vmatpush1.bf16.msra.mxu0 0
  %1399 = vmatprep.subr.bf16.mxu0 0
  %1400 = vmatpush1.bf16.msra.mxu0 0
  %1401 = vmatprep.subr.bf16.mxu0 0
  %1402 = vmatpush1.bf16.msra.mxu0 0
  %1403 = vmatprep.subr.bf16.mxu0 0
  %1404 = vmatpush1.bf16.msra.mxu0 0
  %1405 = vmatprep.subr.bf16.mxu0 0
  %1406 = vmatpush1.bf16.msra.mxu0 0
  %1407 = vmatprep.subr.bf16.mxu0 0
  %1408 = vmatpush1.bf16.msra.mxu0 0
  %1409 = vmatprep.subr.bf16.mxu0 0
  %1410 = vmatpush1.bf16.msra.mxu0 0
  %1411 = vmatprep.subr.bf16.mxu0 0
  %1412 = vmatpush1.bf16.msra.mxu0 0
  %1413 = vmatprep.subr.bf16.mxu0 0
  %1414 = vmatpush1.bf16.msra.mxu0 0
  %1415 = vmatprep.subr.bf16.mxu0 0
  %1416 = vmatpush1.bf16.msra.mxu0 0
  %1417 = vmatprep.subr.bf16.mxu0 0
  %1418 = vmatpush1.bf16.msra.mxu0 0
  %1419 = vmatprep.mubr.bf16.mxu0 0
  %1420 = vmatmul.mubr.bf16.gmra.mrb[0].mxu0 %v1328
  %v1421 = vpop.f32.mrb[0].mxu0
  %v1422 = vadd.f32 %v1374, %v1421
  %v1423 = vpop.f32.mrb[0].mxu0
  %v1424 = vpop.f32.mrb[0].mxu0
  %v1425 = vpop.f32.mrb[0].mxu0
  %1426 = vdwg.mxu0
  %vm1427 = vcmask 24576
  %v1428 = vsel %vm1427, %v1422, -inf
  %1429 = vmax.xlane.f32.xlu0 %v1428
  %v1430 = vpop.xlane.xlu0 %1429
  %v1431 = vsub.f32 %v1422, %v1430
  %v1432 = vmul.f32 %v1431, 1.442695
  %v1433 = vpow.pop %v1432
  %v1434 = vsel %vm1427, %v1433, 0.0
  %1435 = vadd.xlane.f32.xlu0 %v1434
  %v1436 = vpop.xlane.xlu0 %1435
  %v1437 = vlog2.pop %v1436
  %v1438 = vmul.f32 %v1437, 0.6931472
  %v1439 = vsub.f32 %v1431, %v1438
  %v1440 = vrcp.pop %v1436
  %v1441 = vmul.f32 %v1433, %v1440
  %v1442 = vmul.f32 %v1439, %v1441
  %v1443 = vsel %vm1427, %v1442, 0.0
  %1444 = vadd.xlane.f32.xlu0 %v1443
  %v1445 = vpop.xlane.xlu0 %1444
  %v1446 = vsub.f32 0.0, %v1445
  %1448 = vrot.lane.b32.xlu0 %v1305, 32
  %v1449 = vpop.permute.xlu0 %1448
  %1452 = vrot.lane.b32.xlu0 %v1365, 64
  %v1453 = vpop.permute.xlu0 %1452
  %1456 = vrot.lane.b32.xlu0 %v1441, 65
  %v1457 = vpop.permute.xlu0 %1456
  %1460 = vrot.lane.b32.xlu0 %v1439, 69
  %v1461 = vpop.permute.xlu0 %1460
  %v1463 = vsel %vm1022, %v1449, %v1299
  %v1464 = vsel %vm822, %v1463, %v1453
  %vm1465 = vcmask 531456
  %v1466 = vsel %vm1465, %v1464, %v1457
  %vm1467 = vcmask 564224
  %v1468 = vsel %vm1467, %v1466, %v1461
  %vm1469 = vcmask 596992
  %v1470 = vsel %vm1469, %v1468, %v1446
  %vm1471 = vcmask 605184
  %v1472 = vsel %vm1471, %v1470, 0.0
  %1473 = vst [vmem:[%s16] sm:$0x1] %v1472
  %s1474 = scalar_lea.vmem %s0, 8
  %v1475 = vld [vmem:[%s1474] sm:$0xff]
  %v1477 = vunpack.c.l.b16 %v1475
  %v1478 = vunpack.c.h.b16 %v1475
  %v1479 = vpack.c.b16 %v1477, %v1477
  %v1480 = vpack.c.b16 %v1478, %v1478
  %1483 = vmatprep.subr.bf16.mxu0 %v423
  %1484 = vmatpush1.bf16.msra.mxu0 %v422
  %1485 = vmatprep.subr.bf16.mxu0 %v428
  %1486 = vmatpush1.bf16.msra.mxu0 %v427
  %1487 = vmatprep.subr.bf16.mxu0 %v433
  %1488 = vmatpush1.bf16.msra.mxu0 %v432
  %1489 = vmatprep.subr.bf16.mxu0 %v438
  %1490 = vmatpush1.bf16.msra.mxu0 %v437
  %1491 = vmatprep.subr.bf16.mxu0 %v443
  %1492 = vmatpush1.bf16.msra.mxu0 %v442
  %1493 = vmatprep.subr.bf16.mxu0 %v448
  %1494 = vmatpush1.bf16.msra.mxu0 %v447
  %1495 = vmatprep.subr.bf16.mxu0 %v453
  %1496 = vmatpush1.bf16.msra.mxu0 %v452
  %1497 = vmatprep.subr.bf16.mxu0 %v458
  %1498 = vmatpush1.bf16.msra.mxu0 %v457
  %1499 = vmatprep.subr.bf16.mxu0 %v463
  %1500 = vmatpush1.bf16.msra.mxu0 %v462
  %1501 = vmatprep.subr.bf16.mxu0 %v468
  %1502 = vmatpush1.bf16.msra.mxu0 %v467
  %1503 = vmatprep.subr.bf16.mxu0 %v473
  %1504 = vmatpush1.bf16.msra.mxu0 %v472
  %1505 = vmatprep.subr.bf16.mxu0 %v478
  %1506 = vmatpush1.bf16.msra.mxu0 %v477
  %1507 = vmatprep.subr.bf16.mxu0 %v483
  %1508 = vmatpush1.bf16.msra.mxu0 %v482
  %1509 = vmatprep.subr.bf16.mxu0 %v488
  %1510 = vmatpush1.bf16.msra.mxu0 %v487
  %1511 = vmatprep.subr.bf16.mxu0 %v493
  %1512 = vmatpush1.bf16.msra.mxu0 %v492
  %1513 = vmatprep.subr.bf16.mxu0 %v498
  %1514 = vmatpush1.bf16.msra.mxu0 %v497
  %1515 = vmatprep.mubr.bf16.mxu0 %v1480
  %1516 = vmatmul.mubr.bf16.gmra.mrb[0].mxu0 %v1479
  %v1517 = vpop.f32.mrb[0].mxu0
  %v1518 = vadd.f32 0.0, %v1517
  %v1519 = vpop.f32.mrb[0].mxu0
  %v1520 = vadd.f32 0.0, %v1519
  %v1521 = vpop.f32.mrb[0].mxu0
  %v1522 = vpop.f32.mrb[0].mxu0
  %1523 = vdwg.mxu0
  %1524 = vmatprep.subr.bf16.mxu0 %v425
  %1525 = vmatpush1.bf16.msra.mxu0 %v424
  %1526 = vmatprep.subr.bf16.mxu0 %v430
  %1527 = vmatpush1.bf16.msra.mxu0 %v429
  %1528 = vmatprep.subr.bf16.mxu0 %v435
  %1529 = vmatpush1.bf16.msra.mxu0 %v434
  %1530 = vmatprep.subr.bf16.mxu0 %v440
  %1531 = vmatpush1.bf16.msra.mxu0 %v439
  %1532 = vmatprep.subr.bf16.mxu0 %v445
  %1533 = vmatpush1.bf16.msra.mxu0 %v444
  %1534 = vmatprep.subr.bf16.mxu0 %v450
  %1535 = vmatpush1.bf16.msra.mxu0 %v449
  %1536 = vmatprep.subr.bf16.mxu0 %v455
  %1537 = vmatpush1.bf16.msra.mxu0 %v454
  %1538 = vmatprep.subr.bf16.mxu0 %v460
  %1539 = vmatpush1.bf16.msra.mxu0 %v459
  %1540 = vmatprep.subr.bf16.mxu0 %v465
  %1541 = vmatpush1.bf16.msra.mxu0 %v464
  %1542 = vmatprep.subr.bf16.mxu0 %v470
  %1543 = vmatpush1.bf16.msra.mxu0 %v469
  %1544 = vmatprep.subr.bf16.mxu0 %v475
  %1545 = vmatpush1.bf16.msra.mxu0 %v474
  %1546 = vmatprep.subr.bf16.mxu0 %v480
  %1547 = vmatpush1.bf16.msra.mxu0 %v479
  %1548 = vmatprep.subr.bf16.mxu0 %v485
  %1549 = vmatpush1.bf16.msra.mxu0 %v484
  %1550 = vmatprep.subr.bf16.mxu0 %v490
  %1551 = vmatpush1.bf16.msra.mxu0 %v489
  %1552 = vmatprep.subr.bf16.mxu0 %v495
  %1553 = vmatpush1.bf16.msra.mxu0 %v494
  %1554 = vmatprep.subr.bf16.mxu0 %v500
  %1555 = vmatpush1.bf16.msra.mxu0 %v499
  %1556 = vmatprep.mubr.bf16.mxu0 %v1480
  %1557 = vmatmul.mubr.bf16.gmra.mrb[0].mxu0 %v1479
  %v1558 = vpop.f32.mrb[0].mxu0
  %v1559 = vadd.f32 0.0, %v1558
  %v1560 = vpop.f32.mrb[0].mxu0
  %v1561 = vadd.f32 0.0, %v1560
  %v1562 = vpop.f32.mrb[0].mxu0
  %v1563 = vpop.f32.mrb[0].mxu0
  %1564 = vdwg.mxu0
  %1565 = vmatprep.subr.bf16.mxu0 0
  %1566 = vmatpush1.bf16.msra.mxu0 %v426
  %1567 = vmatprep.subr.bf16.mxu0 0
  %1568 = vmatpush1.bf16.msra.mxu0 %v431
  %1569 = vmatprep.subr.bf16.mxu0 0
  %1570 = vmatpush1.bf16.msra.mxu0 %v436
  %1571 = vmatprep.subr.bf16.mxu0 0
  %1572 = vmatpush1.bf16.msra.mxu0 %v441
  %1573 = vmatprep.subr.bf16.mxu0 0
  %1574 = vmatpush1.bf16.msra.mxu0 %v446
  %1575 = vmatprep.subr.bf16.mxu0 0
  %1576 = vmatpush1.bf16.msra.mxu0 %v451
  %1577 = vmatprep.subr.bf16.mxu0 0
  %1578 = vmatpush1.bf16.msra.mxu0 %v456
  %1579 = vmatprep.subr.bf16.mxu0 0
  %1580 = vmatpush1.bf16.msra.mxu0 %v461
  %1581 = vmatprep.subr.bf16.mxu0 0
  %1582 = vmatpush1.bf16.msra.mxu0 %v466
  %1583 = vmatprep.subr.bf16.mxu0 0
  %1584 = vmatpush1.bf16.msra.mxu0 %v471
  %1585 = vmatprep.subr.bf16.mxu0 0
  %1586 = vmatpush1.bf16.msra.mxu0 %v476
  %1587 = vmatprep.subr.bf16.mxu0 0
  %1588 = vmatpush1.bf16.msra.mxu0 %v481
  %1589 = vmatprep.subr.bf16.mxu0 0
  %1590 = vmatpush1.bf16.msra.mxu0 %v486
  %1591 = vmatprep.subr.bf16.mxu0 0
  %1592 = vmatpush1.bf16.msra.mxu0 %v491
  %1593 = vmatprep.subr.bf16.mxu0 0
  %1594 = vmatpush1.bf16.msra.mxu0 %v496
  %1595 = vmatprep.subr.bf16.mxu0 0
  %1596 = vmatpush1.bf16.msra.mxu0 %v501
  %1597 = vmatprep.mubr.bf16.mxu0 %v1480
  %1598 = vmatmul.mubr.bf16.gmra.mrb[0].mxu0 %v1479
  %v1599 = vpop.f32.mrb[0].mxu0
  %v1600 = vadd.f32 0.0, %v1599
  %v1601 = vpop.f32.mrb[0].mxu0
  %v1602 = vpop.f32.mrb[0].mxu0
  %v1603 = vpop.f32.mrb[0].mxu0
  %1604 = vdwg.mxu0
  %1606 = vrot.lane.b32.xlu0 %v1518, 64
  %v1607 = vpop.permute.xlu0 %1606
  %1610 = vrot.lane.b32.xlu0 %v1520, 64
  %v1611 = vpop.permute.xlu0 %1610
  %1614 = vrot.lane.b32.xlu0 %v1559, 64
  %v1615 = vpop.permute.xlu0 %1614
  %1618 = vrot.lane.b32.xlu0 %v1561, 64
  %v1619 = vpop.permute.xlu0 %1618
  %v1621 = vpack.c.bf16 %v1607, %v1518
  %v1622 = vpack.c.bf16 %v1611, %v1520
  %v1623 = vpack.c.bf16 %v1615, %v1559
  %v1624 = vpack.c.bf16 %v1619, %v1561
  %v1625 = vpack.c.bf16 %v1600, %v1600
  %s1626 = scalar_lea.vmem %s3, 4
  %v1627 = vld [vmem:[%s1626] sm:$0xf]
  %s1628 = scalar_lea.vmem %s4, 8
  %v1629 = vld [vmem:[%s1628] sm:$0xff]
  %1631 = vset.pattern.permute.xlu0 0
  %1632 = vperm.xlu0 %1631, %v1629
  %v1633 = vpop.permute.xlu0 %1632
  %v1636 = vsel %vm732, %v1627, 0
  %v1639 = vsel %vm736, %v1625, 0
  %1641 = vmatprep.subr.bf16.mxu0 0
  %1642 = vmatpush1.bf16.msra.mxu0 %v1621
  %1643 = vmatprep.subr.bf16.mxu0 0
  %1644 = vmatpush1.bf16.msra.mxu0 %v1622
  %1645 = vmatprep.subr.bf16.mxu0 0
  %1646 = vmatpush1.bf16.msra.mxu0 %v1623
  %1647 = vmatprep.subr.bf16.mxu0 0
  %1648 = vmatpush1.bf16.msra.mxu0 %v1624
  %1649 = vmatprep.subr.bf16.mxu0 0
  %1650 = vmatpush1.bf16.msra.mxu0 %v1639
  %1651 = vmatprep.subr.bf16.mxu0 0
  %1652 = vmatpush1.bf16.msra.mxu0 0
  %1653 = vmatprep.subr.bf16.mxu0 0
  %1654 = vmatpush1.bf16.msra.mxu0 0
  %1655 = vmatprep.subr.bf16.mxu0 0
  %1656 = vmatpush1.bf16.msra.mxu0 0
  %1657 = vmatprep.subr.bf16.mxu0 0
  %1658 = vmatpush1.bf16.msra.mxu0 0
  %1659 = vmatprep.subr.bf16.mxu0 0
  %1660 = vmatpush1.bf16.msra.mxu0 0
  %1661 = vmatprep.subr.bf16.mxu0 0
  %1662 = vmatpush1.bf16.msra.mxu0 0
  %1663 = vmatprep.subr.bf16.mxu0 0
  %1664 = vmatpush1.bf16.msra.mxu0 0
  %1665 = vmatprep.subr.bf16.mxu0 0
  %1666 = vmatpush1.bf16.msra.mxu0 0
  %1667 = vmatprep.subr.bf16.mxu0 0
  %1668 = vmatpush1.bf16.msra.mxu0 0
  %1669 = vmatprep.subr.bf16.mxu0 0
  %1670 = vmatpush1.bf16.msra.mxu0 0
  %1671 = vmatprep.subr.bf16.mxu0 0
  %1672 = vmatpush1.bf16.msra.mxu0 0
  %1673 = vmatprep.mubr.bf16.mxu0 0
  %1674 = vmatmul.mubr.bf16.gmra.mrb[0].mxu0 %v1636
  %v1675 = vpop.f32.mrb[0].mxu0
  %v1676 = vadd.f32 %v1633, %v1675
  %v1677 = vpop.f32.mrb[0].mxu0
  %v1678 = vpop.f32.mrb[0].mxu0
  %v1679 = vpop.f32.mrb[0].mxu0
  %1680 = vdwg.mxu0
  %v1681 = vmax.f32 %v1676, 0.0
  %v1682 = vpack.c.bf16 %v1681, %v1681
  %v1684 = vsel %vm822, %v1682, 0
  %1686 = vmatprep.subr.bf16.mxu0 %v807
  %1687 = vmatpush1.bf16.msra.mxu0 %v806
  %1688 = vmatprep.subr.bf16.mxu0 %v809
  %1689 = vmatpush1.bf16.msra.mxu0 %v808
  %1690 = vmatprep.subr.bf16.mxu0 %v811
  %1691 = vmatpush1.bf16.msra.mxu0 %v810
  %1692 = vmatprep.subr.bf16.mxu0 %v813
  %1693 = vmatpush1.bf16.msra.mxu0 %v812
  %1694 = vmatprep.subr.bf16.mxu0 0
  %1695 = vmatpush1.bf16.msra.mxu0 0
  %1696 = vmatprep.subr.bf16.mxu0 0
  %1697 = vmatpush1.bf16.msra.mxu0 0
  %1698 = vmatprep.subr.bf16.mxu0 0
  %1699 = vmatpush1.bf16.msra.mxu0 0
  %1700 = vmatprep.subr.bf16.mxu0 0
  %1701 = vmatpush1.bf16.msra.mxu0 0
  %1702 = vmatprep.subr.bf16.mxu0 0
  %1703 = vmatpush1.bf16.msra.mxu0 0
  %1704 = vmatprep.subr.bf16.mxu0 0
  %1705 = vmatpush1.bf16.msra.mxu0 0
  %1706 = vmatprep.subr.bf16.mxu0 0
  %1707 = vmatpush1.bf16.msra.mxu0 0
  %1708 = vmatprep.subr.bf16.mxu0 0
  %1709 = vmatpush1.bf16.msra.mxu0 0
  %1710 = vmatprep.subr.bf16.mxu0 0
  %1711 = vmatpush1.bf16.msra.mxu0 0
  %1712 = vmatprep.subr.bf16.mxu0 0
  %1713 = vmatpush1.bf16.msra.mxu0 0
  %1714 = vmatprep.subr.bf16.mxu0 0
  %1715 = vmatpush1.bf16.msra.mxu0 0
  %1716 = vmatprep.subr.bf16.mxu0 0
  %1717 = vmatpush1.bf16.msra.mxu0 0
  %1718 = vmatprep.mubr.bf16.mxu0 0
  %1719 = vmatmul.mubr.bf16.gmra.mrb[0].mxu0 %v1684
  %v1720 = vpop.f32.mrb[0].mxu0
  %v1721 = vadd.f32 0.0, %v1720
  %v1722 = vpop.f32.mrb[0].mxu0
  %v1723 = vadd.f32 0.0, %v1722
  %v1724 = vpop.f32.mrb[0].mxu0
  %v1725 = vpop.f32.mrb[0].mxu0
  %1726 = vdwg.mxu0
  %1728 = vrot.lane.b32.xlu0 %v1721, 112
  %v1729 = vpop.permute.xlu0 %1728
  %1731 = vrot.lane.b32.xlu0 %v1721, 96
  %v1732 = vpop.permute.xlu0 %1731
  %1734 = vrot.lane.b32.xlu0 %v1721, 80
  %v1735 = vpop.permute.xlu0 %1734
  %1737 = vrot.lane.b32.xlu0 %v1721, 64
  %v1738 = vpop.permute.xlu0 %1737
  %1740 = vrot.lane.b32.xlu0 %v1721, 48
  %v1741 = vpop.permute.xlu0 %1740
  %1743 = vrot.lane.b32.xlu0 %v1721, 32
  %v1744 = vpop.permute.xlu0 %1743
  %1746 = vrot.lane.b32.xlu0 %v1721, 16
  %v1747 = vpop.permute.xlu0 %1746
  %v1749 = vpack.c.bf16 %v1729, %v1721
  %v1750 = vpack.c.bf16 %v1735, %v1732
  %v1751 = vpack.c.bf16 %v1741, %v1738
  %v1752 = vpack.c.bf16 %v1747, %v1744
  %v1753 = vpack.c.bf16 %v1723, %v1723
  %s1754 = scalar_lea.vmem %s5, 8
  %v1755 = vld [vmem:[%s1754] sm:$0xf]
  %v1756 = vld [vmem:[%s1754 + $0x4] sm:$0xf]
  %s1757 = scalar_lea.vmem %s6, 16
  %v1758 = vld [vmem:[%s1757] sm:$0xff]
  %v1759 = vld [vmem:[%s1757 + $0x8] sm:$0xff]
  %1761 = vset.pattern.permute.xlu0 0
  %1762 = vperm.xlu0 %1761, %v1758
  %v1763 = vpop.permute.xlu0 %1762
  %1766 = vset.pattern.permute.xlu0 0
  %1767 = vperm.xlu0 %1766, %v1759
  %v1768 = vpop.permute.xlu0 %1767
  %v1772 = vunpack.c.l.b16 %v1755
  %v1773 = vunpack.c.l.b16 %v1756
  %v1774 = vpack.c.b16 %v1773, %v1772
  %v1776 = vsel %vm732, %v1774, 0
  %v1779 = vsel %vm736, %v1753, 0
  %1781 = vmatprep.subr.bf16.mxu0 0
  %1782 = vmatpush1.bf16.msra.mxu0 %v1749
  %1783 = vmatprep.subr.bf16.mxu0 0
  %1784 = vmatpush1.bf16.msra.mxu0 %v1750
  %1785 = vmatprep.subr.bf16.mxu0 0
  %1786 = vmatpush1.bf16.msra.mxu0 %v1751
  %1787 = vmatprep.subr.bf16.mxu0 0
  %1788 = vmatpush1.bf16.msra.mxu0 %v1752
  %1789 = vmatprep.subr.bf16.mxu0 0
  %1790 = vmatpush1.bf16.msra.mxu0 %v1779
  %1791 = vmatprep.subr.bf16.mxu0 0
  %1792 = vmatpush1.bf16.msra.mxu0 0
  %1793 = vmatprep.subr.bf16.mxu0 0
  %1794 = vmatpush1.bf16.msra.mxu0 0
  %1795 = vmatprep.subr.bf16.mxu0 0
  %1796 = vmatpush1.bf16.msra.mxu0 0
  %1797 = vmatprep.subr.bf16.mxu0 0
  %1798 = vmatpush1.bf16.msra.mxu0 0
  %1799 = vmatprep.subr.bf16.mxu0 0
  %1800 = vmatpush1.bf16.msra.mxu0 0
  %1801 = vmatprep.subr.bf16.mxu0 0
  %1802 = vmatpush1.bf16.msra.mxu0 0
  %1803 = vmatprep.subr.bf16.mxu0 0
  %1804 = vmatpush1.bf16.msra.mxu0 0
  %1805 = vmatprep.subr.bf16.mxu0 0
  %1806 = vmatpush1.bf16.msra.mxu0 0
  %1807 = vmatprep.subr.bf16.mxu0 0
  %1808 = vmatpush1.bf16.msra.mxu0 0
  %1809 = vmatprep.subr.bf16.mxu0 0
  %1810 = vmatpush1.bf16.msra.mxu0 0
  %1811 = vmatprep.subr.bf16.mxu0 0
  %1812 = vmatpush1.bf16.msra.mxu0 0
  %1813 = vmatprep.mubr.bf16.mxu0 0
  %1814 = vmatmul.mubr.bf16.gmra.mrb[0].mxu0 %v1776
  %v1815 = vpop.f32.mrb[0].mxu0
  %v1816 = vadd.f32 %v1763, %v1815
  %v1817 = vpop.f32.mrb[0].mxu0
  %v1818 = vpop.f32.mrb[0].mxu0
  %v1819 = vadd.f32 %v1768, %v1818
  %v1820 = vpop.f32.mrb[0].mxu0
  %1821 = vdwg.mxu0
  %v1822 = vmax.f32 %v1816, 0.0
  %v1823 = vmax.f32 %v1819, 0.0
  %v1825 = vrot.slane %v1822, 1
  %1826 = vrot.lane.b32.xlu0 %v1825, 16
  %v1827 = vpop.permute.xlu0 %1826
  %v1829 = vrot.slane %v1822, 2
  %1830 = vrot.lane.b32.xlu0 %v1829, 32
  %v1831 = vpop.permute.xlu0 %1830
  %v1833 = vrot.slane %v1822, 3
  %1834 = vrot.lane.b32.xlu0 %v1833, 48
  %v1835 = vpop.permute.xlu0 %1834
  %v1837 = vrot.slane %v1822, 4
  %1838 = vrot.lane.b32.xlu0 %v1837, 64
  %v1839 = vpop.permute.xlu0 %1838
  %v1841 = vrot.slane %v1822, 5
  %1842 = vrot.lane.b32.xlu0 %v1841, 80
  %v1843 = vpop.permute.xlu0 %1842
  %v1845 = vrot.slane %v1822, 6
  %1846 = vrot.lane.b32.xlu0 %v1845, 96
  %v1847 = vpop.permute.xlu0 %1846
  %v1849 = vrot.slane %v1822, 7
  %1850 = vrot.lane.b32.xlu0 %v1849, 112
  %v1851 = vpop.permute.xlu0 %1850
  %v1854 = vrot.slane %v1823, 1
  %1855 = vrot.lane.b32.xlu0 %v1854, 16
  %v1856 = vpop.permute.xlu0 %1855
  %v1858 = vrot.slane %v1823, 2
  %1859 = vrot.lane.b32.xlu0 %v1858, 32
  %v1860 = vpop.permute.xlu0 %1859
  %v1862 = vrot.slane %v1823, 3
  %1863 = vrot.lane.b32.xlu0 %v1862, 48
  %v1864 = vpop.permute.xlu0 %1863
  %v1866 = vrot.slane %v1823, 4
  %1867 = vrot.lane.b32.xlu0 %v1866, 64
  %v1868 = vpop.permute.xlu0 %1867
  %v1870 = vrot.slane %v1823, 5
  %1871 = vrot.lane.b32.xlu0 %v1870, 80
  %v1872 = vpop.permute.xlu0 %1871
  %v1874 = vrot.slane %v1823, 6
  %1875 = vrot.lane.b32.xlu0 %v1874, 96
  %v1876 = vpop.permute.xlu0 %1875
  %v1878 = vrot.slane %v1823, 7
  %1879 = vrot.lane.b32.xlu0 %v1878, 112
  %v1880 = vpop.permute.xlu0 %1879
  %v1882 = vsel %vm1020, %v1822, %v1827
  %v1883 = vsel %vm1022, %v1882, %v1831
  %v1884 = vsel %vm1024, %v1883, %v1835
  %v1885 = vsel %vm822, %v1884, %v1839
  %v1886 = vsel %vm1027, %v1885, %v1843
  %v1887 = vsel %vm1029, %v1886, %v1847
  %v1888 = vsel %vm1031, %v1887, %v1851
  %v1889 = vsel %vm1020, %v1823, %v1856
  %v1890 = vsel %vm1022, %v1889, %v1860
  %v1891 = vsel %vm1024, %v1890, %v1864
  %v1892 = vsel %vm822, %v1891, %v1868
  %v1893 = vsel %vm1027, %v1892, %v1872
  %v1894 = vsel %vm1029, %v1893, %v1876
  %v1895 = vsel %vm1031, %v1894, %v1880
  %v1896 = vpack.c.bf16 %v1888, %v1888
  %v1897 = vpack.c.bf16 %v1895, %v1895
  %s1898 = scalar_lea.vmem %s7, 128
  %v1899 = vld [vmem:[%s1898] sm:$0xf]
  %v1900 = vld [vmem:[%s1898 + $0x4] sm:$0xf]
  %v1901 = vld [vmem:[%s1898 + $0x8] sm:$0xf]
  %v1902 = vld [vmem:[%s1898 + $0xc] sm:$0xf]
  %v1903 = vld [vmem:[%s1898 + $0x10] sm:$0xf]
  %v1904 = vld [vmem:[%s1898 + $0x14] sm:$0xf]
  %v1905 = vld [vmem:[%s1898 + $0x18] sm:$0xf]
  %v1906 = vld [vmem:[%s1898 + $0x1c] sm:$0xf]
  %v1907 = vld [vmem:[%s1898 + $0x20] sm:$0xf]
  %v1908 = vld [vmem:[%s1898 + $0x24] sm:$0xf]
  %v1909 = vld [vmem:[%s1898 + $0x28] sm:$0xf]
  %v1910 = vld [vmem:[%s1898 + $0x2c] sm:$0xf]
  %v1911 = vld [vmem:[%s1898 + $0x30] sm:$0xf]
  %v1912 = vld [vmem:[%s1898 + $0x34] sm:$0xf]
  %v1913 = vld [vmem:[%s1898 + $0x38] sm:$0xf]
  %v1914 = vld [vmem:[%s1898 + $0x3c] sm:$0xf]
  %v1915 = vld [vmem:[%s1898 + $0x40] sm:$0xf]
  %v1916 = vld [vmem:[%s1898 + $0x44] sm:$0xf]
  %v1917 = vld [vmem:[%s1898 + $0x48] sm:$0xf]
  %v1918 = vld [vmem:[%s1898 + $0x4c] sm:$0xf]
  %v1919 = vld [vmem:[%s1898 + $0x50] sm:$0xf]
  %v1920 = vld [vmem:[%s1898 + $0x54] sm:$0xf]
  %v1921 = vld [vmem:[%s1898 + $0x58] sm:$0xf]
  %v1922 = vld [vmem:[%s1898 + $0x5c] sm:$0xf]
  %v1923 = vld [vmem:[%s1898 + $0x60] sm:$0xf]
  %v1924 = vld [vmem:[%s1898 + $0x64] sm:$0xf]
  %v1925 = vld [vmem:[%s1898 + $0x68] sm:$0xf]
  %v1926 = vld [vmem:[%s1898 + $0x6c] sm:$0xf]
  %v1927 = vld [vmem:[%s1898 + $0x70] sm:$0xf]
  %v1928 = vld [vmem:[%s1898 + $0x74] sm:$0xf]
  %v1929 = vld [vmem:[%s1898 + $0x78] sm:$0xf]
  %v1930 = vld [vmem:[%s1898 + $0x7c] sm:$0xf]
  %s1931 = scalar_lea.vmem %s14, 1
  %v1932 = vld [vmem:[%s1931] sm:$0x1]
  %v1933 = vpack.c.bf16 %v1932, %v1932
  %s1934 = scalar_lea.vmem %s8, 16
  %v1935 = vld [vmem:[%s1934] sm:$0xf]
  %v1936 = vld [vmem:[%s1934 + $0x4] sm:$0xf]
  %v1937 = vld [vmem:[%s1934 + $0x8] sm:$0xf]
  %v1938 = vld [vmem:[%s1934 + $0xc] sm:$0xf]
  %v1943 = vunpack.c.l.b16 %v1935
  %v1944 = vunpack.c.l.b16 %v1936
  %v1945 = vunpack.c.l.b16 %v1937
  %v1946 = vunpack.c.l.b16 %v1938
  %v1947 = vpack.c.b16 %v1944, %v1943
  %v1948 = vpack.c.b16 %v1946, %v1945
  %v1952 = vsel %vm1022, %v1933, 0
  %1954 = vmatprep.subr.bf16.mxu0 0
  %1955 = vmatpush1.bf16.msra.mxu0 %v1947
  %1956 = vmatprep.subr.bf16.mxu0 0
  %1957 = vmatpush1.bf16.msra.mxu0 %v1948
  %1958 = vmatprep.subr.bf16.mxu0 0
  %1959 = vmatpush1.bf16.msra.mxu0 0
  %1960 = vmatprep.subr.bf16.mxu0 0
  %1961 = vmatpush1.bf16.msra.mxu0 0
  %1962 = vmatprep.subr.bf16.mxu0 0
  %1963 = vmatpush1.bf16.msra.mxu0 0
  %1964 = vmatprep.subr.bf16.mxu0 0
  %1965 = vmatpush1.bf16.msra.mxu0 0
  %1966 = vmatprep.subr.bf16.mxu0 0
  %1967 = vmatpush1.bf16.msra.mxu0 0
  %1968 = vmatprep.subr.bf16.mxu0 0
  %1969 = vmatpush1.bf16.msra.mxu0 0
  %1970 = vmatprep.subr.bf16.mxu0 0
  %1971 = vmatpush1.bf16.msra.mxu0 0
  %1972 = vmatprep.subr.bf16.mxu0 0
  %1973 = vmatpush1.bf16.msra.mxu0 0
  %1974 = vmatprep.subr.bf16.mxu0 0
  %1975 = vmatpush1.bf16.msra.mxu0 0
  %1976 = vmatprep.subr.bf16.mxu0 0
  %1977 = vmatpush1.bf16.msra.mxu0 0
  %1978 = vmatprep.subr.bf16.mxu0 0
  %1979 = vmatpush1.bf16.msra.mxu0 0
  %1980 = vmatprep.subr.bf16.mxu0 0
  %1981 = vmatpush1.bf16.msra.mxu0 0
  %1982 = vmatprep.subr.bf16.mxu0 0
  %1983 = vmatpush1.bf16.msra.mxu0 0
  %1984 = vmatprep.subr.bf16.mxu0 0
  %1985 = vmatpush1.bf16.msra.mxu0 0
  %1986 = vmatprep.mubr.bf16.mxu0 0
  %1987 = vmatmul.mubr.bf16.gmra.mrb[0].mxu0 %v1952
  %v1988 = vpop.f32.mrb[0].mxu0
  %v1989 = vadd.f32 0.0, %v1988
  %v1990 = vpop.f32.mrb[0].mxu0
  %v1991 = vpop.f32.mrb[0].mxu0
  %v1992 = vpop.f32.mrb[0].mxu0
  %1993 = vdwg.mxu0
  %v2026 = vunpack.c.l.b16 %v1899
  %v2027 = vunpack.c.l.b16 %v1900
  %v2028 = vunpack.c.l.b16 %v1901
  %v2029 = vunpack.c.l.b16 %v1902
  %v2030 = vunpack.c.l.b16 %v1903
  %v2031 = vunpack.c.l.b16 %v1904
  %v2032 = vunpack.c.l.b16 %v1905
  %v2033 = vunpack.c.l.b16 %v1906
  %v2034 = vunpack.c.l.b16 %v1907
  %v2035 = vunpack.c.l.b16 %v1908
  %v2036 = vunpack.c.l.b16 %v1909
  %v2037 = vunpack.c.l.b16 %v1910
  %v2038 = vunpack.c.l.b16 %v1911
  %v2039 = vunpack.c.l.b16 %v1912
  %v2040 = vunpack.c.l.b16 %v1913
  %v2041 = vunpack.c.l.b16 %v1914
  %v2042 = vunpack.c.l.b16 %v1915
  %v2043 = vunpack.c.l.b16 %v1916
  %v2044 = vunpack.c.l.b16 %v1917
  %v2045 = vunpack.c.l.b16 %v1918
  %v2046 = vunpack.c.l.b16 %v1919
  %v2047 = vunpack.c.l.b16 %v1920
  %v2048 = vunpack.c.l.b16 %v1921
  %v2049 = vunpack.c.l.b16 %v1922
  %v2050 = vunpack.c.l.b16 %v1923
  %v2051 = vunpack.c.l.b16 %v1924
  %v2052 = vunpack.c.l.b16 %v1925
  %v2053 = vunpack.c.l.b16 %v1926
  %v2054 = vunpack.c.l.b16 %v1927
  %v2055 = vunpack.c.l.b16 %v1928
  %v2056 = vunpack.c.l.b16 %v1929
  %v2057 = vunpack.c.l.b16 %v1930
  %v2058 = vpack.c.b16 %v2027, %v2026
  %v2059 = vpack.c.b16 %v2029, %v2028
  %v2060 = vpack.c.b16 %v2031, %v2030
  %v2061 = vpack.c.b16 %v2033, %v2032
  %v2062 = vpack.c.b16 %v2035, %v2034
  %v2063 = vpack.c.b16 %v2037, %v2036
  %v2064 = vpack.c.b16 %v2039, %v2038
  %v2065 = vpack.c.b16 %v2041, %v2040
  %v2066 = vpack.c.b16 %v2043, %v2042
  %v2067 = vpack.c.b16 %v2045, %v2044
  %v2068 = vpack.c.b16 %v2047, %v2046
  %v2069 = vpack.c.b16 %v2049, %v2048
  %v2070 = vpack.c.b16 %v2051, %v2050
  %v2071 = vpack.c.b16 %v2053, %v2052
  %v2072 = vpack.c.b16 %v2055, %v2054
  %v2073 = vpack.c.b16 %v2057, %v2056
  %2090 = vmatprep.subr.bf16.mxu0 0
  %2091 = vmatpush1.bf16.msra.mxu0 %v2058
  %2092 = vmatprep.subr.bf16.mxu0 0
  %2093 = vmatpush1.bf16.msra.mxu0 %v2059
  %2094 = vmatprep.subr.bf16.mxu0 0
  %2095 = vmatpush1.bf16.msra.mxu0 %v2060
  %2096 = vmatprep.subr.bf16.mxu0 0
  %2097 = vmatpush1.bf16.msra.mxu0 %v2061
  %2098 = vmatprep.subr.bf16.mxu0 0
  %2099 = vmatpush1.bf16.msra.mxu0 %v2062
  %2100 = vmatprep.subr.bf16.mxu0 0
  %2101 = vmatpush1.bf16.msra.mxu0 %v2063
  %2102 = vmatprep.subr.bf16.mxu0 0
  %2103 = vmatpush1.bf16.msra.mxu0 %v2064
  %2104 = vmatprep.subr.bf16.mxu0 0
  %2105 = vmatpush1.bf16.msra.mxu0 %v2065
  %2106 = vmatprep.subr.bf16.mxu0 0
  %2107 = vmatpush1.bf16.msra.mxu0 %v2066
  %2108 = vmatprep.subr.bf16.mxu0 0
  %2109 = vmatpush1.bf16.msra.mxu0 %v2067
  %2110 = vmatprep.subr.bf16.mxu0 0
  %2111 = vmatpush1.bf16.msra.mxu0 %v2068
  %2112 = vmatprep.subr.bf16.mxu0 0
  %2113 = vmatpush1.bf16.msra.mxu0 %v2069
  %2114 = vmatprep.subr.bf16.mxu0 0
  %2115 = vmatpush1.bf16.msra.mxu0 %v2070
  %2116 = vmatprep.subr.bf16.mxu0 0
  %2117 = vmatpush1.bf16.msra.mxu0 %v2071
  %2118 = vmatprep.subr.bf16.mxu0 0
  %2119 = vmatpush1.bf16.msra.mxu0 %v2072
  %2120 = vmatprep.subr.bf16.mxu0 0
  %2121 = vmatpush1.bf16.msra.mxu0 %v2073
  %2122 = vmatprep.mubr.bf16.mxu0 %v1897
  %2123 = vmatmul.mubr.bf16.gmra.mrb[0].mxu0 %v1896
  %v2124 = vpop.f32.mrb[0].mxu0
  %v2125 = vadd.f32 %v1989, %v2124
  %v2126 = vpop.f32.mrb[0].mxu0
  %v2127 = vpop.f32.mrb[0].mxu0
  %v2128 = vpop.f32.mrb[0].mxu0
  %2129 = vdwg.mxu0
  %s2130 = scalar_lea.vmem %s9, 1
  %v2131 = vld [vmem:[%s2130] sm:$0x1]
  %v2132 = vadd.f32 %v2125, %v2131
  %v2133 = vxor.u32 %v2132, 2147483648
  %v2134 = vmul.f32 %v2133, 1.442695
  %v2135 = vpow.pop %v2134
  %v2136 = vadd.f32 %v2135, 1.0
  %v2137 = vrcp.pop %v2136
  %v2138 = vmul.f32 1.0, %v2137
  %v2139 = vtanh.pop %v2132
  %s2140 = scalar_lea.vmem %s15, 1
  %v2141 = vld [vmem:[%s2140] sm:$0x1]
  %v2143 = vlaneseq
  %v2144 = vshrl.u32 %v2143, 7
  %v2145 = vsub.s32 0, %v2144
  %v2146 = vrot.slane %v2141, %v2145
  %2147 = vrot.lane.b32.xlu0 %v2146, 32
  %v2148 = vpop.permute.xlu0 %2147
  %v2150 = vmul.f32 %v2138, %v2148
  %2152 = vrot.lane.b32.xlu0 %v2139, 64
  %v2153 = vpop.permute.xlu0 %2152
  %v2155 = vmul.f32 %v2138, %v2153
  %2157 = vrot.lane.b32.xlu0 %v2155, 32
  %v2158 = vpop.permute.xlu0 %2157
  %v2160 = vadd.f32 %v2150, %v2158
  %v2161 = vtanh.pop %v2160
  %2163 = vrot.lane.b32.xlu0 %v2161, 64
  %v2164 = vpop.permute.xlu0 %2163
  %v2166 = vmul.f32 %v2138, %v2164
  %v2167 = vpack.c.bf16 %v2166, %v2166
  %s2168 = scalar_lea.vmem %s12, 16
  %v2169 = vld [vmem:[%s2168] sm:$0xf]
  %v2170 = vld [vmem:[%s2168 + $0x4] sm:$0xf]
  %v2171 = vld [vmem:[%s2168 + $0x8] sm:$0xf]
  %v2172 = vld [vmem:[%s2168 + $0xc] sm:$0xf]
  %s2173 = scalar_lea.vmem %s13, 1
  %v2174 = vld [vmem:[%s2173] sm:$0x1]
  %2176 = vrot.lane.b32.xlu0 %v2167, 32
  %v2177 = vpop.permute.xlu0 %2176
  %v2182 = vunpack.c.l.b16 %v2169
  %v2183 = vunpack.c.l.b16 %v2170
  %v2184 = vunpack.c.l.b16 %v2171
  %v2185 = vunpack.c.l.b16 %v2172
  %v2186 = vpack.c.b16 %v2183, %v2182
  %v2187 = vpack.c.b16 %v2185, %v2184
  %v2191 = vsel %vm1022, %v2177, 0
  %2193 = vmatprep.subr.bf16.mxu0 0
  %2194 = vmatpush1.bf16.msra.mxu0 %v2186
  %2195 = vmatprep.subr.bf16.mxu0 0
  %2196 = vmatpush1.bf16.msra.mxu0 %v2187
  %2197 = vmatprep.subr.bf16.mxu0 0
  %2198 = vmatpush1.bf16.msra.mxu0 0
  %2199 = vmatprep.subr.bf16.mxu0 0
  %2200 = vmatpush1.bf16.msra.mxu0 0
  %2201 = vmatprep.subr.bf16.mxu0 0
  %2202 = vmatpush1.bf16.msra.mxu0 0
  %2203 = vmatprep.subr.bf16.mxu0 0
  %2204 = vmatpush1.bf16.msra.mxu0 0
  %2205 = vmatprep.subr.bf16.mxu0 0
  %2206 = vmatpush1.bf16.msra.mxu0 0
  %2207 = vmatprep.subr.bf16.mxu0 0
  %2208 = vmatpush1.bf16.msra.mxu0 0
  %2209 = vmatprep.subr.bf16.mxu0 0
  %2210 = vmatpush1.bf16.msra.mxu0 0
  %2211 = vmatprep.subr.bf16.mxu0 0
  %2212 = vmatpush1.bf16.msra.mxu0 0
  %2213 = vmatprep.subr.bf16.mxu0 0
  %2214 = vmatpush1.bf16.msra.mxu0 0
  %2215 = vmatprep.subr.bf16.mxu0 0
  %2216 = vmatpush1.bf16.msra.mxu0 0
  %2217 = vmatprep.subr.bf16.mxu0 0
  %2218 = vmatpush1.bf16.msra.mxu0 0
  %2219 = vmatprep.subr.bf16.mxu0 0
  %2220 = vmatpush1.bf16.msra.mxu0 0
  %2221 = vmatprep.subr.bf16.mxu0 0
  %2222 = vmatpush1.bf16.msra.mxu0 0
  %2223 = vmatprep.subr.bf16.mxu0 0
  %2224 = vmatpush1.bf16.msra.mxu0 0
  %2225 = vmatprep.mubr.bf16.mxu0 0
  %2226 = vmatmul.mubr.bf16.gmra.mrb[0].mxu0 %v2191
  %v2227 = vpop.f32.mrb[0].mxu0
  %v2228 = vadd.f32 %v2174, %v2227
  %v2229 = vpop.f32.mrb[0].mxu0
  %v2230 = vpop.f32.mrb[0].mxu0
  %v2231 = vpop.f32.mrb[0].mxu0
  %2232 = vdwg.mxu0
  %s2233 = scalar_lea.vmem %s10, 16
  %v2234 = vld [vmem:[%s2233] sm:$0xf]
  %v2235 = vld [vmem:[%s2233 + $0x4] sm:$0xf]
  %v2236 = vld [vmem:[%s2233 + $0x8] sm:$0xf]
  %v2237 = vld [vmem:[%s2233 + $0xc] sm:$0xf]
  %s2238 = scalar_lea.vmem %s11, 1
  %v2239 = vld [vmem:[%s2238] sm:$0x1]
  %v2244 = vunpack.c.l.b16 %v2234
  %v2245 = vunpack.c.l.b16 %v2235
  %v2246 = vunpack.c.l.b16 %v2236
  %v2247 = vunpack.c.l.b16 %v2237
  %v2248 = vpack.c.b16 %v2245, %v2244
  %v2249 = vpack.c.b16 %v2247, %v2246
  %2252 = vmatprep.subr.bf16.mxu0 0
  %2253 = vmatpush1.bf16.msra.mxu0 %v2248
  %2254 = vmatprep.subr.bf16.mxu0 0
  %2255 = vmatpush1.bf16.msra.mxu0 %v2249
  %2256 = vmatprep.subr.bf16.mxu0 0
  %2257 = vmatpush1.bf16.msra.mxu0 0
  %2258 = vmatprep.subr.bf16.mxu0 0
  %2259 = vmatpush1.bf16.msra.mxu0 0
  %2260 = vmatprep.subr.bf16.mxu0 0
  %2261 = vmatpush1.bf16.msra.mxu0 0
  %2262 = vmatprep.subr.bf16.mxu0 0
  %2263 = vmatpush1.bf16.msra.mxu0 0
  %2264 = vmatprep.subr.bf16.mxu0 0
  %2265 = vmatpush1.bf16.msra.mxu0 0
  %2266 = vmatprep.subr.bf16.mxu0 0
  %2267 = vmatpush1.bf16.msra.mxu0 0
  %2268 = vmatprep.subr.bf16.mxu0 0
  %2269 = vmatpush1.bf16.msra.mxu0 0
  %2270 = vmatprep.subr.bf16.mxu0 0
  %2271 = vmatpush1.bf16.msra.mxu0 0
  %2272 = vmatprep.subr.bf16.mxu0 0
  %2273 = vmatpush1.bf16.msra.mxu0 0
  %2274 = vmatprep.subr.bf16.mxu0 0
  %2275 = vmatpush1.bf16.msra.mxu0 0
  %2276 = vmatprep.subr.bf16.mxu0 0
  %2277 = vmatpush1.bf16.msra.mxu0 0
  %2278 = vmatprep.subr.bf16.mxu0 0
  %2279 = vmatpush1.bf16.msra.mxu0 0
  %2280 = vmatprep.subr.bf16.mxu0 0
  %2281 = vmatpush1.bf16.msra.mxu0 0
  %2282 = vmatprep.subr.bf16.mxu0 0
  %2283 = vmatpush1.bf16.msra.mxu0 0
  %2284 = vmatprep.mubr.bf16.mxu0 0
  %2285 = vmatmul.mubr.bf16.gmra.mrb[0].mxu0 %v2191
  %v2286 = vpop.f32.mrb[0].mxu0
  %v2287 = vadd.f32 %v2239, %v2286
  %v2288 = vpop.f32.mrb[0].mxu0
  %v2289 = vpop.f32.mrb[0].mxu0
  %v2290 = vpop.f32.mrb[0].mxu0
  %2291 = vdwg.mxu0
  %v2292 = vsel %vm1427, %v2287, -inf
  %2293 = vmax.xlane.f32.xlu0 %v2292
  %v2294 = vpop.xlane.xlu0 %2293
  %v2295 = vsub.f32 %v2287, %v2294
  %v2296 = vmul.f32 %v2295, 1.442695
  %v2297 = vpow.pop %v2296
  %v2298 = vsel %vm1427, %v2297, 0.0
  %2299 = vadd.xlane.f32.xlu0 %v2298
  %v2300 = vpop.xlane.xlu0 %2299
  %v2301 = vlog2.pop %v2300
  %v2302 = vmul.f32 %v2301, 0.6931472
  %v2303 = vsub.f32 %v2295, %v2302
  %v2304 = vrcp.pop %v2300
  %v2305 = vmul.f32 %v2297, %v2304
  %v2306 = vmul.f32 %v2303, %v2305
  %v2307 = vsel %vm1427, %v2306, 0.0
  %2308 = vadd.xlane.f32.xlu0 %v2307
  %v2309 = vpop.xlane.xlu0 %2308
  %v2310 = vsub.f32 0.0, %v2309
  %2312 = vrot.lane.b32.xlu0 %v2166, 32
  %v2313 = vpop.permute.xlu0 %2312
  %2316 = vrot.lane.b32.xlu0 %v2228, 64
  %v2317 = vpop.permute.xlu0 %2316
  %2320 = vrot.lane.b32.xlu0 %v2305, 65
  %v2321 = vpop.permute.xlu0 %2320
  %2324 = vrot.lane.b32.xlu0 %v2303, 69
  %v2325 = vpop.permute.xlu0 %2324
  %v2327 = vsel %vm1022, %v2313, %v2160
  %v2328 = vsel %vm822, %v2327, %v2317
  %v2329 = vsel %vm1465, %v2328, %v2321
  %v2330 = vsel %vm1467, %v2329, %v2325
  %v2331 = vsel %vm1469, %v2330, %v2310
  %v2332 = vsel %vm1471, %v2331, 0.0
  %s2333 = scalar_lea.vmem %s16, 1
  %2334 = vst [vmem:[%s2333] sm:$0x1] %v2332
  // Predicated region
  $region66: #{a3c_dueling_forward.1} parent=0 // pred_check
    _
  $region67: #{a3c_dueling_forward.1} parent=0 // pred_check_branch
    %2336 = sbr.rel (0) target = $region69
  $region68: #{a3c_dueling_forward.1} parent=0 // pred_region
    _
  $region69: #{a3c_dueling_forward.1} parent=0 // pred_fallthru
    _
  // Predicated region
  $region70: #{a3c_dueling_forward.1} parent=0 // pred_check
    _
  $region71: #{a3c_dueling_forward.1} parent=0 // pred_check_branch
    %2338 = sbr.rel (0) target = $region73
  $region72: #{a3c_dueling_forward.1} parent=0 // pred_region
    _
  $region73: #{a3c_dueling_forward.1} parent=0 // pred_fallthru
    _

</llo_original>
